<compile_context>
chip_gen: v5e
topology: v5e:2x2
jax: 0.10.0
libtpu: 0.0.40
codegen_flags: <defaults>
</compile_context>

<pallas_src>
import functools
import math

import jax
import jax.numpy as jnp
from jax.experimental import pallas as pl
from jax.experimental.pallas import tpu as pltpu


_PADL = 8  # left/right sublane padding of the halo buffers (keeps interior stores aligned)


def _zero_halo(p_ref, hp, wp):
    """Zero only the cells the conv taps read but interior writes never touch."""
    wbuf, c = p_ref.shape[1], p_ref.shape[2]
    zrow = jnp.zeros((wbuf, c), p_ref.dtype)
    p_ref[0] = zrow                                            # top halo row
    p_ref[hp + 1] = zrow                                       # bottom halo row
    zcol = jnp.zeros((hp, _PADL, c), p_ref.dtype)
    p_ref[pl.ds(1, hp), pl.ds(0, _PADL), :] = zcol             # left halo (+slack)
    p_ref[pl.ds(1, hp), pl.ds(_PADL + wp, _PADL), :] = zcol    # right halo (+slack)


def _conv3x3_block(pad_ref, w_ref, b_ref, y0, tr, wp, out_dtype):
    """3x3 conv (+folded-BN bias + ReLU) for TR output rows starting at y0,
    expressed as 9 accumulating matmuls over shifted slices of the padded buffer."""
    cin = pad_ref.shape[2]
    acc = None
    for tap in range(9):                      # static unroll: dy-major, then dx
        dy, dx = divmod(tap, 3)
        lhs = pad_ref[pl.ds(y0 + dy, tr), pl.ds(_PADL - 1 + dx, wp), :]   # [tr,wp,cin] bf16
        lhs = lhs.reshape(tr * wp, cin)
        part = jnp.dot(lhs, w_ref[tap], preferred_element_type=jnp.float32)
        acc = part if acc is None else acc + part
    y = jnp.maximum(acc + b_ref[...], 0.0)                                # bias + ReLU (f32)
    return y.astype(out_dtype)                                            # [tr*wp, cout]


def _down_kernel(x_ref, w1_ref, b1_ref, w2_ref, b2_ref, o_ref, p1_ref, p2_ref,
                 *, hp, wp, tr):
    # x_ref : [1, 4, Hp, Wp, Cin]      bf16  (space-to-depth, 4 = 2x2 pool taps)
    # w1_ref: [9, Cin,  Cout]          bf16  (folded BN scale)
    # b1_ref: [1, Cout]                f32   (folded BN bias)
    # w2_ref: [9, Cout, Cout]          bf16
    # b2_ref: [1, Cout]                f32
    # o_ref : [1, Hp, Wp, Cout]        bf16  (channel-last output)
    # p1_ref: [Hp+2, Wp+2*PADL, Cin]   bf16  zero-halo pooled activations
    # p2_ref: [Hp+2, Wp+2*PADL, Cout]  bf16  zero-halo conv1 activations
    nblk = hp // tr

    # Zero only the halo; the interior is fully overwritten every grid step.
    _zero_halo(p1_ref, hp, wp)
    _zero_halo(p2_ref, hp, wp)

    # ---- 1) fused 2x2 max-pool -> p1 interior (bf16, aligned stores) -------
    @pl.loop(0, nblk)
    def _pool(r):
        y0 = r * tr
        t = x_ref[0, 0, pl.ds(y0, tr), :, :]
        for k in range(1, 4):
            t = jnp.maximum(t, x_ref[0, k, pl.ds(y0, tr), :, :])
        p1_ref[pl.ds(y0 + 1, tr), pl.ds(_PADL, wp), :] = t

    # ---- 2) conv1 + folded BN + ReLU -> p2 interior (written in place) -----
    @pl.loop(0, nblk)
    def _conv1(r):
        y0 = r * tr
        y = _conv3x3_block(p1_ref, w1_ref, b1_ref, y0, tr, wp, p2_ref.dtype)
        p2_ref[pl.ds(y0 + 1, tr), pl.ds(_PADL, wp), :] = y.reshape(tr, wp, -1)

    # ---- 3) conv2 + folded BN + ReLU -> output (bf16, channel-last) --------
    @pl.loop(0, nblk)
    def _conv2(r):
        y0 = r * tr
        y = _conv3x3_block(p2_ref, w2_ref, b2_ref, y0, tr, wp, o_ref.dtype)
        o_ref[0, pl.ds(y0, tr), :, :] = y.reshape(tr, wp, -1)


def _pick_row_tile(hp, wp, target_rows=256):
    """Largest divisor of Hp whose matmul M dim (tr*wp) stays <= target_rows."""
    best = 1
    for d in range(1, hp + 1):
        if hp % d == 0 and d * wp <= target_rows:
            best = d
    return best


def down_forward(x_nchw, params, *, channel_last=False):
    """Forward pass of `down`: MaxPool2d(2) -> double_conv (eval-mode BN folded)."""
    N, Cin, H, W = x_nchw.shape
    assert H % 2 == 0 and W % 2 == 0, "MaxPool2d(2) requires even H, W"
    Hp, Wp = H // 2, W // 2

    w1, b1 = params["w1"], params["b1"]     # [9, Cin,  Cout] bf16, [1, Cout] f32
    w2, b2 = params["w2"], params["b2"]     # [9, Cout, Cout] bf16, [1, Cout] f32
    assert w1.shape[1] == Cin
    Cout = w1.shape[2]

    TR = _pick_row_tile(Hp, Wp)

    # Space-to-depth layout [N, 4, Hp, Wp, Cin] (fuses the 2x2 pool window into a
    # leading dim and gives the kernel a channel-last layout), cast to bf16.
    x_s2d = (x_nchw.reshape(N, Cin, Hp, 2, Wp, 2)
             .transpose(0, 3, 5, 2, 4, 1)
             .reshape(N, 4, Hp, Wp, Cin)
             .astype(jnp.bfloat16))

    kernel = functools.partial(_down_kernel, hp=Hp, wp=Wp, tr=TR)

    # Explicit VMEM accounting: double-buffered in/out blocks + persistent scratch.
    def nbytes(shape, dt):
        return math.prod(shape) * jnp.dtype(dt).itemsize
    est = (2 * nbytes((1, 4, Hp, Wp, Cin), jnp.bfloat16)
           + 2 * nbytes((1, Hp, Wp, Cout), jnp.bfloat16)
           + nbytes((Hp + 2, Wp + 2 * _PADL, Cin), jnp.bfloat16)
           + nbytes((Hp + 2, Wp + 2 * _PADL, Cout), jnp.bfloat16)
           + 2 * 2 * (w1.size + w2.size)
           + 2 * 4 * 2 * Cout
           + (4 << 20))                      # slack
    vmem_limit = int(min(max(est, 16 << 20), 64 << 20))

    out = pl.pallas_call(
        kernel,
        out_shape=jax.ShapeDtypeStruct((N, Hp, Wp, Cout), jnp.bfloat16),
        grid=(N,),
        in_specs=[
            pl.BlockSpec((1, 4, Hp, Wp, Cin), lambda b: (b, 0, 0, 0, 0)),
            pl.BlockSpec((9, Cin, Cout), lambda b: (0, 0, 0)),
            pl.BlockSpec((1, Cout), lambda b: (0, 0)),
            pl.BlockSpec((9, Cout, Cout), lambda b: (0, 0, 0)),
            pl.BlockSpec((1, Cout), lambda b: (0, 0)),
        ],
        out_specs=pl.BlockSpec((1, Hp, Wp, Cout), lambda b: (b, 0, 0, 0)),
        scratch_shapes=[
            pltpu.VMEM((Hp + 2, Wp + 2 * _PADL, Cin), jnp.bfloat16),   # pooled + halo
            pltpu.VMEM((Hp + 2, Wp + 2 * _PADL, Cout), jnp.bfloat16),  # conv1 out + halo
        ],
        compiler_params=pltpu.CompilerParams(
            dimension_semantics=("parallel",),
            vmem_limit_bytes=vmem_limit),
    )(x_s2d, w1, b1, w2, b2)

    if channel_last:
        return out                      # bf16 NHWC: preferred hand-off to a next fused layer
    # NCHW f32 epilogue only for parity with the PyTorch module's output layout.
    return out.transpose(0, 3, 1, 2).astype(jnp.float32)


# ---------------------------------------------------------------------------
# Parameter construction (deterministic synthetic weights; eval-mode BN folded)
# ---------------------------------------------------------------------------

def _fold_conv_bn(keys, cin, cout, eps=1e-5):
    kw, kb, kg, kbe, km, kv = keys
    w = jax.random.normal(kw, (3, 3, cin, cout), jnp.float32) * 0.1     # HWIO
    b = jax.random.normal(kb, (cout,), jnp.float32) * 0.1
    g = jax.random.uniform(kg, (cout,), jnp.float32, minval=0.5, maxval=1.5)
    be = jax.random.normal(kbe, (cout,), jnp.float32) * 0.1
    m = jax.random.normal(km, (cout,), jnp.float32) * 0.1
    v = jax.random.uniform(kv, (cout,), jnp.float32, minval=0.5, maxval=1.5)
    scale = g * jax.lax.rsqrt(v + eps)
    w_fold = w * scale                     # fold BN scale into conv weights
    bias = (b - m) * scale + be            # folded BN bias
    return w_fold, bias


def init_down_params(key, in_ch, out_ch):
    """Returns (kernel-ready params, f32 reference params)."""
    ks = jax.random.split(key, 12)
    w1f, b1 = _fold_conv_bn(ks[0:6], in_ch, out_ch)
    w2f, b2 = _fold_conv_bn(ks[6:12], out_ch, out_ch)
    params = dict(
        w1=w1f.reshape(9, in_ch, out_ch).astype(jnp.bfloat16),   # tap = 3*dy + dx
        b1=b1.reshape(1, out_ch).astype(jnp.float32),
        w2=w2f.reshape(9, out_ch, out_ch).astype(jnp.bfloat16),
        b2=b2.reshape(1, out_ch).astype(jnp.float32),
    )
    return params, (w1f, b1, w2f, b2)


def _down_reference(x, w1f, b1, w2f, b2):
    """Pure-JAX f32 reference: maxpool2 -> (conv3x3 + bias + relu) x 2."""
    xp = jax.lax.reduce_window(x, -jnp.inf, jax.lax.max,
                               (1, 1, 2, 2), (1, 1, 2, 2), "VALID")

    def conv(inp, w, b):
        y = jax.lax.conv_general_dilated(
            inp, w, window_strides=(1, 1), padding="SAME",
            dimension_numbers=("NCHW", "HWIO", "NCHW"),
            precision=jax.lax.Precision.HIGHEST)
        return jax.nn.relu(y + b[None, :, None, None])

    return conv(conv(xp, w1f, b1), w2f, b2)


# ---------------------------------------------------------------------------
# Demo
# ---------------------------------------------------------------------------

if __name__ == "__main__":
    key = jax.random.PRNGKey(0)
    kx, kp = jax.random.split(key)

    N, in_ch, out_ch = 2, 4, 8
    H = W = 16

    x = jax.random.normal(kx, (N, in_ch, H, W), jnp.float32)
    params, ref_params = init_down_params(kp, in_ch, out_ch)

    fwd = jax.jit(down_forward)
    out = fwd(x, params)
    jax.block_until_ready(out)

    assert out.shape == (N, out_ch, H // 2, W // 2), out.shape
    assert bool(jnp.all(jnp.isfinite(out)))

    ref = _down_reference(x, *ref_params)
    assert bool(jnp.allclose(out, ref, rtol=0.05, atol=0.05)), \
        float(jnp.max(jnp.abs(out - ref)))

    print("KERNEL_OK")
</pallas_src>

<mosaic_0001>
module attributes {stable_mosaic.version = 11 : i64} {
  func.func @_down_kernel(%arg0: i32, %arg1: memref<1x4x8x8x4xbf16, #tpu.memory_space<vmem>>, %arg2: memref<9x4x8xbf16, #tpu.memory_space<vmem>>, %arg3: memref<1x8xf32, #tpu.memory_space<vmem>>, %arg4: memref<9x8x8xbf16, #tpu.memory_space<vmem>>, %arg5: memref<1x8xf32, #tpu.memory_space<vmem>>, %arg6: memref<1x8x8x8xbf16, #tpu.memory_space<vmem>>, %arg7: memref<10x24x4xbf16, #tpu.memory_space<vmem>>, %arg8: memref<10x24x8xbf16, #tpu.memory_space<vmem>>) attributes {dimension_semantics = [#tpu.dimension_semantics<parallel>], iteration_bounds = array<i64: 2>, scalar_prefetch = 0 : i64, scratch_operands = 2 : i64, tpu.core_type = #tpu.core_type<tc>, window_params = [{transform_indices = @transform_0, window_bounds = array<i64: 1, 4, 8, 8, 4>}, {pipeline_mode = #tpu.pipeline_mode<synchronous>, transform_indices = @transform_1, window_bounds = array<i64: 9, 4, 8>}, {pipeline_mode = #tpu.pipeline_mode<synchronous>, transform_indices = @transform_2, window_bounds = array<i64: 1, 8>}, {pipeline_mode = #tpu.pipeline_mode<synchronous>, transform_indices = @transform_3, window_bounds = array<i64: 9, 8, 8>}, {pipeline_mode = #tpu.pipeline_mode<synchronous>, transform_indices = @transform_4, window_bounds = array<i64: 1, 8>}, {transform_indices = @transform_5, window_bounds = array<i64: 1, 8, 8, 8>}]} {
    %cst = arith.constant 0.000000e+00 : bf16
    %0 = vector.broadcast %cst : bf16 to vector<24x4xbf16>
    %c0 = arith.constant 0 : index
    %c0_0 = arith.constant 0 : index
    %c0_1 = arith.constant 0 : index
    %1 = vector.load %arg7[%c0, %c0_0, %c0_1] : memref<10x24x4xbf16, #tpu.memory_space<vmem>>, vector<1x24x4xbf16>
    %2 = vector.shape_cast %1 : vector<1x24x4xbf16> to vector<24x4xbf16>
    %3 = vector.shape_cast %0 : vector<24x4xbf16> to vector<1x24x4xbf16>
    tpu.vector_store %arg7[%c0, %c0_0, %c0_1], %3 {strides = array<i32>} : memref<10x24x4xbf16, #tpu.memory_space<vmem>>, vector<1x24x4xbf16>,
    %c9 = arith.constant 9 : index
    %c0_2 = arith.constant 0 : index
    %c0_3 = arith.constant 0 : index
    %4 = vector.load %arg7[%c9, %c0_2, %c0_3] : memref<10x24x4xbf16, #tpu.memory_space<vmem>>, vector<1x24x4xbf16>
    %5 = vector.shape_cast %4 : vector<1x24x4xbf16> to vector<24x4xbf16>
    %6 = vector.shape_cast %0 : vector<24x4xbf16> to vector<1x24x4xbf16>
    tpu.vector_store %arg7[%c9, %c0_2, %c0_3], %6 {strides = array<i32>} : memref<10x24x4xbf16, #tpu.memory_space<vmem>>, vector<1x24x4xbf16>,
    %cst_4 = arith.constant 0.000000e+00 : bf16
    %7 = vector.broadcast %cst_4 : bf16 to vector<8x8x4xbf16>
    %c1 = arith.constant 1 : index
    %c0_5 = arith.constant 0 : index
    %c0_6 = arith.constant 0 : index
    %8 = vector.load %arg7[%c1, %c0_5, %c0_6] : memref<10x24x4xbf16, #tpu.memory_space<vmem>>, vector<8x8x4xbf16>
    tpu.vector_store %arg7[%c1, %c0_5, %c0_6], %7 {strides = array<i32>} : memref<10x24x4xbf16, #tpu.memory_space<vmem>>, vector<8x8x4xbf16>,
    %c1_7 = arith.constant 1 : index
    %c16 = arith.constant 16 : index
    %c0_8 = arith.constant 0 : index
    %9 = vector.load %arg7[%c1_7, %c16, %c0_8] : memref<10x24x4xbf16, #tpu.memory_space<vmem>>, vector<8x8x4xbf16>
    tpu.vector_store %arg7[%c1_7, %c16, %c0_8], %7 {strides = array<i32>} : memref<10x24x4xbf16, #tpu.memory_space<vmem>>, vector<8x8x4xbf16>,
    %cst_9 = arith.constant 0.000000e+00 : bf16
    %10 = vector.broadcast %cst_9 : bf16 to vector<24x8xbf16>
    %c0_10 = arith.constant 0 : index
    %c0_11 = arith.constant 0 : index
    %c0_12 = arith.constant 0 : index
    %11 = vector.load %arg8[%c0_10, %c0_11, %c0_12] : memref<10x24x8xbf16, #tpu.memory_space<vmem>>, vector<1x24x8xbf16>
    %12 = vector.shape_cast %11 : vector<1x24x8xbf16> to vector<24x8xbf16>
    %13 = vector.shape_cast %10 : vector<24x8xbf16> to vector<1x24x8xbf16>
    tpu.vector_store %arg8[%c0_10, %c0_11, %c0_12], %13 {strides = array<i32>} : memref<10x24x8xbf16, #tpu.memory_space<vmem>>, vector<1x24x8xbf16>,
    %c9_13 = arith.constant 9 : index
    %c0_14 = arith.constant 0 : index
    %c0_15 = arith.constant 0 : index
    %14 = vector.load %arg8[%c9_13, %c0_14, %c0_15] : memref<10x24x8xbf16, #tpu.memory_space<vmem>>, vector<1x24x8xbf16>
    %15 = vector.shape_cast %14 : vector<1x24x8xbf16> to vector<24x8xbf16>
    %16 = vector.shape_cast %10 : vector<24x8xbf16> to vector<1x24x8xbf16>
    tpu.vector_store %arg8[%c9_13, %c0_14, %c0_15], %16 {strides = array<i32>} : memref<10x24x8xbf16, #tpu.memory_space<vmem>>, vector<1x24x8xbf16>,
    %cst_16 = arith.constant 0.000000e+00 : bf16
    %17 = vector.broadcast %cst_16 : bf16 to vector<8x8x8xbf16>
    %c1_17 = arith.constant 1 : index
    %c0_18 = arith.constant 0 : index
    %c0_19 = arith.constant 0 : index
    %18 = vector.load %arg8[%c1_17, %c0_18, %c0_19] : memref<10x24x8xbf16, #tpu.memory_space<vmem>>, vector<8x8x8xbf16>
    tpu.vector_store %arg8[%c1_17, %c0_18, %c0_19], %17 {strides = array<i32>} : memref<10x24x8xbf16, #tpu.memory_space<vmem>>, vector<8x8x8xbf16>,
    %c1_20 = arith.constant 1 : index
    %c16_21 = arith.constant 16 : index
    %c0_22 = arith.constant 0 : index
    %19 = vector.load %arg8[%c1_20, %c16_21, %c0_22] : memref<10x24x8xbf16, #tpu.memory_space<vmem>>, vector<8x8x8xbf16>
    tpu.vector_store %arg8[%c1_20, %c16_21, %c0_22], %17 {strides = array<i32>} : memref<10x24x8xbf16, #tpu.memory_space<vmem>>, vector<8x8x8xbf16>,
    %c0_i32 = arith.constant 0 : i32
    %c1_i32 = arith.constant 1 : i32
    %20 = arith.muli %c0_i32, %c1_i32 : i32
    %c0_i32_23 = arith.constant 0 : i32
    %21 = arith.addi %c0_i32_23, %20 : i32
    %c8_i32 = arith.constant 8 : i32
    %22 = arith.muli %21, %c8_i32 : i32
    %c0_24 = arith.constant 0 : index
    %c0_25 = arith.constant 0 : index
    %23 = arith.index_cast %22 : i32 to index
    %c0_26 = arith.constant 0 : index
    %c0_27 = arith.constant 0 : index
    %24 = vector.load %arg1[%c0_24, %c0_25, %23, %c0_26, %c0_27] : memref<1x4x8x8x4xbf16, #tpu.memory_space<vmem>>, vector<1x1x8x8x4xbf16>
    %25 = vector.shape_cast %24 : vector<1x1x8x8x4xbf16> to vector<8x8x4xbf16>
    %c0_28 = arith.constant 0 : index
    %c1_29 = arith.constant 1 : index
    %26 = arith.index_cast %22 : i32 to index
    %c0_30 = arith.constant 0 : index
    %c0_31 = arith.constant 0 : index
    %27 = vector.load %arg1[%c0_28, %c1_29, %26, %c0_30, %c0_31] : memref<1x4x8x8x4xbf16, #tpu.memory_space<vmem>>, vector<1x1x8x8x4xbf16>
    %28 = vector.shape_cast %27 : vector<1x1x8x8x4xbf16> to vector<8x8x4xbf16>
    %29 = arith.maximumf %25, %28 : vector<8x8x4xbf16>
    %c0_32 = arith.constant 0 : index
    %c2 = arith.constant 2 : index
    %30 = arith.index_cast %22 : i32 to index
    %c0_33 = arith.constant 0 : index
    %c0_34 = arith.constant 0 : index
    %31 = vector.load %arg1[%c0_32, %c2, %30, %c0_33, %c0_34] : memref<1x4x8x8x4xbf16, #tpu.memory_space<vmem>>, vector<1x1x8x8x4xbf16>
    %32 = vector.shape_cast %31 : vector<1x1x8x8x4xbf16> to vector<8x8x4xbf16>
    %33 = arith.maximumf %29, %32 : vector<8x8x4xbf16>
    %c0_35 = arith.constant 0 : index
    %c3 = arith.constant 3 : index
    %34 = arith.index_cast %22 : i32 to index
    %c0_36 = arith.constant 0 : index
    %c0_37 = arith.constant 0 : index
    %35 = vector.load %arg1[%c0_35, %c3, %34, %c0_36, %c0_37] : memref<1x4x8x8x4xbf16, #tpu.memory_space<vmem>>, vector<1x1x8x8x4xbf16>
    %36 = vector.shape_cast %35 : vector<1x1x8x8x4xbf16> to vector<8x8x4xbf16>
    %37 = arith.maximumf %33, %36 : vector<8x8x4xbf16>
    %c1_i32_38 = arith.constant 1 : i32
    %38 = arith.addi %22, %c1_i32_38 : i32
    %39 = arith.index_cast %38 : i32 to index
    %c8 = arith.constant 8 : index
    %c0_39 = arith.constant 0 : index
    %40 = vector.load %arg7[%39, %c8, %c0_39] : memref<10x24x4xbf16, #tpu.memory_space<vmem>>, vector<8x8x4xbf16>
    tpu.vector_store %arg7[%39, %c8, %c0_39], %37 {strides = array<i32>} : memref<10x24x4xbf16, #tpu.memory_space<vmem>>, vector<8x8x4xbf16>,
    %c1_i32_40 = arith.constant 1 : i32
    %c0_i32_41 = arith.constant 0 : i32
    %c1_i32_42 = arith.constant 1 : i32
    %41 = arith.muli %c0_i32_41, %c1_i32_42 : i32
    %c0_i32_43 = arith.constant 0 : i32
    %42 = arith.addi %c0_i32_43, %41 : i32
    %c8_i32_44 = arith.constant 8 : i32
    %43 = arith.muli %42, %c8_i32_44 : i32
    %c0_i32_45 = arith.constant 0 : i32
    %44 = arith.addi %43, %c0_i32_45 : i32
    %45 = arith.index_cast %44 : i32 to index
    %c7 = arith.constant 7 : index
    %c0_46 = arith.constant 0 : index
    %46 = vector.load %arg7[%45, %c7, %c0_46] : memref<10x24x4xbf16, #tpu.memory_space<vmem>>, vector<8x8x4xbf16>
    %47 = vector.shape_cast %46 : vector<8x8x4xbf16> to vector<64x4xbf16>
    %c0_47 = arith.constant 0 : index
    %c0_48 = arith.constant 0 : index
    %c0_49 = arith.constant 0 : index
    %48 = vector.load %arg2[%c0_47, %c0_48, %c0_49] : memref<9x4x8xbf16, #tpu.memory_space<vmem>>, vector<1x4x8xbf16>
    %49 = vector.shape_cast %48 : vector<1x4x8xbf16> to vector<4x8xbf16>
    %cst_50 = arith.constant dense<0.000000e+00> : vector<64x8xf32>
    %50 = tpu.matmul %47, %49, %cst_50 {dimension_numbers = #tpu.dot_dimension_numbers<[1], [0], [0], [1], [0, 0, 1, 1], [], []>} : vector<64x4xbf16>, vector<4x8xbf16>, vector<64x8xf32> -> vector<64x8xf32>
    %c0_i32_51 = arith.constant 0 : i32
    %51 = arith.addi %43, %c0_i32_51 : i32
    %52 = arith.index_cast %51 : i32 to index
    %c8_52 = arith.constant 8 : index
    %c0_53 = arith.constant 0 : index
    %53 = vector.load %arg7[%52, %c8_52, %c0_53] : memref<10x24x4xbf16, #tpu.memory_space<vmem>>, vector<8x8x4xbf16>
    %54 = vector.shape_cast %53 : vector<8x8x4xbf16> to vector<64x4xbf16>
    %c1_54 = arith.constant 1 : index
    %c0_55 = arith.constant 0 : index
    %c0_56 = arith.constant 0 : index
    %55 = vector.load %arg2[%c1_54, %c0_55, %c0_56] : memref<9x4x8xbf16, #tpu.memory_space<vmem>>, vector<1x4x8xbf16>
    %56 = vector.shape_cast %55 : vector<1x4x8xbf16> to vector<4x8xbf16>
    %cst_57 = arith.constant dense<0.000000e+00> : vector<64x8xf32>
    %57 = tpu.matmul %54, %56, %cst_57 {dimension_numbers = #tpu.dot_dimension_numbers<[1], [0], [0], [1], [0, 0, 1, 1], [], []>} : vector<64x4xbf16>, vector<4x8xbf16>, vector<64x8xf32> -> vector<64x8xf32>
    %58 = arith.addf %50, %57 : vector<64x8xf32>
    %c0_i32_58 = arith.constant 0 : i32
    %59 = arith.addi %43, %c0_i32_58 : i32
    %60 = arith.index_cast %59 : i32 to index
    %c9_59 = arith.constant 9 : index
    %c0_60 = arith.constant 0 : index
    %61 = vector.load %arg7[%60, %c9_59, %c0_60] : memref<10x24x4xbf16, #tpu.memory_space<vmem>>, vector<8x8x4xbf16>
    %62 = vector.shape_cast %61 : vector<8x8x4xbf16> to vector<64x4xbf16>
    %c2_61 = arith.constant 2 : index
    %c0_62 = arith.constant 0 : index
    %c0_63 = arith.constant 0 : index
    %63 = vector.load %arg2[%c2_61, %c0_62, %c0_63] : memref<9x4x8xbf16, #tpu.memory_space<vmem>>, vector<1x4x8xbf16>
    %64 = vector.shape_cast %63 : vector<1x4x8xbf16> to vector<4x8xbf16>
    %cst_64 = arith.constant dense<0.000000e+00> : vector<64x8xf32>
    %65 = tpu.matmul %62, %64, %cst_64 {dimension_numbers = #tpu.dot_dimension_numbers<[1], [0], [0], [1], [0, 0, 1, 1], [], []>} : vector<64x4xbf16>, vector<4x8xbf16>, vector<64x8xf32> -> vector<64x8xf32>
    %66 = arith.addf %58, %65 : vector<64x8xf32>
    %c1_i32_65 = arith.constant 1 : i32
    %67 = arith.addi %43, %c1_i32_65 : i32
    %68 = arith.index_cast %67 : i32 to index
    %c7_66 = arith.constant 7 : index
    %c0_67 = arith.constant 0 : index
    %69 = vector.load %arg7[%68, %c7_66, %c0_67] : memref<10x24x4xbf16, #tpu.memory_space<vmem>>, vector<8x8x4xbf16>
    %70 = vector.shape_cast %69 : vector<8x8x4xbf16> to vector<64x4xbf16>
    %c3_68 = arith.constant 3 : index
    %c0_69 = arith.constant 0 : index
    %c0_70 = arith.constant 0 : index
    %71 = vector.load %arg2[%c3_68, %c0_69, %c0_70] : memref<9x4x8xbf16, #tpu.memory_space<vmem>>, vector<1x4x8xbf16>
    %72 = vector.shape_cast %71 : vector<1x4x8xbf16> to vector<4x8xbf16>
    %cst_71 = arith.constant dense<0.000000e+00> : vector<64x8xf32>
    %73 = tpu.matmul %70, %72, %cst_71 {dimension_numbers = #tpu.dot_dimension_numbers<[1], [0], [0], [1], [0, 0, 1, 1], [], []>} : vector<64x4xbf16>, vector<4x8xbf16>, vector<64x8xf32> -> vector<64x8xf32>
    %74 = arith.addf %66, %73 : vector<64x8xf32>
    %c1_i32_72 = arith.constant 1 : i32
    %75 = arith.addi %43, %c1_i32_72 : i32
    %76 = arith.index_cast %75 : i32 to index
    %c8_73 = arith.constant 8 : index
    %c0_74 = arith.constant 0 : index
    %77 = vector.load %arg7[%76, %c8_73, %c0_74] : memref<10x24x4xbf16, #tpu.memory_space<vmem>>, vector<8x8x4xbf16>
    %78 = vector.shape_cast %77 : vector<8x8x4xbf16> to vector<64x4xbf16>
    %c4 = arith.constant 4 : index
    %c0_75 = arith.constant 0 : index
    %c0_76 = arith.constant 0 : index
    %79 = vector.load %arg2[%c4, %c0_75, %c0_76] : memref<9x4x8xbf16, #tpu.memory_space<vmem>>, vector<1x4x8xbf16>
    %80 = vector.shape_cast %79 : vector<1x4x8xbf16> to vector<4x8xbf16>
    %cst_77 = arith.constant dense<0.000000e+00> : vector<64x8xf32>
    %81 = tpu.matmul %78, %80, %cst_77 {dimension_numbers = #tpu.dot_dimension_numbers<[1], [0], [0], [1], [0, 0, 1, 1], [], []>} : vector<64x4xbf16>, vector<4x8xbf16>, vector<64x8xf32> -> vector<64x8xf32>
    %82 = arith.addf %74, %81 : vector<64x8xf32>
    %c1_i32_78 = arith.constant 1 : i32
    %83 = arith.addi %43, %c1_i32_78 : i32
    %84 = arith.index_cast %83 : i32 to index
    %c9_79 = arith.constant 9 : index
    %c0_80 = arith.constant 0 : index
    %85 = vector.load %arg7[%84, %c9_79, %c0_80] : memref<10x24x4xbf16, #tpu.memory_space<vmem>>, vector<8x8x4xbf16>
    %86 = vector.shape_cast %85 : vector<8x8x4xbf16> to vector<64x4xbf16>
    %c5 = arith.constant 5 : index
    %c0_81 = arith.constant 0 : index
    %c0_82 = arith.constant 0 : index
    %87 = vector.load %arg2[%c5, %c0_81, %c0_82] : memref<9x4x8xbf16, #tpu.memory_space<vmem>>, vector<1x4x8xbf16>
    %88 = vector.shape_cast %87 : vector<1x4x8xbf16> to vector<4x8xbf16>
    %cst_83 = arith.constant dense<0.000000e+00> : vector<64x8xf32>
    %89 = tpu.matmul %86, %88, %cst_83 {dimension_numbers = #tpu.dot_dimension_numbers<[1], [0], [0], [1], [0, 0, 1, 1], [], []>} : vector<64x4xbf16>, vector<4x8xbf16>, vector<64x8xf32> -> vector<64x8xf32>
    %90 = arith.addf %82, %89 : vector<64x8xf32>
    %c2_i32 = arith.constant 2 : i32
    %91 = arith.addi %43, %c2_i32 : i32
    %92 = arith.index_cast %91 : i32 to index
    %c7_84 = arith.constant 7 : index
    %c0_85 = arith.constant 0 : index
    %93 = vector.load %arg7[%92, %c7_84, %c0_85] : memref<10x24x4xbf16, #tpu.memory_space<vmem>>, vector<8x8x4xbf16>
    %94 = vector.shape_cast %93 : vector<8x8x4xbf16> to vector<64x4xbf16>
    %c6 = arith.constant 6 : index
    %c0_86 = arith.constant 0 : index
    %c0_87 = arith.constant 0 : index
    %95 = vector.load %arg2[%c6, %c0_86, %c0_87] : memref<9x4x8xbf16, #tpu.memory_space<vmem>>, vector<1x4x8xbf16>
    %96 = vector.shape_cast %95 : vector<1x4x8xbf16> to vector<4x8xbf16>
    %cst_88 = arith.constant dense<0.000000e+00> : vector<64x8xf32>
    %97 = tpu.matmul %94, %96, %cst_88 {dimension_numbers = #tpu.dot_dimension_numbers<[1], [0], [0], [1], [0, 0, 1, 1], [], []>} : vector<64x4xbf16>, vector<4x8xbf16>, vector<64x8xf32> -> vector<64x8xf32>
    %98 = arith.addf %90, %97 : vector<64x8xf32>
    %c2_i32_89 = arith.constant 2 : i32
    %99 = arith.addi %43, %c2_i32_89 : i32
    %100 = arith.index_cast %99 : i32 to index
    %c8_90 = arith.constant 8 : index
    %c0_91 = arith.constant 0 : index
    %101 = vector.load %arg7[%100, %c8_90, %c0_91] : memref<10x24x4xbf16, #tpu.memory_space<vmem>>, vector<8x8x4xbf16>
    %102 = vector.shape_cast %101 : vector<8x8x4xbf16> to vector<64x4xbf16>
    %c7_92 = arith.constant 7 : index
    %c0_93 = arith.constant 0 : index
    %c0_94 = arith.constant 0 : index
    %103 = vector.load %arg2[%c7_92, %c0_93, %c0_94] : memref<9x4x8xbf16, #tpu.memory_space<vmem>>, vector<1x4x8xbf16>
    %104 = vector.shape_cast %103 : vector<1x4x8xbf16> to vector<4x8xbf16>
    %cst_95 = arith.constant dense<0.000000e+00> : vector<64x8xf32>
    %105 = tpu.matmul %102, %104, %cst_95 {dimension_numbers = #tpu.dot_dimension_numbers<[1], [0], [0], [1], [0, 0, 1, 1], [], []>} : vector<64x4xbf16>, vector<4x8xbf16>, vector<64x8xf32> -> vector<64x8xf32>
    %106 = arith.addf %98, %105 : vector<64x8xf32>
    %c2_i32_96 = arith.constant 2 : i32
    %107 = arith.addi %43, %c2_i32_96 : i32
    %108 = arith.index_cast %107 : i32 to index
    %c9_97 = arith.constant 9 : index
    %c0_98 = arith.constant 0 : index
    %109 = vector.load %arg7[%108, %c9_97, %c0_98] : memref<10x24x4xbf16, #tpu.memory_space<vmem>>, vector<8x8x4xbf16>
    %110 = vector.shape_cast %109 : vector<8x8x4xbf16> to vector<64x4xbf16>
    %c8_99 = arith.constant 8 : index
    %c0_100 = arith.constant 0 : index
    %c0_101 = arith.constant 0 : index
    %111 = vector.load %arg2[%c8_99, %c0_100, %c0_101] : memref<9x4x8xbf16, #tpu.memory_space<vmem>>, vector<1x4x8xbf16>
    %112 = vector.shape_cast %111 : vector<1x4x8xbf16> to vector<4x8xbf16>
    %cst_102 = arith.constant dense<0.000000e+00> : vector<64x8xf32>
    %113 = tpu.matmul %110, %112, %cst_102 {dimension_numbers = #tpu.dot_dimension_numbers<[1], [0], [0], [1], [0, 0, 1, 1], [], []>} : vector<64x4xbf16>, vector<4x8xbf16>, vector<64x8xf32> -> vector<64x8xf32>
    %114 = arith.addf %106, %113 : vector<64x8xf32>
    %c0_103 = arith.constant 0 : index
    %c0_104 = arith.constant 0 : index
    %115 = vector.load %arg3[%c0_103, %c0_104] : memref<1x8xf32, #tpu.memory_space<vmem>>, vector<1x8xf32>
    %116 = vector.broadcast %115 : vector<1x8xf32> to vector<64x8xf32>
    %117 = arith.addf %114, %116 : vector<64x8xf32>
    %cst_105 = arith.constant 0.000000e+00 : f32
    %118 = vector.broadcast %cst_105 : f32 to vector<64x8xf32>
    %119 = arith.maximumf %117, %118 : vector<64x8xf32>
    %120 = arith.truncf %119 : vector<64x8xf32> to vector<64x8xbf16>
    %121 = vector.shape_cast %120 : vector<64x8xbf16> to vector<8x8x8xbf16>
    %c1_i32_106 = arith.constant 1 : i32
    %122 = arith.addi %43, %c1_i32_106 : i32
    %123 = arith.index_cast %122 : i32 to index
    %c8_107 = arith.constant 8 : index
    %c0_108 = arith.constant 0 : index
    %124 = vector.load %arg8[%123, %c8_107, %c0_108] : memref<10x24x8xbf16, #tpu.memory_space<vmem>>, vector<8x8x8xbf16>
    tpu.vector_store %arg8[%123, %c8_107, %c0_108], %121 {strides = array<i32>} : memref<10x24x8xbf16, #tpu.memory_space<vmem>>, vector<8x8x8xbf16>,
    %c1_i32_109 = arith.constant 1 : i32
    %c0_i32_110 = arith.constant 0 : i32
    %c1_i32_111 = arith.constant 1 : i32
    %125 = arith.muli %c0_i32_110, %c1_i32_111 : i32
    %c0_i32_112 = arith.constant 0 : i32
    %126 = arith.addi %c0_i32_112, %125 : i32
    %c8_i32_113 = arith.constant 8 : i32
    %127 = arith.muli %126, %c8_i32_113 : i32
    %c0_i32_114 = arith.constant 0 : i32
    %128 = arith.addi %127, %c0_i32_114 : i32
    %129 = arith.index_cast %128 : i32 to index
    %c7_115 = arith.constant 7 : index
    %c0_116 = arith.constant 0 : index
    %130 = vector.load %arg8[%129, %c7_115, %c0_116] : memref<10x24x8xbf16, #tpu.memory_space<vmem>>, vector<8x8x8xbf16>
    %131 = vector.shape_cast %130 : vector<8x8x8xbf16> to vector<64x8xbf16>
    %c0_117 = arith.constant 0 : index
    %c0_118 = arith.constant 0 : index
    %c0_119 = arith.constant 0 : index
    %132 = vector.load %arg4[%c0_117, %c0_118, %c0_119] : memref<9x8x8xbf16, #tpu.memory_space<vmem>>, vector<1x8x8xbf16>
    %133 = vector.shape_cast %132 : vector<1x8x8xbf16> to vector<8x8xbf16>
    %cst_120 = arith.constant dense<0.000000e+00> : vector<64x8xf32>
    %134 = tpu.matmul %131, %133, %cst_120 {dimension_numbers = #tpu.dot_dimension_numbers<[1], [0], [0], [1], [0, 0, 1, 1], [], []>} : vector<64x8xbf16>, vector<8x8xbf16>, vector<64x8xf32> -> vector<64x8xf32>
    %c0_i32_121 = arith.constant 0 : i32
    %135 = arith.addi %127, %c0_i32_121 : i32
    %136 = arith.index_cast %135 : i32 to index
    %c8_122 = arith.constant 8 : index
    %c0_123 = arith.constant 0 : index
    %137 = vector.load %arg8[%136, %c8_122, %c0_123] : memref<10x24x8xbf16, #tpu.memory_space<vmem>>, vector<8x8x8xbf16>
    %138 = vector.shape_cast %137 : vector<8x8x8xbf16> to vector<64x8xbf16>
    %c1_124 = arith.constant 1 : index
    %c0_125 = arith.constant 0 : index
    %c0_126 = arith.constant 0 : index
    %139 = vector.load %arg4[%c1_124, %c0_125, %c0_126] : memref<9x8x8xbf16, #tpu.memory_space<vmem>>, vector<1x8x8xbf16>
    %140 = vector.shape_cast %139 : vector<1x8x8xbf16> to vector<8x8xbf16>
    %cst_127 = arith.constant dense<0.000000e+00> : vector<64x8xf32>
    %141 = tpu.matmul %138, %140, %cst_127 {dimension_numbers = #tpu.dot_dimension_numbers<[1], [0], [0], [1], [0, 0, 1, 1], [], []>} : vector<64x8xbf16>, vector<8x8xbf16>, vector<64x8xf32> -> vector<64x8xf32>
    %142 = arith.addf %134, %141 : vector<64x8xf32>
    %c0_i32_128 = arith.constant 0 : i32
    %143 = arith.addi %127, %c0_i32_128 : i32
    %144 = arith.index_cast %143 : i32 to index
    %c9_129 = arith.constant 9 : index
    %c0_130 = arith.constant 0 : index
    %145 = vector.load %arg8[%144, %c9_129, %c0_130] : memref<10x24x8xbf16, #tpu.memory_space<vmem>>, vector<8x8x8xbf16>
    %146 = vector.shape_cast %145 : vector<8x8x8xbf16> to vector<64x8xbf16>
    %c2_131 = arith.constant 2 : index
    %c0_132 = arith.constant 0 : index
    %c0_133 = arith.constant 0 : index
    %147 = vector.load %arg4[%c2_131, %c0_132, %c0_133] : memref<9x8x8xbf16, #tpu.memory_space<vmem>>, vector<1x8x8xbf16>
    %148 = vector.shape_cast %147 : vector<1x8x8xbf16> to vector<8x8xbf16>
    %cst_134 = arith.constant dense<0.000000e+00> : vector<64x8xf32>
    %149 = tpu.matmul %146, %148, %cst_134 {dimension_numbers = #tpu.dot_dimension_numbers<[1], [0], [0], [1], [0, 0, 1, 1], [], []>} : vector<64x8xbf16>, vector<8x8xbf16>, vector<64x8xf32> -> vector<64x8xf32>
    %150 = arith.addf %142, %149 : vector<64x8xf32>
    %c1_i32_135 = arith.constant 1 : i32
    %151 = arith.addi %127, %c1_i32_135 : i32
    %152 = arith.index_cast %151 : i32 to index
    %c7_136 = arith.constant 7 : index
    %c0_137 = arith.constant 0 : index
    %153 = vector.load %arg8[%152, %c7_136, %c0_137] : memref<10x24x8xbf16, #tpu.memory_space<vmem>>, vector<8x8x8xbf16>
    %154 = vector.shape_cast %153 : vector<8x8x8xbf16> to vector<64x8xbf16>
    %c3_138 = arith.constant 3 : index
    %c0_139 = arith.constant 0 : index
    %c0_140 = arith.constant 0 : index
    %155 = vector.load %arg4[%c3_138, %c0_139, %c0_140] : memref<9x8x8xbf16, #tpu.memory_space<vmem>>, vector<1x8x8xbf16>
    %156 = vector.shape_cast %155 : vector<1x8x8xbf16> to vector<8x8xbf16>
    %cst_141 = arith.constant dense<0.000000e+00> : vector<64x8xf32>
    %157 = tpu.matmul %154, %156, %cst_141 {dimension_numbers = #tpu.dot_dimension_numbers<[1], [0], [0], [1], [0, 0, 1, 1], [], []>} : vector<64x8xbf16>, vector<8x8xbf16>, vector<64x8xf32> -> vector<64x8xf32>
    %158 = arith.addf %150, %157 : vector<64x8xf32>
    %c1_i32_142 = arith.constant 1 : i32
    %159 = arith.addi %127, %c1_i32_142 : i32
    %160 = arith.index_cast %159 : i32 to index
    %c8_143 = arith.constant 8 : index
    %c0_144 = arith.constant 0 : index
    %161 = vector.load %arg8[%160, %c8_143, %c0_144] : memref<10x24x8xbf16, #tpu.memory_space<vmem>>, vector<8x8x8xbf16>
    %162 = vector.shape_cast %161 : vector<8x8x8xbf16> to vector<64x8xbf16>
    %c4_145 = arith.constant 4 : index
    %c0_146 = arith.constant 0 : index
    %c0_147 = arith.constant 0 : index
    %163 = vector.load %arg4[%c4_145, %c0_146, %c0_147] : memref<9x8x8xbf16, #tpu.memory_space<vmem>>, vector<1x8x8xbf16>
    %164 = vector.shape_cast %163 : vector<1x8x8xbf16> to vector<8x8xbf16>
    %cst_148 = arith.constant dense<0.000000e+00> : vector<64x8xf32>
    %165 = tpu.matmul %162, %164, %cst_148 {dimension_numbers = #tpu.dot_dimension_numbers<[1], [0], [0], [1], [0, 0, 1, 1], [], []>} : vector<64x8xbf16>, vector<8x8xbf16>, vector<64x8xf32> -> vector<64x8xf32>
    %166 = arith.addf %158, %165 : vector<64x8xf32>
    %c1_i32_149 = arith.constant 1 : i32
    %167 = arith.addi %127, %c1_i32_149 : i32
    %168 = arith.index_cast %167 : i32 to index
    %c9_150 = arith.constant 9 : index
    %c0_151 = arith.constant 0 : index
    %169 = vector.load %arg8[%168, %c9_150, %c0_151] : memref<10x24x8xbf16, #tpu.memory_space<vmem>>, vector<8x8x8xbf16>
    %170 = vector.shape_cast %169 : vector<8x8x8xbf16> to vector<64x8xbf16>
    %c5_152 = arith.constant 5 : index
    %c0_153 = arith.constant 0 : index
    %c0_154 = arith.constant 0 : index
    %171 = vector.load %arg4[%c5_152, %c0_153, %c0_154] : memref<9x8x8xbf16, #tpu.memory_space<vmem>>, vector<1x8x8xbf16>
    %172 = vector.shape_cast %171 : vector<1x8x8xbf16> to vector<8x8xbf16>
    %cst_155 = arith.constant dense<0.000000e+00> : vector<64x8xf32>
    %173 = tpu.matmul %170, %172, %cst_155 {dimension_numbers = #tpu.dot_dimension_numbers<[1], [0], [0], [1], [0, 0, 1, 1], [], []>} : vector<64x8xbf16>, vector<8x8xbf16>, vector<64x8xf32> -> vector<64x8xf32>
    %174 = arith.addf %166, %173 : vector<64x8xf32>
    %c2_i32_156 = arith.constant 2 : i32
    %175 = arith.addi %127, %c2_i32_156 : i32
    %176 = arith.index_cast %175 : i32 to index
    %c7_157 = arith.constant 7 : index
    %c0_158 = arith.constant 0 : index
    %177 = vector.load %arg8[%176, %c7_157, %c0_158] : memref<10x24x8xbf16, #tpu.memory_space<vmem>>, vector<8x8x8xbf16>
    %178 = vector.shape_cast %177 : vector<8x8x8xbf16> to vector<64x8xbf16>
    %c6_159 = arith.constant 6 : index
    %c0_160 = arith.constant 0 : index
    %c0_161 = arith.constant 0 : index
    %179 = vector.load %arg4[%c6_159, %c0_160, %c0_161] : memref<9x8x8xbf16, #tpu.memory_space<vmem>>, vector<1x8x8xbf16>
    %180 = vector.shape_cast %179 : vector<1x8x8xbf16> to vector<8x8xbf16>
    %cst_162 = arith.constant dense<0.000000e+00> : vector<64x8xf32>
    %181 = tpu.matmul %178, %180, %cst_162 {dimension_numbers = #tpu.dot_dimension_numbers<[1], [0], [0], [1], [0, 0, 1, 1], [], []>} : vector<64x8xbf16>, vector<8x8xbf16>, vector<64x8xf32> -> vector<64x8xf32>
    %182 = arith.addf %174, %181 : vector<64x8xf32>
    %c2_i32_163 = arith.constant 2 : i32
    %183 = arith.addi %127, %c2_i32_163 : i32
    %184 = arith.index_cast %183 : i32 to index
    %c8_164 = arith.constant 8 : index
    %c0_165 = arith.constant 0 : index
    %185 = vector.load %arg8[%184, %c8_164, %c0_165] : memref<10x24x8xbf16, #tpu.memory_space<vmem>>, vector<8x8x8xbf16>
    %186 = vector.shape_cast %185 : vector<8x8x8xbf16> to vector<64x8xbf16>
    %c7_166 = arith.constant 7 : index
    %c0_167 = arith.constant 0 : index
    %c0_168 = arith.constant 0 : index
    %187 = vector.load %arg4[%c7_166, %c0_167, %c0_168] : memref<9x8x8xbf16, #tpu.memory_space<vmem>>, vector<1x8x8xbf16>
    %188 = vector.shape_cast %187 : vector<1x8x8xbf16> to vector<8x8xbf16>
    %cst_169 = arith.constant dense<0.000000e+00> : vector<64x8xf32>
    %189 = tpu.matmul %186, %188, %cst_169 {dimension_numbers = #tpu.dot_dimension_numbers<[1], [0], [0], [1], [0, 0, 1, 1], [], []>} : vector<64x8xbf16>, vector<8x8xbf16>, vector<64x8xf32> -> vector<64x8xf32>
    %190 = arith.addf %182, %189 : vector<64x8xf32>
    %c2_i32_170 = arith.constant 2 : i32
    %191 = arith.addi %127, %c2_i32_170 : i32
    %192 = arith.index_cast %191 : i32 to index
    %c9_171 = arith.constant 9 : index
    %c0_172 = arith.constant 0 : index
    %193 = vector.load %arg8[%192, %c9_171, %c0_172] : memref<10x24x8xbf16, #tpu.memory_space<vmem>>, vector<8x8x8xbf16>
    %194 = vector.shape_cast %193 : vector<8x8x8xbf16> to vector<64x8xbf16>
    %c8_173 = arith.constant 8 : index
    %c0_174 = arith.constant 0 : index
    %c0_175 = arith.constant 0 : index
    %195 = vector.load %arg4[%c8_173, %c0_174, %c0_175] : memref<9x8x8xbf16, #tpu.memory_space<vmem>>, vector<1x8x8xbf16>
    %196 = vector.shape_cast %195 : vector<1x8x8xbf16> to vector<8x8xbf16>
    %cst_176 = arith.constant dense<0.000000e+00> : vector<64x8xf32>
    %197 = tpu.matmul %194, %196, %cst_176 {dimension_numbers = #tpu.dot_dimension_numbers<[1], [0], [0], [1], [0, 0, 1, 1], [], []>} : vector<64x8xbf16>, vector<8x8xbf16>, vector<64x8xf32> -> vector<64x8xf32>
    %198 = arith.addf %190, %197 : vector<64x8xf32>
    %c0_177 = arith.constant 0 : index
    %c0_178 = arith.constant 0 : index
    %199 = vector.load %arg5[%c0_177, %c0_178] : memref<1x8xf32, #tpu.memory_space<vmem>>, vector<1x8xf32>
    %200 = vector.broadcast %199 : vector<1x8xf32> to vector<64x8xf32>
    %201 = arith.addf %198, %200 : vector<64x8xf32>
    %cst_179 = arith.constant 0.000000e+00 : f32
    %202 = vector.broadcast %cst_179 : f32 to vector<64x8xf32>
    %203 = arith.maximumf %201, %202 : vector<64x8xf32>
    %204 = arith.truncf %203 : vector<64x8xf32> to vector<64x8xbf16>
    %205 = vector.shape_cast %204 : vector<64x8xbf16> to vector<8x8x8xbf16>
    %c0_180 = arith.constant 0 : index
    %206 = arith.index_cast %127 : i32 to index
    %c0_181 = arith.constant 0 : index
    %c0_182 = arith.constant 0 : index
    %207 = vector.load %arg6[%c0_180, %206, %c0_181, %c0_182] : memref<1x8x8x8xbf16, #tpu.memory_space<vmem>>, vector<1x8x8x8xbf16>
    %208 = vector.shape_cast %207 : vector<1x8x8x8xbf16> to vector<8x8x8xbf16>
    %209 = vector.shape_cast %205 : vector<8x8x8xbf16> to vector<1x8x8x8xbf16>
    tpu.vector_store %arg6[%c0_180, %206, %c0_181, %c0_182], %209 {strides = array<i32>} : memref<1x8x8x8xbf16, #tpu.memory_space<vmem>>, vector<1x8x8x8xbf16>,
    %c1_i32_183 = arith.constant 1 : i32
    return
  }
  func.func @transform_0(%arg0: i32) -> (i32, i32, i32, i32, i32) {
    %c0_i32 = arith.constant 0 : i32
    %c0_i32_0 = arith.constant 0 : i32
    %c0_i32_1 = arith.constant 0 : i32
    %c0_i32_2 = arith.constant 0 : i32
    %c0_i32_3 = arith.constant 0 : i32
    return %arg0, %c0_i32, %c0_i32_0, %c0_i32_1, %c0_i32_2 : i32, i32, i32, i32, i32
  }
  func.func @transform_1(%arg0: i32) -> (i32, i32, i32) {
    %c0_i32 = arith.constant 0 : i32
    %c0_i32_0 = arith.constant 0 : i32
    %c0_i32_1 = arith.constant 0 : i32
    %c0_i32_2 = arith.constant 0 : i32
    return %c0_i32, %c0_i32_0, %c0_i32_1 : i32, i32, i32
  }
  func.func @transform_2(%arg0: i32) -> (i32, i32) {
    %c0_i32 = arith.constant 0 : i32
    %c0_i32_0 = arith.constant 0 : i32
    %c0_i32_1 = arith.constant 0 : i32
    return %c0_i32, %c0_i32_0 : i32, i32
  }
  func.func @transform_3(%arg0: i32) -> (i32, i32, i32) {
    %c0_i32 = arith.constant 0 : i32
    %c0_i32_0 = arith.constant 0 : i32
    %c0_i32_1 = arith.constant 0 : i32
    %c0_i32_2 = arith.constant 0 : i32
    return %c0_i32, %c0_i32_0, %c0_i32_1 : i32, i32, i32
  }
  func.func @transform_4(%arg0: i32) -> (i32, i32) {
    %c0_i32 = arith.constant 0 : i32
    %c0_i32_0 = arith.constant 0 : i32
    %c0_i32_1 = arith.constant 0 : i32
    return %c0_i32, %c0_i32_0 : i32, i32
  }
  func.func @transform_5(%arg0: i32) -> (i32, i32, i32, i32) {
    %c0_i32 = arith.constant 0 : i32
    %c0_i32_0 = arith.constant 0 : i32
    %c0_i32_1 = arith.constant 0 : i32
    %c0_i32_2 = arith.constant 0 : i32
    return %arg0, %c0_i32, %c0_i32_0, %c0_i32_1 : i32, i32, i32, i32
  }
}

</mosaic_0001>

<llo_original>
// kernel: down_forward.1
$region0: #{down_forward.1}
  #allocation0 [shape = 'u32[]', space=smem, size = 0x4, offset = 0x4, fixed_abs, tag = 'smem constant byte address 0x4 - core index']
  #allocation1 [shape = 'u32[72,128]{1,0:T(1,128)}', space=vmem, size = 0x9000, scoped, tag = 'internal scratch']
  #allocation2 [shape = 'bf16[10,24,4]{2,1,0:T(8,128)(2,1)}', space=vmem, size = 0xf000, scoped, tag = 'scratch operand']
  #allocation3 [shape = 'bf16[10,24,8]{2,1,0:T(8,128)(2,1)}', space=vmem, size = 0xf000, scoped, tag = 'scratch operand']
  %s0 = inlined_call_operand.vmem [shape: bf16[2,4,8,8,4], index: 0, kind: input, shape index: {}]
  %s1 = inlined_call_operand.vmem [shape: bf16[9,4,8], index: 1, kind: input, shape index: {}]
  %s2 = inlined_call_operand.vmem [shape: f32[1,8], index: 2, kind: input, shape index: {}]
  %s3 = inlined_call_operand.vmem [shape: bf16[9,8,8], index: 3, kind: input, shape index: {}]
  %s4 = inlined_call_operand.vmem [shape: f32[1,8], index: 4, kind: input, shape index: {}]
  %s5 = inlined_call_operand.vmem [shape: bf16[2,8,8,8], index: 5, kind: output, shape index: {}]
  %s6 = sld [smem:[#allocation0]]
  $region53: #{down_forward.1} parent=0
    _
  %s8 = ssub.s32 1, %s6
  %s9 = scalar_select 0, %s8, %s6
  loop: start=0, step=1, limit=4
  $region2: #{down_forward.1} parent=0 // loop_pre_header
    _
  $region3: #{down_forward.1} parent=0 // loop_header
    %s11 = sphi 0, %s15
    %p12 = scmp.ge.s32.totalorder %s11, 4
    %s21 = sphi 0, %s23
    %s24 = sphi 0, %s21
    %s25 = sphi 0, %s24
    %s41 = sphi 0, %s25
    %s45 = sphi 0, %s45
    %s47 = sphi 0, %s45
    %s48 = sphi 0, %s47
    %s62 = sphi 0, %s48
    %s66 = sphi 0, %s66
    %s68 = sphi 0, %s66
    %s69 = sphi 0, %s68
    %s83 = sphi 0, %s69
    %s87 = sphi 0, %s87
    %s89 = sphi 0, %s87
    %s90 = sphi 0, %s89
    %s104 = sphi 0, %s90
    %s108 = sphi 0, %s108
    %s110 = sphi 0, %s108
    %s111 = sphi 0, %s110
    %s125 = sphi 0, %s111
    %s131 = sphi 0, %s133
    %s134 = sphi 0, %s131
    %s135 = sphi 0, %s134
    %s151 = sphi 0, %s135
  $region4: #{down_forward.1} parent=0 // loop_header_branch
    %14 = sbr.rel (%p12) target = $region8
  $region5: #{down_forward.1} parent=0 // loop_body
    %s16 = ssub.s32 %s11, 1
    %s17 = ssub.s32 %s11, 2
    %s18 = sadd.s32 %s11, 1
    %s19 = ssub.s32 %s11, %s18
    %p20 = scmp.eq.s32.totalorder %s19, 0
    %s22 = sadd.s32 %s21, 1
    %s23 = scalar_select %p20, %s21, %s22
    %p26 = pneg %p20
    %p27 = scmp.eq.s32.totalorder %s11, 1
    %p28 = por %p26, %p27
    %p29 = scmp.ne.s32.totalorder %s21, %s24
    %p30 = scmp.eq.s32.totalorder %s11, 0
    %p31 = por %p29, %p30
    %p32 = scmp.ne.s32.totalorder %s21, %s24
    %p33 = scmp.eq.s32.totalorder %s16, 1
    %p34 = por %p32, %p33
    %p35 = scmp.ne.s32.totalorder %s24, %s25
    %p36 = scmp.eq.s32.totalorder %s16, 0
    %p37 = por %p35, %p36
    %p38 = scmp.ne.s32.totalorder %s24, %s25
    %p39 = scmp.eq.s32.totalorder %s17, 1
    %p40 = por %p38, %p39
    %p42 = scmp.ne.s32.totalorder %s25, %s41
    %p43 = scmp.eq.s32.totalorder %s17, 0
    %p44 = por %p42, %p43
    %s46 = sadd.s32 %s45, 1
    %p49 = scmp.eq.s32.totalorder %s11, 1
    %p50 = scmp.ne.s32.totalorder %s45, %s47
    %p51 = scmp.eq.s32.totalorder %s11, 0
    %p52 = por %p50, %p51
    %p53 = scmp.ne.s32.totalorder %s45, %s47
    %p54 = scmp.eq.s32.totalorder %s16, 1
    %p55 = por %p53, %p54
    %p56 = scmp.ne.s32.totalorder %s47, %s48
    %p57 = scmp.eq.s32.totalorder %s16, 0
    %p58 = por %p56, %p57
    %p59 = scmp.ne.s32.totalorder %s47, %s48
    %p60 = scmp.eq.s32.totalorder %s17, 1
    %p61 = por %p59, %p60
    %p63 = scmp.ne.s32.totalorder %s48, %s62
    %p64 = scmp.eq.s32.totalorder %s17, 0
    %p65 = por %p63, %p64
    %s67 = sadd.s32 %s66, 1
    %p70 = scmp.eq.s32.totalorder %s11, 1
    %p71 = scmp.ne.s32.totalorder %s66, %s68
    %p72 = scmp.eq.s32.totalorder %s11, 0
    %p73 = por %p71, %p72
    %p74 = scmp.ne.s32.totalorder %s66, %s68
    %p75 = scmp.eq.s32.totalorder %s16, 1
    %p76 = por %p74, %p75
    %p77 = scmp.ne.s32.totalorder %s68, %s69
    %p78 = scmp.eq.s32.totalorder %s16, 0
    %p79 = por %p77, %p78
    %p80 = scmp.ne.s32.totalorder %s68, %s69
    %p81 = scmp.eq.s32.totalorder %s17, 1
    %p82 = por %p80, %p81
    %p84 = scmp.ne.s32.totalorder %s69, %s83
    %p85 = scmp.eq.s32.totalorder %s17, 0
    %p86 = por %p84, %p85
    %s88 = sadd.s32 %s87, 1
    %p91 = scmp.eq.s32.totalorder %s11, 1
    %p92 = scmp.ne.s32.totalorder %s87, %s89
    %p93 = scmp.eq.s32.totalorder %s11, 0
    %p94 = por %p92, %p93
    %p95 = scmp.ne.s32.totalorder %s87, %s89
    %p96 = scmp.eq.s32.totalorder %s16, 1
    %p97 = por %p95, %p96
    %p98 = scmp.ne.s32.totalorder %s89, %s90
    %p99 = scmp.eq.s32.totalorder %s16, 0
    %p100 = por %p98, %p99
    %p101 = scmp.ne.s32.totalorder %s89, %s90
    %p102 = scmp.eq.s32.totalorder %s17, 1
    %p103 = por %p101, %p102
    %p105 = scmp.ne.s32.totalorder %s90, %s104
    %p106 = scmp.eq.s32.totalorder %s17, 0
    %p107 = por %p105, %p106
    %s109 = sadd.s32 %s108, 1
    %p112 = scmp.eq.s32.totalorder %s11, 1
    %p113 = scmp.ne.s32.totalorder %s108, %s110
    %p114 = scmp.eq.s32.totalorder %s11, 0
    %p115 = por %p113, %p114
    %p116 = scmp.ne.s32.totalorder %s108, %s110
    %p117 = scmp.eq.s32.totalorder %s16, 1
    %p118 = por %p116, %p117
    %p119 = scmp.ne.s32.totalorder %s110, %s111
    %p120 = scmp.eq.s32.totalorder %s16, 0
    %p121 = por %p119, %p120
    %p122 = scmp.ne.s32.totalorder %s110, %s111
    %p123 = scmp.eq.s32.totalorder %s17, 1
    %p124 = por %p122, %p123
    %p126 = scmp.ne.s32.totalorder %s111, %s125
    %p127 = scmp.eq.s32.totalorder %s17, 0
    %p128 = por %p126, %p127
    %s129 = ssub.s32 %s11, %s18
    %p130 = scmp.eq.s32.totalorder %s129, 0
    %s132 = sadd.s32 %s131, 1
    %s133 = scalar_select %p130, %s131, %s132
    %p136 = pneg %p130
    %p137 = scmp.eq.s32.totalorder %s11, 1
    %p138 = por %p136, %p137
    %p139 = scmp.ne.s32.totalorder %s131, %s134
    %p140 = scmp.eq.s32.totalorder %s11, 0
    %p141 = por %p139, %p140
    %p142 = scmp.ne.s32.totalorder %s131, %s134
    %p143 = scmp.eq.s32.totalorder %s16, 1
    %p144 = por %p142, %p143
    %p145 = scmp.ne.s32.totalorder %s134, %s135
    %p146 = scmp.eq.s32.totalorder %s16, 0
    %p147 = por %p145, %p146
    %p148 = scmp.ne.s32.totalorder %s134, %s135
    %p149 = scmp.eq.s32.totalorder %s17, 1
    %p150 = por %p148, %p149
    %p152 = scmp.ne.s32.totalorder %s135, %s151
    %p153 = scmp.eq.s32.totalorder %s17, 0
    %p154 = por %p152, %p153
    %p155 = scmp.le.s32.totalorder 1, %s11
    %p156 = scmp.lt.s32.totalorder %s11, 3
    %p157 = pnand %p155, %p156
    %p158 = pneg %p157
    // Predicated region
    $region9: #{down_forward.1} parent=5 // pred_check
      _
    $region10: #{down_forward.1} parent=5 // pred_check_branch
      %160 = sbr.rel (%p157) target = $region12
    $region11: #{down_forward.1} parent=5 // pred_region
      %s161 = ssub.s32 %s11, 1
      // Predicated region
      $region13: #{down_forward.1} parent=11 // pred_check
        %p162 = pneg %p58
      $region14: #{down_forward.1} parent=11 // pred_check_branch
        %164 = sbr.rel (%p162) target = $region16
      $region15: #{down_forward.1} parent=11 // pred_region
        _
      $region16: #{down_forward.1} parent=11 // pred_fallthru
        _
      // Predicated region
      $region17: #{down_forward.1} parent=11 // pred_check
        %p165 = pneg %p79
      $region18: #{down_forward.1} parent=11 // pred_check_branch
        %167 = sbr.rel (%p165) target = $region20
      $region19: #{down_forward.1} parent=11 // pred_region
        _
      $region20: #{down_forward.1} parent=11 // pred_fallthru
        _
      // Predicated region
      $region21: #{down_forward.1} parent=11 // pred_check
        %p168 = pneg %p100
      $region22: #{down_forward.1} parent=11 // pred_check_branch
        %170 = sbr.rel (%p168) target = $region24
      $region23: #{down_forward.1} parent=11 // pred_region
        _
      $region24: #{down_forward.1} parent=11 // pred_fallthru
        _
      // Predicated region
      $region25: #{down_forward.1} parent=11 // pred_check
        %p171 = pneg %p121
      $region26: #{down_forward.1} parent=11 // pred_check_branch
        %173 = sbr.rel (%p171) target = $region28
      $region27: #{down_forward.1} parent=11 // pred_region
        _
      $region28: #{down_forward.1} parent=11 // pred_fallthru
        _
    $region12: #{down_forward.1} parent=5 // pred_fallthru
      _
    %p174 = scmp.lt.s32.totalorder %s11, 2
    // Predicated region
    $region29: #{down_forward.1} parent=5 // pred_check
      %p175 = pneg %p174
    $region30: #{down_forward.1} parent=5 // pred_check_branch
      %177 = sbr.rel (%p175) target = $region32
    $region31: #{down_forward.1} parent=5 // pred_region
      // Predicated region
      $region33: #{down_forward.1} parent=31 // pred_check
        %p178 = pneg %p31
      $region34: #{down_forward.1} parent=31 // pred_check_branch
        %180 = sbr.rel (%p178) target = $region36
      $region35: #{down_forward.1} parent=31 // pred_region
        %p181 = scmp.lt.s32.totalorder %s11, 1
        %s182 = scalar_select %p181, %s11, 1
        %s183 = smul.addr %s182, 32
        %s184 = smul.addr %s183, 4
        %s185 = scalar_lea.vmem %s0, %s184
      $region36: #{down_forward.1} parent=31 // pred_fallthru
        _
    $region32: #{down_forward.1} parent=5 // pred_fallthru
      _
    %p186 = scmp.le.s32.totalorder 1, %s11
    %p187 = scmp.lt.s32.totalorder %s11, 3
    %p188 = pnand %p186, %p187
    %p189 = pneg %p188
    // Predicated region
    $region37: #{down_forward.1} parent=5 // pred_check
      _
    $region38: #{down_forward.1} parent=5 // pred_check_branch
      %191 = sbr.rel (%p188) target = $region40
    $region39: #{down_forward.1} parent=5 // pred_region
      %s192 = ssub.s32 %s11, 1
      %p193 = scmp.lt.s32.totalorder %s16, 1
      %s194 = scalar_select %p193, %s16, 1
      %s195 = smul.addr %s194, 32
      %s196 = smul.addr %s195, 4
      %s197 = scalar_lea.vmem %s0, %s196
      %p198 = pneg %p37
      %p199 = pneg %p34
      %p200 = pneg %p58
      %p201 = pneg %p55
      %p202 = pneg %p79
      %p203 = pneg %p76
      %p204 = pneg %p100
      %p205 = pneg %p97
      %p206 = pneg %p121
      %p207 = pneg %p118
      %p208 = pneg %p147
      %p209 = pneg %p144
      %p210 = scmp.lt.s32.totalorder %s16, 1
      %s211 = scalar_select %p210, %s16, 1
      %s212 = smul.addr %s211, 8
      %s213 = smul.addr %s212, 4
      %s214 = scalar_lea.vmem %s5, %s213
      %p215 = scmp.lt.s32.totalorder %s16, 1
      %s216 = scalar_select %p215, %s16, 1
      %s217 = smul.addr %s216, 32
      %s218 = smul.addr %s217, 4
      %s219 = scalar_lea.vmem %s0, %s218
      %p220 = scmp.lt.s32.totalorder %s16, 1
      %s221 = scalar_select %p220, %s16, 1
      %s222 = smul.addr %s221, 8
      %s223 = smul.addr %s222, 4
      %s224 = scalar_lea.vmem %s5, %s223
      %vm226 = vcmask 27648
      %227 = vst.msk [vmem:[#allocation2] sm:$0xf] %vm226, 0
      %228 = vst.msk [vmem:[#allocation2 + $0x4] sm:$0xf] %vm226, 0
      %229 = vst.msk [vmem:[#allocation2 + $0x8] sm:$0xf] %vm226, 0
      %s230 = scalar_lea.vmem [#allocation2], 108
      %231 = vst.msk [vmem:[%s230] sm:$0xf] %vm226, 0
      %232 = vst.msk [vmem:[%s230 + $0x4] sm:$0xf] %vm226, 0
      %233 = vst.msk [vmem:[%s230 + $0x8] sm:$0xf] %vm226, 0
      %s234 = scalar_lea.vmem [#allocation2], 12
      %235 = vst.msk [vmem:[%s234] sm:$0xf] %vm226, 0
      %236 = vst.msk [vmem:[%s234 + $0xc] sm:$0xf] %vm226, 0
      %237 = vst.msk [vmem:[%s234 + $0x18] sm:$0xf] %vm226, 0
      %238 = vst.msk [vmem:[%s234 + $0x24] sm:$0xf] %vm226, 0
      %239 = vst.msk [vmem:[%s234 + $0x30] sm:$0xf] %vm226, 0
      %240 = vst.msk [vmem:[%s234 + $0x3c] sm:$0xf] %vm226, 0
      %241 = vst.msk [vmem:[%s234 + $0x48] sm:$0xf] %vm226, 0
      %242 = vst.msk [vmem:[%s234 + $0x54] sm:$0xf] %vm226, 0
      %243 = vst.msk [vmem:[%s234 + $0x8] sm:$0xf] %vm226, 0
      %244 = vst.msk [vmem:[%s234 + $0x14] sm:$0xf] %vm226, 0
      %245 = vst.msk [vmem:[%s234 + $0x20] sm:$0xf] %vm226, 0
      %246 = vst.msk [vmem:[%s234 + $0x2c] sm:$0xf] %vm226, 0
      %247 = vst.msk [vmem:[%s234 + $0x38] sm:$0xf] %vm226, 0
      %248 = vst.msk [vmem:[%s234 + $0x44] sm:$0xf] %vm226, 0
      %249 = vst.msk [vmem:[%s234 + $0x50] sm:$0xf] %vm226, 0
      %250 = vst.msk [vmem:[%s234 + $0x5c] sm:$0xf] %vm226, 0
      %vm251 = vcmask 60416
      %252 = vst.msk [vmem:[#allocation3] sm:$0xf] %vm251, 0
      %253 = vst.msk [vmem:[#allocation3 + $0x4] sm:$0xf] %vm251, 0
      %254 = vst.msk [vmem:[#allocation3 + $0x8] sm:$0xf] %vm251, 0
      %s255 = scalar_lea.vmem [#allocation3], 108
      %256 = vst.msk [vmem:[%s255] sm:$0xf] %vm251, 0
      %257 = vst.msk [vmem:[%s255 + $0x4] sm:$0xf] %vm251, 0
      %258 = vst.msk [vmem:[%s255 + $0x8] sm:$0xf] %vm251, 0
      %s259 = scalar_lea.vmem [#allocation3], 12
      %260 = vst.msk [vmem:[%s259] sm:$0xf] %vm251, 0
      %261 = vst.msk [vmem:[%s259 + $0xc] sm:$0xf] %vm251, 0
      %262 = vst.msk [vmem:[%s259 + $0x18] sm:$0xf] %vm251, 0
      %263 = vst.msk [vmem:[%s259 + $0x24] sm:$0xf] %vm251, 0
      %264 = vst.msk [vmem:[%s259 + $0x30] sm:$0xf] %vm251, 0
      %265 = vst.msk [vmem:[%s259 + $0x3c] sm:$0xf] %vm251, 0
      %266 = vst.msk [vmem:[%s259 + $0x48] sm:$0xf] %vm251, 0
      %267 = vst.msk [vmem:[%s259 + $0x54] sm:$0xf] %vm251, 0
      %268 = vst.msk [vmem:[%s259 + $0x8] sm:$0xf] %vm251, 0
      %269 = vst.msk [vmem:[%s259 + $0x14] sm:$0xf] %vm251, 0
      %270 = vst.msk [vmem:[%s259 + $0x20] sm:$0xf] %vm251, 0
      %271 = vst.msk [vmem:[%s259 + $0x2c] sm:$0xf] %vm251, 0
      %272 = vst.msk [vmem:[%s259 + $0x38] sm:$0xf] %vm251, 0
      %273 = vst.msk [vmem:[%s259 + $0x44] sm:$0xf] %vm251, 0
      %274 = vst.msk [vmem:[%s259 + $0x50] sm:$0xf] %vm251, 0
      %275 = vst.msk [vmem:[%s259 + $0x5c] sm:$0xf] %vm251, 0
      %v276 = vld [vmem:[%s219] sm:$0xf]
      %v277 = vld [vmem:[%s219 + $0x4] sm:$0xf]
      %v278 = vld [vmem:[%s219 + $0x8] sm:$0xf]
      %v279 = vld [vmem:[%s219 + $0xc] sm:$0xf]
      %v280 = vld [vmem:[%s219 + $0x10] sm:$0xf]
      %v281 = vld [vmem:[%s219 + $0x14] sm:$0xf]
      %v282 = vld [vmem:[%s219 + $0x18] sm:$0xf]
      %v283 = vld [vmem:[%s219 + $0x1c] sm:$0xf]
      %s284 = scalar_lea.vmem %s219, 32
      %v285 = vld [vmem:[%s284] sm:$0xf]
      %v286 = vld [vmem:[%s284 + $0x4] sm:$0xf]
      %v287 = vld [vmem:[%s284 + $0x8] sm:$0xf]
      %v288 = vld [vmem:[%s284 + $0xc] sm:$0xf]
      %v289 = vld [vmem:[%s284 + $0x10] sm:$0xf]
      %v290 = vld [vmem:[%s284 + $0x14] sm:$0xf]
      %v291 = vld [vmem:[%s284 + $0x18] sm:$0xf]
      %v292 = vld [vmem:[%s284 + $0x1c] sm:$0xf]
      %v293 = vunpack.c.l.bf16 %v276
      %v294 = vunpack.c.l.bf16 %v277
      %v295 = vunpack.c.l.bf16 %v278
      %v296 = vunpack.c.l.bf16 %v279
      %v297 = vunpack.c.l.bf16 %v280
      %v298 = vunpack.c.l.bf16 %v281
      %v299 = vunpack.c.l.bf16 %v282
      %v300 = vunpack.c.l.bf16 %v283
      %v301 = vunpack.c.l.bf16 %v285
      %v302 = vunpack.c.l.bf16 %v286
      %v303 = vunpack.c.l.bf16 %v287
      %v304 = vunpack.c.l.bf16 %v288
      %v305 = vunpack.c.l.bf16 %v289
      %v306 = vunpack.c.l.bf16 %v290
      %v307 = vunpack.c.l.bf16 %v291
      %v308 = vunpack.c.l.bf16 %v292
      %v309 = vmax.f32 %v293, %v301
      %v310 = vmax.f32 %v294, %v302
      %v311 = vmax.f32 %v295, %v303
      %v312 = vmax.f32 %v296, %v304
      %v313 = vmax.f32 %v297, %v305
      %v314 = vmax.f32 %v298, %v306
      %v315 = vmax.f32 %v299, %v307
      %v316 = vmax.f32 %v300, %v308
      %v317 = vpack.c.bf16 %v309, %v309
      %v318 = vpack.c.bf16 %v310, %v310
      %v319 = vpack.c.bf16 %v311, %v311
      %v320 = vpack.c.bf16 %v312, %v312
      %v321 = vpack.c.bf16 %v313, %v313
      %v322 = vpack.c.bf16 %v314, %v314
      %v323 = vpack.c.bf16 %v315, %v315
      %v324 = vpack.c.bf16 %v316, %v316
      %s325 = scalar_lea.vmem %s219, 64
      %v326 = vld [vmem:[%s325] sm:$0xf]
      %v327 = vld [vmem:[%s325 + $0x4] sm:$0xf]
      %v328 = vld [vmem:[%s325 + $0x8] sm:$0xf]
      %v329 = vld [vmem:[%s325 + $0xc] sm:$0xf]
      %v330 = vld [vmem:[%s325 + $0x10] sm:$0xf]
      %v331 = vld [vmem:[%s325 + $0x14] sm:$0xf]
      %v332 = vld [vmem:[%s325 + $0x18] sm:$0xf]
      %v333 = vld [vmem:[%s325 + $0x1c] sm:$0xf]
      %v334 = vunpack.c.l.bf16 %v317
      %v335 = vunpack.c.l.bf16 %v318
      %v336 = vunpack.c.l.bf16 %v319
      %v337 = vunpack.c.l.bf16 %v320
      %v338 = vunpack.c.l.bf16 %v321
      %v339 = vunpack.c.l.bf16 %v322
      %v340 = vunpack.c.l.bf16 %v323
      %v341 = vunpack.c.l.bf16 %v324
      %v342 = vunpack.c.l.bf16 %v326
      %v343 = vunpack.c.l.bf16 %v327
      %v344 = vunpack.c.l.bf16 %v328
      %v345 = vunpack.c.l.bf16 %v329
      %v346 = vunpack.c.l.bf16 %v330
      %v347 = vunpack.c.l.bf16 %v331
      %v348 = vunpack.c.l.bf16 %v332
      %v349 = vunpack.c.l.bf16 %v333
      %v350 = vmax.f32 %v334, %v342
      %v351 = vmax.f32 %v335, %v343
      %v352 = vmax.f32 %v336, %v344
      %v353 = vmax.f32 %v337, %v345
      %v354 = vmax.f32 %v338, %v346
      %v355 = vmax.f32 %v339, %v347
      %v356 = vmax.f32 %v340, %v348
      %v357 = vmax.f32 %v341, %v349
      %v358 = vpack.c.bf16 %v350, %v350
      %v359 = vpack.c.bf16 %v351, %v351
      %v360 = vpack.c.bf16 %v352, %v352
      %v361 = vpack.c.bf16 %v353, %v353
      %v362 = vpack.c.bf16 %v354, %v354
      %v363 = vpack.c.bf16 %v355, %v355
      %v364 = vpack.c.bf16 %v356, %v356
      %v365 = vpack.c.bf16 %v357, %v357
      %s366 = scalar_lea.vmem %s219, 96
      %v367 = vld [vmem:[%s366] sm:$0xf]
      %v368 = vld [vmem:[%s366 + $0x4] sm:$0xf]
      %v369 = vld [vmem:[%s366 + $0x8] sm:$0xf]
      %v370 = vld [vmem:[%s366 + $0xc] sm:$0xf]
      %v371 = vld [vmem:[%s366 + $0x10] sm:$0xf]
      %v372 = vld [vmem:[%s366 + $0x14] sm:$0xf]
      %v373 = vld [vmem:[%s366 + $0x18] sm:$0xf]
      %v374 = vld [vmem:[%s366 + $0x1c] sm:$0xf]
      %v375 = vunpack.c.l.bf16 %v358
      %v376 = vunpack.c.l.bf16 %v359
      %v377 = vunpack.c.l.bf16 %v360
      %v378 = vunpack.c.l.bf16 %v361
      %v379 = vunpack.c.l.bf16 %v362
      %v380 = vunpack.c.l.bf16 %v363
      %v381 = vunpack.c.l.bf16 %v364
      %v382 = vunpack.c.l.bf16 %v365
      %v383 = vunpack.c.l.bf16 %v367
      %v384 = vunpack.c.l.bf16 %v368
      %v385 = vunpack.c.l.bf16 %v369
      %v386 = vunpack.c.l.bf16 %v370
      %v387 = vunpack.c.l.bf16 %v371
      %v388 = vunpack.c.l.bf16 %v372
      %v389 = vunpack.c.l.bf16 %v373
      %v390 = vunpack.c.l.bf16 %v374
      %v391 = vmax.f32 %v375, %v383
      %v392 = vmax.f32 %v376, %v384
      %v393 = vmax.f32 %v377, %v385
      %v394 = vmax.f32 %v378, %v386
      %v395 = vmax.f32 %v379, %v387
      %v396 = vmax.f32 %v380, %v388
      %v397 = vmax.f32 %v381, %v389
      %v398 = vmax.f32 %v382, %v390
      %v399 = vpack.c.bf16 %v391, %v391
      %v400 = vpack.c.bf16 %v392, %v392
      %v401 = vpack.c.bf16 %v393, %v393
      %v402 = vpack.c.bf16 %v394, %v394
      %v403 = vpack.c.bf16 %v395, %v395
      %v404 = vpack.c.bf16 %v396, %v396
      %v405 = vpack.c.bf16 %v397, %v397
      %v406 = vpack.c.bf16 %v398, %v398
      %407 = vst.msk [vmem:[%s234 + $0x4] sm:$0xf] %vm226, %v399
      %408 = vst.msk [vmem:[%s234 + $0x10] sm:$0xf] %vm226, %v400
      %409 = vst.msk [vmem:[%s234 + $0x1c] sm:$0xf] %vm226, %v401
      %410 = vst.msk [vmem:[%s234 + $0x28] sm:$0xf] %vm226, %v402
      %411 = vst.msk [vmem:[%s234 + $0x34] sm:$0xf] %vm226, %v403
      %412 = vst.msk [vmem:[%s234 + $0x40] sm:$0xf] %vm226, %v404
      %413 = vst.msk [vmem:[%s234 + $0x4c] sm:$0xf] %vm226, %v405
      %414 = vst.msk [vmem:[%s234 + $0x58] sm:$0xf] %vm226, %v406
      %v415 = vld [vmem:[#allocation2] sm:$0x8]
      %v416 = vld [vmem:[#allocation2 + $0x4] sm:$0xf]
      %v417 = vld [vmem:[#allocation2 + $0xc] sm:$0x8]
      %v418 = vld [vmem:[#allocation2 + $0x10] sm:$0xf]
      %v419 = vld [vmem:[#allocation2 + $0x18] sm:$0x8]
      %v420 = vld [vmem:[#allocation2 + $0x1c] sm:$0xf]
      %v421 = vld [vmem:[#allocation2 + $0x24] sm:$0x8]
      %v422 = vld [vmem:[#allocation2 + $0x28] sm:$0xf]
      %v423 = vld [vmem:[#allocation2 + $0x30] sm:$0x8]
      %v424 = vld [vmem:[#allocation2 + $0x34] sm:$0xf]
      %v425 = vld [vmem:[#allocation2 + $0x3c] sm:$0x8]
      %v426 = vld [vmem:[#allocation2 + $0x40] sm:$0xf]
      %v427 = vld [vmem:[#allocation2 + $0x48] sm:$0x8]
      %v428 = vld [vmem:[#allocation2 + $0x4c] sm:$0xf]
      %v429 = vld [vmem:[#allocation2 + $0x54] sm:$0x8]
      %v430 = vld [vmem:[#allocation2 + $0x58] sm:$0xf]
      %vm431 = vsmask.f32 256
      %vm432 = vsmask.f32 4368
      %vm433 = vmor %vm431, %vm432
      %v435 = vshrl.u32 %v415, 16
      %v437 = vrot.slane %v435, 7
      %v438 = vrot.slane %v437, 4
      %v440 = vshrl.u32 %v416, 16
      %v442 = vrot.slane %v440, 7
      %v443 = vshll.u32 %v416, 16
      %v445 = vor.u32 %v442, %v443
      %v446 = vsel %vm433, %v438, %v445
      %v448 = vshrl.u32 %v417, 16
      %v450 = vrot.slane %v448, 7
      %v451 = vrot.slane %v450, 4
      %v453 = vshrl.u32 %v418, 16
      %v455 = vrot.slane %v453, 7
      %v456 = vshll.u32 %v418, 16
      %v458 = vor.u32 %v455, %v456
      %v459 = vsel %vm433, %v451, %v458
      %v461 = vshrl.u32 %v419, 16
      %v463 = vrot.slane %v461, 7
      %v464 = vrot.slane %v463, 4
      %v466 = vshrl.u32 %v420, 16
      %v468 = vrot.slane %v466, 7
      %v469 = vshll.u32 %v420, 16
      %v471 = vor.u32 %v468, %v469
      %v472 = vsel %vm433, %v464, %v471
      %v474 = vshrl.u32 %v421, 16
      %v476 = vrot.slane %v474, 7
      %v477 = vrot.slane %v476, 4
      %v479 = vshrl.u32 %v422, 16
      %v481 = vrot.slane %v479, 7
      %v482 = vshll.u32 %v422, 16
      %v484 = vor.u32 %v481, %v482
      %v485 = vsel %vm433, %v477, %v484
      %v487 = vshrl.u32 %v423, 16
      %v489 = vrot.slane %v487, 7
      %v490 = vrot.slane %v489, 4
      %v492 = vshrl.u32 %v424, 16
      %v494 = vrot.slane %v492, 7
      %v495 = vshll.u32 %v424, 16
      %v497 = vor.u32 %v494, %v495
      %v498 = vsel %vm433, %v490, %v497
      %v500 = vshrl.u32 %v425, 16
      %v502 = vrot.slane %v500, 7
      %v503 = vrot.slane %v502, 4
      %v505 = vshrl.u32 %v426, 16
      %v507 = vrot.slane %v505, 7
      %v508 = vshll.u32 %v426, 16
      %v510 = vor.u32 %v507, %v508
      %v511 = vsel %vm433, %v503, %v510
      %v513 = vshrl.u32 %v427, 16
      %v515 = vrot.slane %v513, 7
      %v516 = vrot.slane %v515, 4
      %v518 = vshrl.u32 %v428, 16
      %v520 = vrot.slane %v518, 7
      %v521 = vshll.u32 %v428, 16
      %v523 = vor.u32 %v520, %v521
      %v524 = vsel %vm433, %v516, %v523
      %v526 = vshrl.u32 %v429, 16
      %v528 = vrot.slane %v526, 7
      %v529 = vrot.slane %v528, 4
      %v531 = vshrl.u32 %v430, 16
      %v533 = vrot.slane %v531, 7
      %v534 = vshll.u32 %v430, 16
      %v536 = vor.u32 %v533, %v534
      %v537 = vsel %vm433, %v529, %v536
      %v538 = vld [vmem:[%s1] sm:$0x3]
      %s539 = scalar_lea.vmem %s1, 2
      %v540 = vld [vmem:[%s539] sm:$0x3]
      %v549 = vunpack.c.l.b16 %v416
      %v550 = vunpack.c.l.b16 %v418
      %v551 = vunpack.c.l.b16 %v420
      %v552 = vunpack.c.l.b16 %v422
      %v553 = vunpack.c.l.b16 %v424
      %v554 = vunpack.c.l.b16 %v426
      %v555 = vunpack.c.l.b16 %v428
      %v556 = vunpack.c.l.b16 %v430
      %v557 = vpack.c.b16 %v550, %v549
      %v558 = vpack.c.b16 %v552, %v551
      %v559 = vpack.c.b16 %v554, %v553
      %v560 = vpack.c.b16 %v556, %v555
      %vm561 = vcmask 31744
      %v563 = vsel %vm561, %v557, 0
      %v566 = vsel %vm561, %v558, 0
      %v569 = vsel %vm561, %v559, 0
      %v572 = vsel %vm561, %v560, 0
      %vm574 = vcmask 1041408
      %v576 = vsel %vm574, %v540, 0
      %578 = vmatpush.bf16.msra.mxu0 0
      %579 = vmatpush.bf16.msra.mxu0 0
      %580 = vmatpush.bf16.msra.mxu0 0
      %581 = vmatpush.bf16.msra.mxu0 0
      %582 = vmatpush.bf16.msra.mxu0 0
      %583 = vmatpush.bf16.msra.mxu0 0
      %584 = vmatpush.bf16.msra.mxu0 0
      %585 = vmatpush.bf16.msra.mxu0 %v576
      %586 = vmatmul.bf16.gmra.mxu0 %v563
      %v587 = vpop.f32.mrf.mxu0
      %v588 = vadd.f32 0.0, %v587
      %v589 = vpop.f32.mrf.mxu0
      %v590 = vadd.f32 0.0, %v589
      %591 = vmatmul.bf16.gmra.mxu0 %v566
      %v592 = vpop.f32.mrf.mxu0
      %v593 = vadd.f32 0.0, %v592
      %v594 = vpop.f32.mrf.mxu0
      %v595 = vadd.f32 0.0, %v594
      %596 = vmatmul.bf16.gmra.mxu0 %v569
      %v597 = vpop.f32.mrf.mxu0
      %v598 = vadd.f32 0.0, %v597
      %v599 = vpop.f32.mrf.mxu0
      %v600 = vadd.f32 0.0, %v599
      %601 = vmatmul.bf16.gmra.mxu0 %v572
      %v602 = vpop.f32.mrf.mxu0
      %v603 = vadd.f32 0.0, %v602
      %v604 = vpop.f32.mrf.mxu0
      %v605 = vadd.f32 0.0, %v604
      %606 = vdwg.mxu0
      %v607 = vunpack.c.l.b16 %v446
      %v608 = vunpack.c.l.b16 %v459
      %v609 = vunpack.c.l.b16 %v472
      %v610 = vunpack.c.l.b16 %v485
      %v611 = vunpack.c.l.b16 %v498
      %v612 = vunpack.c.l.b16 %v511
      %v613 = vunpack.c.l.b16 %v524
      %v614 = vunpack.c.l.b16 %v537
      %v615 = vpack.c.b16 %v608, %v607
      %v616 = vpack.c.b16 %v610, %v609
      %v617 = vpack.c.b16 %v612, %v611
      %v618 = vpack.c.b16 %v614, %v613
      %v620 = vsel %vm561, %v615, 0
      %v623 = vsel %vm561, %v616, 0
      %v626 = vsel %vm561, %v617, 0
      %v629 = vsel %vm561, %v618, 0
      %v632 = vsel %vm574, %v538, 0
      %634 = vmatpush.bf16.msra.mxu0 0
      %635 = vmatpush.bf16.msra.mxu0 0
      %636 = vmatpush.bf16.msra.mxu0 0
      %637 = vmatpush.bf16.msra.mxu0 0
      %638 = vmatpush.bf16.msra.mxu0 0
      %639 = vmatpush.bf16.msra.mxu0 0
      %640 = vmatpush.bf16.msra.mxu0 0
      %641 = vmatpush.bf16.msra.mxu0 %v632
      %642 = vmatmul.bf16.gmra.mxu0 %v620
      %v643 = vpop.f32.mrf.mxu0
      %v644 = vadd.f32 %v588, %v643
      %v645 = vpop.f32.mrf.mxu0
      %v646 = vadd.f32 %v590, %v645
      %647 = vmatmul.bf16.gmra.mxu0 %v623
      %v648 = vpop.f32.mrf.mxu0
      %v649 = vadd.f32 %v593, %v648
      %v650 = vpop.f32.mrf.mxu0
      %v651 = vadd.f32 %v595, %v650
      %652 = vmatmul.bf16.gmra.mxu0 %v626
      %v653 = vpop.f32.mrf.mxu0
      %v654 = vadd.f32 %v598, %v653
      %v655 = vpop.f32.mrf.mxu0
      %v656 = vadd.f32 %v600, %v655
      %657 = vmatmul.bf16.gmra.mxu0 %v629
      %v658 = vpop.f32.mrf.mxu0
      %v659 = vadd.f32 %v603, %v658
      %v660 = vpop.f32.mrf.mxu0
      %v661 = vadd.f32 %v605, %v660
      %662 = vdwg.mxu0
      %v663 = vld [vmem:[#allocation2 + $0x4] sm:$0xf]
      %v664 = vld [vmem:[#allocation2 + $0x8] sm:$0x1]
      %v665 = vld [vmem:[#allocation2 + $0x10] sm:$0xf]
      %v666 = vld [vmem:[#allocation2 + $0x14] sm:$0x1]
      %v667 = vld [vmem:[#allocation2 + $0x1c] sm:$0xf]
      %v668 = vld [vmem:[#allocation2 + $0x20] sm:$0x1]
      %v669 = vld [vmem:[#allocation2 + $0x28] sm:$0xf]
      %v670 = vld [vmem:[#allocation2 + $0x2c] sm:$0x1]
      %v671 = vld [vmem:[#allocation2 + $0x34] sm:$0xf]
      %v672 = vld [vmem:[#allocation2 + $0x38] sm:$0x1]
      %v673 = vld [vmem:[#allocation2 + $0x40] sm:$0xf]
      %v674 = vld [vmem:[#allocation2 + $0x44] sm:$0x1]
      %v675 = vld [vmem:[#allocation2 + $0x4c] sm:$0xf]
      %v676 = vld [vmem:[#allocation2 + $0x50] sm:$0x1]
      %v677 = vld [vmem:[#allocation2 + $0x58] sm:$0xf]
      %v678 = vld [vmem:[#allocation2 + $0x5c] sm:$0x1]
      %vm679 = vsmask.f32 3328
      %vm680 = vsmask.f32 7440
      %vm681 = vmor %vm679, %vm680
      %v683 = vshrl.u32 %v663, 16
      %v685 = vrot.slane %v683, 4
      %v686 = vshll.u32 %v663, 16
      %v688 = vrot.slane %v686, 5
      %v689 = vor.u32 %v685, %v688
      %v690 = vrot.slane %v689, 4
      %v692 = vshll.u32 %v664, 16
      %v694 = vrot.slane %v692, 5
      %v695 = vsel %vm681, %v690, %v694
      %v697 = vshrl.u32 %v665, 16
      %v699 = vrot.slane %v697, 4
      %v700 = vshll.u32 %v665, 16
      %v702 = vrot.slane %v700, 5
      %v703 = vor.u32 %v699, %v702
      %v704 = vrot.slane %v703, 4
      %v706 = vshll.u32 %v666, 16
      %v708 = vrot.slane %v706, 5
      %v709 = vsel %vm681, %v704, %v708
      %v711 = vshrl.u32 %v667, 16
      %v713 = vrot.slane %v711, 4
      %v714 = vshll.u32 %v667, 16
      %v716 = vrot.slane %v714, 5
      %v717 = vor.u32 %v713, %v716
      %v718 = vrot.slane %v717, 4
      %v720 = vshll.u32 %v668, 16
      %v722 = vrot.slane %v720, 5
      %v723 = vsel %vm681, %v718, %v722
      %v725 = vshrl.u32 %v669, 16
      %v727 = vrot.slane %v725, 4
      %v728 = vshll.u32 %v669, 16
      %v730 = vrot.slane %v728, 5
      %v731 = vor.u32 %v727, %v730
      %v732 = vrot.slane %v731, 4
      %v734 = vshll.u32 %v670, 16
      %v736 = vrot.slane %v734, 5
      %v737 = vsel %vm681, %v732, %v736
      %v739 = vshrl.u32 %v671, 16
      %v741 = vrot.slane %v739, 4
      %v742 = vshll.u32 %v671, 16
      %v744 = vrot.slane %v742, 5
      %v745 = vor.u32 %v741, %v744
      %v746 = vrot.slane %v745, 4
      %v748 = vshll.u32 %v672, 16
      %v750 = vrot.slane %v748, 5
      %v751 = vsel %vm681, %v746, %v750
      %v753 = vshrl.u32 %v673, 16
      %v755 = vrot.slane %v753, 4
      %v756 = vshll.u32 %v673, 16
      %v758 = vrot.slane %v756, 5
      %v759 = vor.u32 %v755, %v758
      %v760 = vrot.slane %v759, 4
      %v762 = vshll.u32 %v674, 16
      %v764 = vrot.slane %v762, 5
      %v765 = vsel %vm681, %v760, %v764
      %v767 = vshrl.u32 %v675, 16
      %v769 = vrot.slane %v767, 4
      %v770 = vshll.u32 %v675, 16
      %v772 = vrot.slane %v770, 5
      %v773 = vor.u32 %v769, %v772
      %v774 = vrot.slane %v773, 4
      %v776 = vshll.u32 %v676, 16
      %v778 = vrot.slane %v776, 5
      %v779 = vsel %vm681, %v774, %v778
      %v781 = vshrl.u32 %v677, 16
      %v783 = vrot.slane %v781, 4
      %v784 = vshll.u32 %v677, 16
      %v786 = vrot.slane %v784, 5
      %v787 = vor.u32 %v783, %v786
      %v788 = vrot.slane %v787, 4
      %v790 = vshll.u32 %v678, 16
      %v792 = vrot.slane %v790, 5
      %v793 = vsel %vm681, %v788, %v792
      %s794 = scalar_lea.vmem %s1, 4
      %v795 = vld [vmem:[%s794] sm:$0x3]
      %v796 = vunpack.c.l.b16 %v695
      %v797 = vunpack.c.l.b16 %v709
      %v798 = vunpack.c.l.b16 %v723
      %v799 = vunpack.c.l.b16 %v737
      %v800 = vunpack.c.l.b16 %v751
      %v801 = vunpack.c.l.b16 %v765
      %v802 = vunpack.c.l.b16 %v779
      %v803 = vunpack.c.l.b16 %v793
      %v804 = vpack.c.b16 %v797, %v796
      %v805 = vpack.c.b16 %v799, %v798
      %v806 = vpack.c.b16 %v801, %v800
      %v807 = vpack.c.b16 %v803, %v802
      %v809 = vsel %vm561, %v804, 0
      %v812 = vsel %vm561, %v805, 0
      %v815 = vsel %vm561, %v806, 0
      %v818 = vsel %vm561, %v807, 0
      %v821 = vsel %vm574, %v795, 0
      %823 = vmatpush.bf16.msra.mxu0 0
      %824 = vmatpush.bf16.msra.mxu0 0
      %825 = vmatpush.bf16.msra.mxu0 0
      %826 = vmatpush.bf16.msra.mxu0 0
      %827 = vmatpush.bf16.msra.mxu0 0
      %828 = vmatpush.bf16.msra.mxu0 0
      %829 = vmatpush.bf16.msra.mxu0 0
      %830 = vmatpush.bf16.msra.mxu0 %v821
      %831 = vmatmul.bf16.gmra.mxu0 %v809
      %v832 = vpop.f32.mrf.mxu0
      %v833 = vadd.f32 0.0, %v832
      %v834 = vpop.f32.mrf.mxu0
      %v835 = vadd.f32 0.0, %v834
      %836 = vmatmul.bf16.gmra.mxu0 %v812
      %v837 = vpop.f32.mrf.mxu0
      %v838 = vadd.f32 0.0, %v837
      %v839 = vpop.f32.mrf.mxu0
      %v840 = vadd.f32 0.0, %v839
      %841 = vmatmul.bf16.gmra.mxu0 %v815
      %v842 = vpop.f32.mrf.mxu0
      %v843 = vadd.f32 0.0, %v842
      %v844 = vpop.f32.mrf.mxu0
      %v845 = vadd.f32 0.0, %v844
      %846 = vmatmul.bf16.gmra.mxu0 %v818
      %v847 = vpop.f32.mrf.mxu0
      %v848 = vadd.f32 0.0, %v847
      %v849 = vpop.f32.mrf.mxu0
      %v850 = vadd.f32 0.0, %v849
      %851 = vdwg.mxu0
      %v852 = vadd.f32 %v644, %v833
      %v853 = vadd.f32 %v646, %v835
      %v854 = vadd.f32 %v649, %v838
      %v855 = vadd.f32 %v651, %v840
      %v856 = vadd.f32 %v654, %v843
      %v857 = vadd.f32 %v656, %v845
      %v858 = vadd.f32 %v659, %v848
      %v859 = vadd.f32 %v661, %v850
      %v860 = vld [vmem:[%s234] sm:$0x8]
      %v861 = vld [vmem:[%s234 + $0x4] sm:$0xf]
      %v862 = vld [vmem:[%s234 + $0xc] sm:$0x8]
      %v863 = vld [vmem:[%s234 + $0x10] sm:$0xf]
      %v864 = vld [vmem:[%s234 + $0x18] sm:$0x8]
      %v865 = vld [vmem:[%s234 + $0x1c] sm:$0xf]
      %v866 = vld [vmem:[%s234 + $0x24] sm:$0x8]
      %v867 = vld [vmem:[%s234 + $0x28] sm:$0xf]
      %v868 = vld [vmem:[%s234 + $0x30] sm:$0x8]
      %v869 = vld [vmem:[%s234 + $0x34] sm:$0xf]
      %v870 = vld [vmem:[%s234 + $0x3c] sm:$0x8]
      %v871 = vld [vmem:[%s234 + $0x40] sm:$0xf]
      %v872 = vld [vmem:[%s234 + $0x48] sm:$0x8]
      %v873 = vld [vmem:[%s234 + $0x4c] sm:$0xf]
      %v874 = vld [vmem:[%s234 + $0x54] sm:$0x8]
      %v875 = vld [vmem:[%s234 + $0x58] sm:$0xf]
      %v877 = vshrl.u32 %v860, 16
      %v879 = vrot.slane %v877, 7
      %v880 = vrot.slane %v879, 4
      %v882 = vshrl.u32 %v861, 16
      %v884 = vrot.slane %v882, 7
      %v885 = vshll.u32 %v861, 16
      %v887 = vor.u32 %v884, %v885
      %v888 = vsel %vm433, %v880, %v887
      %v890 = vshrl.u32 %v862, 16
      %v892 = vrot.slane %v890, 7
      %v893 = vrot.slane %v892, 4
      %v895 = vshrl.u32 %v863, 16
      %v897 = vrot.slane %v895, 7
      %v898 = vshll.u32 %v863, 16
      %v900 = vor.u32 %v897, %v898
      %v901 = vsel %vm433, %v893, %v900
      %v903 = vshrl.u32 %v864, 16
      %v905 = vrot.slane %v903, 7
      %v906 = vrot.slane %v905, 4
      %v908 = vshrl.u32 %v865, 16
      %v910 = vrot.slane %v908, 7
      %v911 = vshll.u32 %v865, 16
      %v913 = vor.u32 %v910, %v911
      %v914 = vsel %vm433, %v906, %v913
      %v916 = vshrl.u32 %v866, 16
      %v918 = vrot.slane %v916, 7
      %v919 = vrot.slane %v918, 4
      %v921 = vshrl.u32 %v867, 16
      %v923 = vrot.slane %v921, 7
      %v924 = vshll.u32 %v867, 16
      %v926 = vor.u32 %v923, %v924
      %v927 = vsel %vm433, %v919, %v926
      %v929 = vshrl.u32 %v868, 16
      %v931 = vrot.slane %v929, 7
      %v932 = vrot.slane %v931, 4
      %v934 = vshrl.u32 %v869, 16
      %v936 = vrot.slane %v934, 7
      %v937 = vshll.u32 %v869, 16
      %v939 = vor.u32 %v936, %v937
      %v940 = vsel %vm433, %v932, %v939
      %v942 = vshrl.u32 %v870, 16
      %v944 = vrot.slane %v942, 7
      %v945 = vrot.slane %v944, 4
      %v947 = vshrl.u32 %v871, 16
      %v949 = vrot.slane %v947, 7
      %v950 = vshll.u32 %v871, 16
      %v952 = vor.u32 %v949, %v950
      %v953 = vsel %vm433, %v945, %v952
      %v955 = vshrl.u32 %v872, 16
      %v957 = vrot.slane %v955, 7
      %v958 = vrot.slane %v957, 4
      %v960 = vshrl.u32 %v873, 16
      %v962 = vrot.slane %v960, 7
      %v963 = vshll.u32 %v873, 16
      %v965 = vor.u32 %v962, %v963
      %v966 = vsel %vm433, %v958, %v965
      %v968 = vshrl.u32 %v874, 16
      %v970 = vrot.slane %v968, 7
      %v971 = vrot.slane %v970, 4
      %v973 = vshrl.u32 %v875, 16
      %v975 = vrot.slane %v973, 7
      %v976 = vshll.u32 %v875, 16
      %v978 = vor.u32 %v975, %v976
      %v979 = vsel %vm433, %v971, %v978
      %s980 = scalar_lea.vmem %s1, 6
      %v981 = vld [vmem:[%s980] sm:$0x3]
      %v982 = vunpack.c.l.b16 %v888
      %v983 = vunpack.c.l.b16 %v901
      %v984 = vunpack.c.l.b16 %v914
      %v985 = vunpack.c.l.b16 %v927
      %v986 = vunpack.c.l.b16 %v940
      %v987 = vunpack.c.l.b16 %v953
      %v988 = vunpack.c.l.b16 %v966
      %v989 = vunpack.c.l.b16 %v979
      %v990 = vpack.c.b16 %v983, %v982
      %v991 = vpack.c.b16 %v985, %v984
      %v992 = vpack.c.b16 %v987, %v986
      %v993 = vpack.c.b16 %v989, %v988
      %v995 = vsel %vm561, %v990, 0
      %v998 = vsel %vm561, %v991, 0
      %v1001 = vsel %vm561, %v992, 0
      %v1004 = vsel %vm561, %v993, 0
      %v1007 = vsel %vm574, %v981, 0
      %1009 = vmatpush.bf16.msra.mxu0 0
      %1010 = vmatpush.bf16.msra.mxu0 0
      %1011 = vmatpush.bf16.msra.mxu0 0
      %1012 = vmatpush.bf16.msra.mxu0 0
      %1013 = vmatpush.bf16.msra.mxu0 0
      %1014 = vmatpush.bf16.msra.mxu0 0
      %1015 = vmatpush.bf16.msra.mxu0 0
      %1016 = vmatpush.bf16.msra.mxu0 %v1007
      %1017 = vmatmul.bf16.gmra.mxu0 %v995
      %v1018 = vpop.f32.mrf.mxu0
      %v1019 = vadd.f32 0.0, %v1018
      %v1020 = vpop.f32.mrf.mxu0
      %v1021 = vadd.f32 0.0, %v1020
      %1022 = vmatmul.bf16.gmra.mxu0 %v998
      %v1023 = vpop.f32.mrf.mxu0
      %v1024 = vadd.f32 0.0, %v1023
      %v1025 = vpop.f32.mrf.mxu0
      %v1026 = vadd.f32 0.0, %v1025
      %1027 = vmatmul.bf16.gmra.mxu0 %v1001
      %v1028 = vpop.f32.mrf.mxu0
      %v1029 = vadd.f32 0.0, %v1028
      %v1030 = vpop.f32.mrf.mxu0
      %v1031 = vadd.f32 0.0, %v1030
      %1032 = vmatmul.bf16.gmra.mxu0 %v1004
      %v1033 = vpop.f32.mrf.mxu0
      %v1034 = vadd.f32 0.0, %v1033
      %v1035 = vpop.f32.mrf.mxu0
      %v1036 = vadd.f32 0.0, %v1035
      %1037 = vdwg.mxu0
      %v1038 = vadd.f32 %v852, %v1019
      %v1039 = vadd.f32 %v853, %v1021
      %v1040 = vadd.f32 %v854, %v1024
      %v1041 = vadd.f32 %v855, %v1026
      %v1042 = vadd.f32 %v856, %v1029
      %v1043 = vadd.f32 %v857, %v1031
      %v1044 = vadd.f32 %v858, %v1034
      %v1045 = vadd.f32 %v859, %v1036
      %s1046 = scalar_lea.vmem %s1, 8
      %v1047 = vld [vmem:[%s1046] sm:$0x3]
      %v1056 = vunpack.c.l.b16 %v861
      %v1057 = vunpack.c.l.b16 %v863
      %v1058 = vunpack.c.l.b16 %v865
      %v1059 = vunpack.c.l.b16 %v867
      %v1060 = vunpack.c.l.b16 %v869
      %v1061 = vunpack.c.l.b16 %v871
      %v1062 = vunpack.c.l.b16 %v873
      %v1063 = vunpack.c.l.b16 %v875
      %v1064 = vpack.c.b16 %v1057, %v1056
      %v1065 = vpack.c.b16 %v1059, %v1058
      %v1066 = vpack.c.b16 %v1061, %v1060
      %v1067 = vpack.c.b16 %v1063, %v1062
      %v1069 = vsel %vm561, %v1064, 0
      %v1072 = vsel %vm561, %v1065, 0
      %v1075 = vsel %vm561, %v1066, 0
      %v1078 = vsel %vm561, %v1067, 0
      %v1081 = vsel %vm574, %v1047, 0
      %1083 = vmatpush.bf16.msra.mxu0 0
      %1084 = vmatpush.bf16.msra.mxu0 0
      %1085 = vmatpush.bf16.msra.mxu0 0
      %1086 = vmatpush.bf16.msra.mxu0 0
      %1087 = vmatpush.bf16.msra.mxu0 0
      %1088 = vmatpush.bf16.msra.mxu0 0
      %1089 = vmatpush.bf16.msra.mxu0 0
      %1090 = vmatpush.bf16.msra.mxu0 %v1081
      %1091 = vmatmul.bf16.gmra.mxu0 %v1069
      %v1092 = vpop.f32.mrf.mxu0
      %v1093 = vadd.f32 0.0, %v1092
      %v1094 = vpop.f32.mrf.mxu0
      %v1095 = vadd.f32 0.0, %v1094
      %1096 = vmatmul.bf16.gmra.mxu0 %v1072
      %v1097 = vpop.f32.mrf.mxu0
      %v1098 = vadd.f32 0.0, %v1097
      %v1099 = vpop.f32.mrf.mxu0
      %v1100 = vadd.f32 0.0, %v1099
      %1101 = vmatmul.bf16.gmra.mxu0 %v1075
      %v1102 = vpop.f32.mrf.mxu0
      %v1103 = vadd.f32 0.0, %v1102
      %v1104 = vpop.f32.mrf.mxu0
      %v1105 = vadd.f32 0.0, %v1104
      %1106 = vmatmul.bf16.gmra.mxu0 %v1078
      %v1107 = vpop.f32.mrf.mxu0
      %v1108 = vadd.f32 0.0, %v1107
      %v1109 = vpop.f32.mrf.mxu0
      %v1110 = vadd.f32 0.0, %v1109
      %1111 = vdwg.mxu0
      %v1112 = vadd.f32 %v1038, %v1093
      %v1113 = vadd.f32 %v1039, %v1095
      %v1114 = vadd.f32 %v1040, %v1098
      %v1115 = vadd.f32 %v1041, %v1100
      %v1116 = vadd.f32 %v1042, %v1103
      %v1117 = vadd.f32 %v1043, %v1105
      %v1118 = vadd.f32 %v1044, %v1108
      %v1119 = vadd.f32 %v1045, %v1110
      %v1120 = vld [vmem:[%s234 + $0x4] sm:$0xf]
      %v1121 = vld [vmem:[%s234 + $0x8] sm:$0x1]
      %v1122 = vld [vmem:[%s234 + $0x10] sm:$0xf]
      %v1123 = vld [vmem:[%s234 + $0x14] sm:$0x1]
      %v1124 = vld [vmem:[%s234 + $0x1c] sm:$0xf]
      %v1125 = vld [vmem:[%s234 + $0x20] sm:$0x1]
      %v1126 = vld [vmem:[%s234 + $0x28] sm:$0xf]
      %v1127 = vld [vmem:[%s234 + $0x2c] sm:$0x1]
      %v1128 = vld [vmem:[%s234 + $0x34] sm:$0xf]
      %v1129 = vld [vmem:[%s234 + $0x38] sm:$0x1]
      %v1130 = vld [vmem:[%s234 + $0x40] sm:$0xf]
      %v1131 = vld [vmem:[%s234 + $0x44] sm:$0x1]
      %v1132 = vld [vmem:[%s234 + $0x4c] sm:$0xf]
      %v1133 = vld [vmem:[%s234 + $0x50] sm:$0x1]
      %v1134 = vld [vmem:[%s234 + $0x58] sm:$0xf]
      %v1135 = vld [vmem:[%s234 + $0x5c] sm:$0x1]
      %v1137 = vshrl.u32 %v1120, 16
      %v1139 = vrot.slane %v1137, 4
      %v1140 = vshll.u32 %v1120, 16
      %v1142 = vrot.slane %v1140, 5
      %v1143 = vor.u32 %v1139, %v1142
      %v1144 = vrot.slane %v1143, 4
      %v1146 = vshll.u32 %v1121, 16
      %v1148 = vrot.slane %v1146, 5
      %v1149 = vsel %vm681, %v1144, %v1148
      %v1151 = vshrl.u32 %v1122, 16
      %v1153 = vrot.slane %v1151, 4
      %v1154 = vshll.u32 %v1122, 16
      %v1156 = vrot.slane %v1154, 5
      %v1157 = vor.u32 %v1153, %v1156
      %v1158 = vrot.slane %v1157, 4
      %v1160 = vshll.u32 %v1123, 16
      %v1162 = vrot.slane %v1160, 5
      %v1163 = vsel %vm681, %v1158, %v1162
      %v1165 = vshrl.u32 %v1124, 16
      %v1167 = vrot.slane %v1165, 4
      %v1168 = vshll.u32 %v1124, 16
      %v1170 = vrot.slane %v1168, 5
      %v1171 = vor.u32 %v1167, %v1170
      %v1172 = vrot.slane %v1171, 4
      %v1174 = vshll.u32 %v1125, 16
      %v1176 = vrot.slane %v1174, 5
      %v1177 = vsel %vm681, %v1172, %v1176
      %v1179 = vshrl.u32 %v1126, 16
      %v1181 = vrot.slane %v1179, 4
      %v1182 = vshll.u32 %v1126, 16
      %v1184 = vrot.slane %v1182, 5
      %v1185 = vor.u32 %v1181, %v1184
      %v1186 = vrot.slane %v1185, 4
      %v1188 = vshll.u32 %v1127, 16
      %v1190 = vrot.slane %v1188, 5
      %v1191 = vsel %vm681, %v1186, %v1190
      %v1193 = vshrl.u32 %v1128, 16
      %v1195 = vrot.slane %v1193, 4
      %v1196 = vshll.u32 %v1128, 16
      %v1198 = vrot.slane %v1196, 5
      %v1199 = vor.u32 %v1195, %v1198
      %v1200 = vrot.slane %v1199, 4
      %v1202 = vshll.u32 %v1129, 16
      %v1204 = vrot.slane %v1202, 5
      %v1205 = vsel %vm681, %v1200, %v1204
      %v1207 = vshrl.u32 %v1130, 16
      %v1209 = vrot.slane %v1207, 4
      %v1210 = vshll.u32 %v1130, 16
      %v1212 = vrot.slane %v1210, 5
      %v1213 = vor.u32 %v1209, %v1212
      %v1214 = vrot.slane %v1213, 4
      %v1216 = vshll.u32 %v1131, 16
      %v1218 = vrot.slane %v1216, 5
      %v1219 = vsel %vm681, %v1214, %v1218
      %v1221 = vshrl.u32 %v1132, 16
      %v1223 = vrot.slane %v1221, 4
      %v1224 = vshll.u32 %v1132, 16
      %v1226 = vrot.slane %v1224, 5
      %v1227 = vor.u32 %v1223, %v1226
      %v1228 = vrot.slane %v1227, 4
      %v1230 = vshll.u32 %v1133, 16
      %v1232 = vrot.slane %v1230, 5
      %v1233 = vsel %vm681, %v1228, %v1232
      %v1235 = vshrl.u32 %v1134, 16
      %v1237 = vrot.slane %v1235, 4
      %v1238 = vshll.u32 %v1134, 16
      %v1240 = vrot.slane %v1238, 5
      %v1241 = vor.u32 %v1237, %v1240
      %v1242 = vrot.slane %v1241, 4
      %v1244 = vshll.u32 %v1135, 16
      %v1246 = vrot.slane %v1244, 5
      %v1247 = vsel %vm681, %v1242, %v1246
      %s1248 = scalar_lea.vmem %s1, 10
      %v1249 = vld [vmem:[%s1248] sm:$0x3]
      %v1250 = vunpack.c.l.b16 %v1149
      %v1251 = vunpack.c.l.b16 %v1163
      %v1252 = vunpack.c.l.b16 %v1177
      %v1253 = vunpack.c.l.b16 %v1191
      %v1254 = vunpack.c.l.b16 %v1205
      %v1255 = vunpack.c.l.b16 %v1219
      %v1256 = vunpack.c.l.b16 %v1233
      %v1257 = vunpack.c.l.b16 %v1247
      %v1258 = vpack.c.b16 %v1251, %v1250
      %v1259 = vpack.c.b16 %v1253, %v1252
      %v1260 = vpack.c.b16 %v1255, %v1254
      %v1261 = vpack.c.b16 %v1257, %v1256
      %v1263 = vsel %vm561, %v1258, 0
      %v1266 = vsel %vm561, %v1259, 0
      %v1269 = vsel %vm561, %v1260, 0
      %v1272 = vsel %vm561, %v1261, 0
      %v1275 = vsel %vm574, %v1249, 0
      %1277 = vmatpush.bf16.msra.mxu0 0
      %1278 = vmatpush.bf16.msra.mxu0 0
      %1279 = vmatpush.bf16.msra.mxu0 0
      %1280 = vmatpush.bf16.msra.mxu0 0
      %1281 = vmatpush.bf16.msra.mxu0 0
      %1282 = vmatpush.bf16.msra.mxu0 0
      %1283 = vmatpush.bf16.msra.mxu0 0
      %1284 = vmatpush.bf16.msra.mxu0 %v1275
      %1285 = vmatmul.bf16.gmra.mxu0 %v1263
      %v1286 = vpop.f32.mrf.mxu0
      %v1287 = vadd.f32 0.0, %v1286
      %v1288 = vpop.f32.mrf.mxu0
      %v1289 = vadd.f32 0.0, %v1288
      %1290 = vmatmul.bf16.gmra.mxu0 %v1266
      %v1291 = vpop.f32.mrf.mxu0
      %v1292 = vadd.f32 0.0, %v1291
      %v1293 = vpop.f32.mrf.mxu0
      %v1294 = vadd.f32 0.0, %v1293
      %1295 = vmatmul.bf16.gmra.mxu0 %v1269
      %v1296 = vpop.f32.mrf.mxu0
      %v1297 = vadd.f32 0.0, %v1296
      %v1298 = vpop.f32.mrf.mxu0
      %v1299 = vadd.f32 0.0, %v1298
      %1300 = vmatmul.bf16.gmra.mxu0 %v1272
      %v1301 = vpop.f32.mrf.mxu0
      %v1302 = vadd.f32 0.0, %v1301
      %v1303 = vpop.f32.mrf.mxu0
      %v1304 = vadd.f32 0.0, %v1303
      %1305 = vdwg.mxu0
      %v1306 = vadd.f32 %v1112, %v1287
      %v1307 = vadd.f32 %v1113, %v1289
      %v1308 = vadd.f32 %v1114, %v1292
      %v1309 = vadd.f32 %v1115, %v1294
      %v1310 = vadd.f32 %v1116, %v1297
      %v1311 = vadd.f32 %v1117, %v1299
      %v1312 = vadd.f32 %v1118, %v1302
      %v1313 = vadd.f32 %v1119, %v1304
      %s1314 = scalar_lea.vmem [#allocation2], 24
      %v1315 = vld [vmem:[%s1314] sm:$0x8]
      %v1316 = vld [vmem:[%s1314 + $0x4] sm:$0xf]
      %v1317 = vld [vmem:[%s1314 + $0xc] sm:$0x8]
      %v1318 = vld [vmem:[%s1314 + $0x10] sm:$0xf]
      %v1319 = vld [vmem:[%s1314 + $0x18] sm:$0x8]
      %v1320 = vld [vmem:[%s1314 + $0x1c] sm:$0xf]
      %v1321 = vld [vmem:[%s1314 + $0x24] sm:$0x8]
      %v1322 = vld [vmem:[%s1314 + $0x28] sm:$0xf]
      %v1323 = vld [vmem:[%s1314 + $0x30] sm:$0x8]
      %v1324 = vld [vmem:[%s1314 + $0x34] sm:$0xf]
      %v1325 = vld [vmem:[%s1314 + $0x3c] sm:$0x8]
      %v1326 = vld [vmem:[%s1314 + $0x40] sm:$0xf]
      %v1327 = vld [vmem:[%s1314 + $0x48] sm:$0x8]
      %v1328 = vld [vmem:[%s1314 + $0x4c] sm:$0xf]
      %v1329 = vld [vmem:[%s1314 + $0x54] sm:$0x8]
      %v1330 = vld [vmem:[%s1314 + $0x58] sm:$0xf]
      %v1332 = vshrl.u32 %v1315, 16
      %v1334 = vrot.slane %v1332, 7
      %v1335 = vrot.slane %v1334, 4
      %v1337 = vshrl.u32 %v1316, 16
      %v1339 = vrot.slane %v1337, 7
      %v1340 = vshll.u32 %v1316, 16
      %v1342 = vor.u32 %v1339, %v1340
      %v1343 = vsel %vm433, %v1335, %v1342
      %v1345 = vshrl.u32 %v1317, 16
      %v1347 = vrot.slane %v1345, 7
      %v1348 = vrot.slane %v1347, 4
      %v1350 = vshrl.u32 %v1318, 16
      %v1352 = vrot.slane %v1350, 7
      %v1353 = vshll.u32 %v1318, 16
      %v1355 = vor.u32 %v1352, %v1353
      %v1356 = vsel %vm433, %v1348, %v1355
      %v1358 = vshrl.u32 %v1319, 16
      %v1360 = vrot.slane %v1358, 7
      %v1361 = vrot.slane %v1360, 4
      %v1363 = vshrl.u32 %v1320, 16
      %v1365 = vrot.slane %v1363, 7
      %v1366 = vshll.u32 %v1320, 16
      %v1368 = vor.u32 %v1365, %v1366
      %v1369 = vsel %vm433, %v1361, %v1368
      %v1371 = vshrl.u32 %v1321, 16
      %v1373 = vrot.slane %v1371, 7
      %v1374 = vrot.slane %v1373, 4
      %v1376 = vshrl.u32 %v1322, 16
      %v1378 = vrot.slane %v1376, 7
      %v1379 = vshll.u32 %v1322, 16
      %v1381 = vor.u32 %v1378, %v1379
      %v1382 = vsel %vm433, %v1374, %v1381
      %v1384 = vshrl.u32 %v1323, 16
      %v1386 = vrot.slane %v1384, 7
      %v1387 = vrot.slane %v1386, 4
      %v1389 = vshrl.u32 %v1324, 16
      %v1391 = vrot.slane %v1389, 7
      %v1392 = vshll.u32 %v1324, 16
      %v1394 = vor.u32 %v1391, %v1392
      %v1395 = vsel %vm433, %v1387, %v1394
      %v1397 = vshrl.u32 %v1325, 16
      %v1399 = vrot.slane %v1397, 7
      %v1400 = vrot.slane %v1399, 4
      %v1402 = vshrl.u32 %v1326, 16
      %v1404 = vrot.slane %v1402, 7
      %v1405 = vshll.u32 %v1326, 16
      %v1407 = vor.u32 %v1404, %v1405
      %v1408 = vsel %vm433, %v1400, %v1407
      %v1410 = vshrl.u32 %v1327, 16
      %v1412 = vrot.slane %v1410, 7
      %v1413 = vrot.slane %v1412, 4
      %v1415 = vshrl.u32 %v1328, 16
      %v1417 = vrot.slane %v1415, 7
      %v1418 = vshll.u32 %v1328, 16
      %v1420 = vor.u32 %v1417, %v1418
      %v1421 = vsel %vm433, %v1413, %v1420
      %v1423 = vshrl.u32 %v1329, 16
      %v1425 = vrot.slane %v1423, 7
      %v1426 = vrot.slane %v1425, 4
      %v1428 = vshrl.u32 %v1330, 16
      %v1430 = vrot.slane %v1428, 7
      %v1431 = vshll.u32 %v1330, 16
      %v1433 = vor.u32 %v1430, %v1431
      %v1434 = vsel %vm433, %v1426, %v1433
      %s1435 = scalar_lea.vmem %s1, 12
      %v1436 = vld [vmem:[%s1435] sm:$0x3]
      %v1437 = vunpack.c.l.b16 %v1343
      %v1438 = vunpack.c.l.b16 %v1356
      %v1439 = vunpack.c.l.b16 %v1369
      %v1440 = vunpack.c.l.b16 %v1382
      %v1441 = vunpack.c.l.b16 %v1395
      %v1442 = vunpack.c.l.b16 %v1408
      %v1443 = vunpack.c.l.b16 %v1421
      %v1444 = vunpack.c.l.b16 %v1434
      %v1445 = vpack.c.b16 %v1438, %v1437
      %v1446 = vpack.c.b16 %v1440, %v1439
      %v1447 = vpack.c.b16 %v1442, %v1441
      %v1448 = vpack.c.b16 %v1444, %v1443
      %v1450 = vsel %vm561, %v1445, 0
      %v1453 = vsel %vm561, %v1446, 0
      %v1456 = vsel %vm561, %v1447, 0
      %v1459 = vsel %vm561, %v1448, 0
      %v1462 = vsel %vm574, %v1436, 0
      %1464 = vmatpush.bf16.msra.mxu0 0
      %1465 = vmatpush.bf16.msra.mxu0 0
      %1466 = vmatpush.bf16.msra.mxu0 0
      %1467 = vmatpush.bf16.msra.mxu0 0
      %1468 = vmatpush.bf16.msra.mxu0 0
      %1469 = vmatpush.bf16.msra.mxu0 0
      %1470 = vmatpush.bf16.msra.mxu0 0
      %1471 = vmatpush.bf16.msra.mxu0 %v1462
      %1472 = vmatmul.bf16.gmra.mxu0 %v1450
      %v1473 = vpop.f32.mrf.mxu0
      %v1474 = vadd.f32 0.0, %v1473
      %v1475 = vpop.f32.mrf.mxu0
      %v1476 = vadd.f32 0.0, %v1475
      %1477 = vmatmul.bf16.gmra.mxu0 %v1453
      %v1478 = vpop.f32.mrf.mxu0
      %v1479 = vadd.f32 0.0, %v1478
      %v1480 = vpop.f32.mrf.mxu0
      %v1481 = vadd.f32 0.0, %v1480
      %1482 = vmatmul.bf16.gmra.mxu0 %v1456
      %v1483 = vpop.f32.mrf.mxu0
      %v1484 = vadd.f32 0.0, %v1483
      %v1485 = vpop.f32.mrf.mxu0
      %v1486 = vadd.f32 0.0, %v1485
      %1487 = vmatmul.bf16.gmra.mxu0 %v1459
      %v1488 = vpop.f32.mrf.mxu0
      %v1489 = vadd.f32 0.0, %v1488
      %v1490 = vpop.f32.mrf.mxu0
      %v1491 = vadd.f32 0.0, %v1490
      %1492 = vdwg.mxu0
      %v1493 = vadd.f32 %v1306, %v1474
      %v1494 = vadd.f32 %v1307, %v1476
      %v1495 = vadd.f32 %v1308, %v1479
      %v1496 = vadd.f32 %v1309, %v1481
      %v1497 = vadd.f32 %v1310, %v1484
      %v1498 = vadd.f32 %v1311, %v1486
      %v1499 = vadd.f32 %v1312, %v1489
      %v1500 = vadd.f32 %v1313, %v1491
      %s1501 = scalar_lea.vmem %s1, 14
      %v1502 = vld [vmem:[%s1501] sm:$0x3]
      %v1511 = vunpack.c.l.b16 %v1316
      %v1512 = vunpack.c.l.b16 %v1318
      %v1513 = vunpack.c.l.b16 %v1320
      %v1514 = vunpack.c.l.b16 %v1322
      %v1515 = vunpack.c.l.b16 %v1324
      %v1516 = vunpack.c.l.b16 %v1326
      %v1517 = vunpack.c.l.b16 %v1328
      %v1518 = vunpack.c.l.b16 %v1330
      %v1519 = vpack.c.b16 %v1512, %v1511
      %v1520 = vpack.c.b16 %v1514, %v1513
      %v1521 = vpack.c.b16 %v1516, %v1515
      %v1522 = vpack.c.b16 %v1518, %v1517
      %v1524 = vsel %vm561, %v1519, 0
      %v1527 = vsel %vm561, %v1520, 0
      %v1530 = vsel %vm561, %v1521, 0
      %v1533 = vsel %vm561, %v1522, 0
      %v1536 = vsel %vm574, %v1502, 0
      %1538 = vmatpush.bf16.msra.mxu0 0
      %1539 = vmatpush.bf16.msra.mxu0 0
      %1540 = vmatpush.bf16.msra.mxu0 0
      %1541 = vmatpush.bf16.msra.mxu0 0
      %1542 = vmatpush.bf16.msra.mxu0 0
      %1543 = vmatpush.bf16.msra.mxu0 0
      %1544 = vmatpush.bf16.msra.mxu0 0
      %1545 = vmatpush.bf16.msra.mxu0 %v1536
      %1546 = vmatmul.bf16.gmra.mxu0 %v1524
      %v1547 = vpop.f32.mrf.mxu0
      %v1548 = vadd.f32 0.0, %v1547
      %v1549 = vpop.f32.mrf.mxu0
      %v1550 = vadd.f32 0.0, %v1549
      %1551 = vmatmul.bf16.gmra.mxu0 %v1527
      %v1552 = vpop.f32.mrf.mxu0
      %v1553 = vadd.f32 0.0, %v1552
      %v1554 = vpop.f32.mrf.mxu0
      %v1555 = vadd.f32 0.0, %v1554
      %1556 = vmatmul.bf16.gmra.mxu0 %v1530
      %v1557 = vpop.f32.mrf.mxu0
      %v1558 = vadd.f32 0.0, %v1557
      %v1559 = vpop.f32.mrf.mxu0
      %v1560 = vadd.f32 0.0, %v1559
      %1561 = vmatmul.bf16.gmra.mxu0 %v1533
      %v1562 = vpop.f32.mrf.mxu0
      %v1563 = vadd.f32 0.0, %v1562
      %v1564 = vpop.f32.mrf.mxu0
      %v1565 = vadd.f32 0.0, %v1564
      %1566 = vdwg.mxu0
      %v1567 = vadd.f32 %v1493, %v1548
      %v1568 = vadd.f32 %v1494, %v1550
      %v1569 = vadd.f32 %v1495, %v1553
      %v1570 = vadd.f32 %v1496, %v1555
      %v1571 = vadd.f32 %v1497, %v1558
      %v1572 = vadd.f32 %v1498, %v1560
      %v1573 = vadd.f32 %v1499, %v1563
      %v1574 = vadd.f32 %v1500, %v1565
      %v1575 = vld [vmem:[%s1314 + $0x4] sm:$0xf]
      %v1576 = vld [vmem:[%s1314 + $0x8] sm:$0x1]
      %v1577 = vld [vmem:[%s1314 + $0x10] sm:$0xf]
      %v1578 = vld [vmem:[%s1314 + $0x14] sm:$0x1]
      %v1579 = vld [vmem:[%s1314 + $0x1c] sm:$0xf]
      %v1580 = vld [vmem:[%s1314 + $0x20] sm:$0x1]
      %v1581 = vld [vmem:[%s1314 + $0x28] sm:$0xf]
      %v1582 = vld [vmem:[%s1314 + $0x2c] sm:$0x1]
      %v1583 = vld [vmem:[%s1314 + $0x34] sm:$0xf]
      %v1584 = vld [vmem:[%s1314 + $0x38] sm:$0x1]
      %v1585 = vld [vmem:[%s1314 + $0x40] sm:$0xf]
      %v1586 = vld [vmem:[%s1314 + $0x44] sm:$0x1]
      %v1587 = vld [vmem:[%s1314 + $0x4c] sm:$0xf]
      %v1588 = vld [vmem:[%s1314 + $0x50] sm:$0x1]
      %v1589 = vld [vmem:[%s1314 + $0x58] sm:$0xf]
      %v1590 = vld [vmem:[%s1314 + $0x5c] sm:$0x1]
      %v1592 = vshrl.u32 %v1575, 16
      %v1594 = vrot.slane %v1592, 4
      %v1595 = vshll.u32 %v1575, 16
      %v1597 = vrot.slane %v1595, 5
      %v1598 = vor.u32 %v1594, %v1597
      %v1599 = vrot.slane %v1598, 4
      %v1601 = vshll.u32 %v1576, 16
      %v1603 = vrot.slane %v1601, 5
      %v1604 = vsel %vm681, %v1599, %v1603
      %v1606 = vshrl.u32 %v1577, 16
      %v1608 = vrot.slane %v1606, 4
      %v1609 = vshll.u32 %v1577, 16
      %v1611 = vrot.slane %v1609, 5
      %v1612 = vor.u32 %v1608, %v1611
      %v1613 = vrot.slane %v1612, 4
      %v1615 = vshll.u32 %v1578, 16
      %v1617 = vrot.slane %v1615, 5
      %v1618 = vsel %vm681, %v1613, %v1617
      %v1620 = vshrl.u32 %v1579, 16
      %v1622 = vrot.slane %v1620, 4
      %v1623 = vshll.u32 %v1579, 16
      %v1625 = vrot.slane %v1623, 5
      %v1626 = vor.u32 %v1622, %v1625
      %v1627 = vrot.slane %v1626, 4
      %v1629 = vshll.u32 %v1580, 16
      %v1631 = vrot.slane %v1629, 5
      %v1632 = vsel %vm681, %v1627, %v1631
      %v1634 = vshrl.u32 %v1581, 16
      %v1636 = vrot.slane %v1634, 4
      %v1637 = vshll.u32 %v1581, 16
      %v1639 = vrot.slane %v1637, 5
      %v1640 = vor.u32 %v1636, %v1639
      %v1641 = vrot.slane %v1640, 4
      %v1643 = vshll.u32 %v1582, 16
      %v1645 = vrot.slane %v1643, 5
      %v1646 = vsel %vm681, %v1641, %v1645
      %v1648 = vshrl.u32 %v1583, 16
      %v1650 = vrot.slane %v1648, 4
      %v1651 = vshll.u32 %v1583, 16
      %v1653 = vrot.slane %v1651, 5
      %v1654 = vor.u32 %v1650, %v1653
      %v1655 = vrot.slane %v1654, 4
      %v1657 = vshll.u32 %v1584, 16
      %v1659 = vrot.slane %v1657, 5
      %v1660 = vsel %vm681, %v1655, %v1659
      %v1662 = vshrl.u32 %v1585, 16
      %v1664 = vrot.slane %v1662, 4
      %v1665 = vshll.u32 %v1585, 16
      %v1667 = vrot.slane %v1665, 5
      %v1668 = vor.u32 %v1664, %v1667
      %v1669 = vrot.slane %v1668, 4
      %v1671 = vshll.u32 %v1586, 16
      %v1673 = vrot.slane %v1671, 5
      %v1674 = vsel %vm681, %v1669, %v1673
      %v1676 = vshrl.u32 %v1587, 16
      %v1678 = vrot.slane %v1676, 4
      %v1679 = vshll.u32 %v1587, 16
      %v1681 = vrot.slane %v1679, 5
      %v1682 = vor.u32 %v1678, %v1681
      %v1683 = vrot.slane %v1682, 4
      %v1685 = vshll.u32 %v1588, 16
      %v1687 = vrot.slane %v1685, 5
      %v1688 = vsel %vm681, %v1683, %v1687
      %v1690 = vshrl.u32 %v1589, 16
      %v1692 = vrot.slane %v1690, 4
      %v1693 = vshll.u32 %v1589, 16
      %v1695 = vrot.slane %v1693, 5
      %v1696 = vor.u32 %v1692, %v1695
      %v1697 = vrot.slane %v1696, 4
      %v1699 = vshll.u32 %v1590, 16
      %v1701 = vrot.slane %v1699, 5
      %v1702 = vsel %vm681, %v1697, %v1701
      %s1703 = scalar_lea.vmem %s1, 16
      %v1704 = vld [vmem:[%s1703] sm:$0x3]
      %v1705 = vunpack.c.l.b16 %v1604
      %v1706 = vunpack.c.l.b16 %v1618
      %v1707 = vunpack.c.l.b16 %v1632
      %v1708 = vunpack.c.l.b16 %v1646
      %v1709 = vunpack.c.l.b16 %v1660
      %v1710 = vunpack.c.l.b16 %v1674
      %v1711 = vunpack.c.l.b16 %v1688
      %v1712 = vunpack.c.l.b16 %v1702
      %v1713 = vpack.c.b16 %v1706, %v1705
      %v1714 = vpack.c.b16 %v1708, %v1707
      %v1715 = vpack.c.b16 %v1710, %v1709
      %v1716 = vpack.c.b16 %v1712, %v1711
      %v1718 = vsel %vm561, %v1713, 0
      %v1721 = vsel %vm561, %v1714, 0
      %v1724 = vsel %vm561, %v1715, 0
      %v1727 = vsel %vm561, %v1716, 0
      %v1730 = vsel %vm574, %v1704, 0
      %1732 = vmatpush.bf16.msra.mxu0 0
      %1733 = vmatpush.bf16.msra.mxu0 0
      %1734 = vmatpush.bf16.msra.mxu0 0
      %1735 = vmatpush.bf16.msra.mxu0 0
      %1736 = vmatpush.bf16.msra.mxu0 0
      %1737 = vmatpush.bf16.msra.mxu0 0
      %1738 = vmatpush.bf16.msra.mxu0 0
      %1739 = vmatpush.bf16.msra.mxu0 %v1730
      %1740 = vmatmul.bf16.gmra.mxu0 %v1718
      %v1741 = vpop.f32.mrf.mxu0
      %v1742 = vadd.f32 0.0, %v1741
      %v1743 = vpop.f32.mrf.mxu0
      %v1744 = vadd.f32 0.0, %v1743
      %1745 = vmatmul.bf16.gmra.mxu0 %v1721
      %v1746 = vpop.f32.mrf.mxu0
      %v1747 = vadd.f32 0.0, %v1746
      %v1748 = vpop.f32.mrf.mxu0
      %v1749 = vadd.f32 0.0, %v1748
      %1750 = vmatmul.bf16.gmra.mxu0 %v1724
      %v1751 = vpop.f32.mrf.mxu0
      %v1752 = vadd.f32 0.0, %v1751
      %v1753 = vpop.f32.mrf.mxu0
      %v1754 = vadd.f32 0.0, %v1753
      %1755 = vmatmul.bf16.gmra.mxu0 %v1727
      %v1756 = vpop.f32.mrf.mxu0
      %v1757 = vadd.f32 0.0, %v1756
      %v1758 = vpop.f32.mrf.mxu0
      %v1759 = vadd.f32 0.0, %v1758
      %1760 = vdwg.mxu0
      %v1761 = vadd.f32 %v1567, %v1742
      %v1762 = vadd.f32 %v1568, %v1744
      %v1763 = vadd.f32 %v1569, %v1747
      %v1764 = vadd.f32 %v1570, %v1749
      %v1765 = vadd.f32 %v1571, %v1752
      %v1766 = vadd.f32 %v1572, %v1754
      %v1767 = vadd.f32 %v1573, %v1757
      %v1768 = vadd.f32 %v1574, %v1759
      %v1769 = vld [vmem:[%s2] sm:$0x1]
      %v1771 = vperm.slane %v1769, 0
      %v1773 = vadd.f32 %v1761, %v1771
      %v1774 = vadd.f32 %v1762, %v1771
      %v1775 = vadd.f32 %v1763, %v1771
      %v1776 = vadd.f32 %v1764, %v1771
      %v1777 = vadd.f32 %v1765, %v1771
      %v1778 = vadd.f32 %v1766, %v1771
      %v1779 = vadd.f32 %v1767, %v1771
      %v1780 = vadd.f32 %v1768, %v1771
      %v1781 = vmax.f32 %v1773, 0.0
      %v1782 = vmax.f32 %v1774, 0.0
      %v1783 = vmax.f32 %v1775, 0.0
      %v1784 = vmax.f32 %v1776, 0.0
      %v1785 = vmax.f32 %v1777, 0.0
      %v1786 = vmax.f32 %v1778, 0.0
      %v1787 = vmax.f32 %v1779, 0.0
      %v1788 = vmax.f32 %v1780, 0.0
      %v1789 = vpack.c.bf16 %v1781, %v1781
      %v1790 = vpack.c.bf16 %v1782, %v1782
      %v1791 = vpack.c.bf16 %v1783, %v1783
      %v1792 = vpack.c.bf16 %v1784, %v1784
      %v1793 = vpack.c.bf16 %v1785, %v1785
      %v1794 = vpack.c.bf16 %v1786, %v1786
      %v1795 = vpack.c.bf16 %v1787, %v1787
      %v1796 = vpack.c.bf16 %v1788, %v1788
      %1797 = vst.msk [vmem:[%s259 + $0x4] sm:$0xf] %vm251, %v1789
      %1798 = vst.msk [vmem:[%s259 + $0x10] sm:$0xf] %vm251, %v1790
      %1799 = vst.msk [vmem:[%s259 + $0x1c] sm:$0xf] %vm251, %v1791
      %1800 = vst.msk [vmem:[%s259 + $0x28] sm:$0xf] %vm251, %v1792
      %1801 = vst.msk [vmem:[%s259 + $0x34] sm:$0xf] %vm251, %v1793
      %1802 = vst.msk [vmem:[%s259 + $0x40] sm:$0xf] %vm251, %v1794
      %1803 = vst.msk [vmem:[%s259 + $0x4c] sm:$0xf] %vm251, %v1795
      %1804 = vst.msk [vmem:[%s259 + $0x58] sm:$0xf] %vm251, %v1796
      %v1805 = vld [vmem:[#allocation3] sm:$0x8]
      %v1806 = vld [vmem:[#allocation3 + $0x4] sm:$0xf]
      %v1807 = vld [vmem:[#allocation3 + $0xc] sm:$0x8]
      %v1808 = vld [vmem:[#allocation3 + $0x10] sm:$0xf]
      %v1809 = vld [vmem:[#allocation3 + $0x18] sm:$0x8]
      %v1810 = vld [vmem:[#allocation3 + $0x1c] sm:$0xf]
      %v1811 = vld [vmem:[#allocation3 + $0x24] sm:$0x8]
      %v1812 = vld [vmem:[#allocation3 + $0x28] sm:$0xf]
      %v1813 = vld [vmem:[#allocation3 + $0x30] sm:$0x8]
      %v1814 = vld [vmem:[#allocation3 + $0x34] sm:$0xf]
      %v1815 = vld [vmem:[#allocation3 + $0x3c] sm:$0x8]
      %v1816 = vld [vmem:[#allocation3 + $0x40] sm:$0xf]
      %v1817 = vld [vmem:[#allocation3 + $0x48] sm:$0x8]
      %v1818 = vld [vmem:[#allocation3 + $0x4c] sm:$0xf]
      %v1819 = vld [vmem:[#allocation3 + $0x54] sm:$0x8]
      %v1820 = vld [vmem:[#allocation3 + $0x58] sm:$0xf]
      %v1822 = vshrl.u32 %v1805, 16
      %v1824 = vrot.slane %v1822, 7
      %v1825 = vrot.slane %v1824, 4
      %v1827 = vshrl.u32 %v1806, 16
      %v1829 = vrot.slane %v1827, 7
      %v1830 = vshll.u32 %v1806, 16
      %v1832 = vor.u32 %v1829, %v1830
      %v1833 = vsel %vm433, %v1825, %v1832
      %v1835 = vshrl.u32 %v1807, 16
      %v1837 = vrot.slane %v1835, 7
      %v1838 = vrot.slane %v1837, 4
      %v1840 = vshrl.u32 %v1808, 16
      %v1842 = vrot.slane %v1840, 7
      %v1843 = vshll.u32 %v1808, 16
      %v1845 = vor.u32 %v1842, %v1843
      %v1846 = vsel %vm433, %v1838, %v1845
      %v1848 = vshrl.u32 %v1809, 16
      %v1850 = vrot.slane %v1848, 7
      %v1851 = vrot.slane %v1850, 4
      %v1853 = vshrl.u32 %v1810, 16
      %v1855 = vrot.slane %v1853, 7
      %v1856 = vshll.u32 %v1810, 16
      %v1858 = vor.u32 %v1855, %v1856
      %v1859 = vsel %vm433, %v1851, %v1858
      %v1861 = vshrl.u32 %v1811, 16
      %v1863 = vrot.slane %v1861, 7
      %v1864 = vrot.slane %v1863, 4
      %v1866 = vshrl.u32 %v1812, 16
      %v1868 = vrot.slane %v1866, 7
      %v1869 = vshll.u32 %v1812, 16
      %v1871 = vor.u32 %v1868, %v1869
      %v1872 = vsel %vm433, %v1864, %v1871
      %v1874 = vshrl.u32 %v1813, 16
      %v1876 = vrot.slane %v1874, 7
      %v1877 = vrot.slane %v1876, 4
      %v1879 = vshrl.u32 %v1814, 16
      %v1881 = vrot.slane %v1879, 7
      %v1882 = vshll.u32 %v1814, 16
      %v1884 = vor.u32 %v1881, %v1882
      %v1885 = vsel %vm433, %v1877, %v1884
      %v1887 = vshrl.u32 %v1815, 16
      %v1889 = vrot.slane %v1887, 7
      %v1890 = vrot.slane %v1889, 4
      %v1892 = vshrl.u32 %v1816, 16
      %v1894 = vrot.slane %v1892, 7
      %v1895 = vshll.u32 %v1816, 16
      %v1897 = vor.u32 %v1894, %v1895
      %v1898 = vsel %vm433, %v1890, %v1897
      %v1900 = vshrl.u32 %v1817, 16
      %v1902 = vrot.slane %v1900, 7
      %v1903 = vrot.slane %v1902, 4
      %v1905 = vshrl.u32 %v1818, 16
      %v1907 = vrot.slane %v1905, 7
      %v1908 = vshll.u32 %v1818, 16
      %v1910 = vor.u32 %v1907, %v1908
      %v1911 = vsel %vm433, %v1903, %v1910
      %v1913 = vshrl.u32 %v1819, 16
      %v1915 = vrot.slane %v1913, 7
      %v1916 = vrot.slane %v1915, 4
      %v1918 = vshrl.u32 %v1820, 16
      %v1920 = vrot.slane %v1918, 7
      %v1921 = vshll.u32 %v1820, 16
      %v1923 = vor.u32 %v1920, %v1921
      %v1924 = vsel %vm433, %v1916, %v1923
      %v1925 = vld [vmem:[%s3] sm:$0xf]
      %s1926 = scalar_lea.vmem %s3, 4
      %v1927 = vld [vmem:[%s1926] sm:$0xf]
      %v1936 = vunpack.c.l.b16 %v1806
      %v1937 = vunpack.c.l.b16 %v1808
      %v1938 = vunpack.c.l.b16 %v1810
      %v1939 = vunpack.c.l.b16 %v1812
      %v1940 = vunpack.c.l.b16 %v1814
      %v1941 = vunpack.c.l.b16 %v1816
      %v1942 = vunpack.c.l.b16 %v1818
      %v1943 = vunpack.c.l.b16 %v1820
      %v1944 = vpack.c.b16 %v1937, %v1936
      %v1945 = vpack.c.b16 %v1939, %v1938
      %v1946 = vpack.c.b16 %v1941, %v1940
      %v1947 = vpack.c.b16 %v1943, %v1942
      %vm1948 = vcmask 64512
      %v1950 = vsel %vm1948, %v1944, 0
      %v1953 = vsel %vm1948, %v1945, 0
      %v1956 = vsel %vm1948, %v1946, 0
      %v1959 = vsel %vm1948, %v1947, 0
      %vm1961 = vcmask 1043456
      %v1963 = vsel %vm1961, %v1927, 0
      %1965 = vmatpush.bf16.msra.mxu0 0
      %1966 = vmatpush.bf16.msra.mxu0 0
      %1967 = vmatpush.bf16.msra.mxu0 0
      %1968 = vmatpush.bf16.msra.mxu0 0
      %1969 = vmatpush.bf16.msra.mxu0 0
      %1970 = vmatpush.bf16.msra.mxu0 0
      %1971 = vmatpush.bf16.msra.mxu0 0
      %1972 = vmatpush.bf16.msra.mxu0 %v1963
      %1973 = vmatmul.bf16.gmra.mxu0 %v1950
      %v1974 = vpop.f32.mrf.mxu0
      %v1975 = vadd.f32 0.0, %v1974
      %v1976 = vpop.f32.mrf.mxu0
      %v1977 = vadd.f32 0.0, %v1976
      %1978 = vmatmul.bf16.gmra.mxu0 %v1953
      %v1979 = vpop.f32.mrf.mxu0
      %v1980 = vadd.f32 0.0, %v1979
      %v1981 = vpop.f32.mrf.mxu0
      %v1982 = vadd.f32 0.0, %v1981
      %1983 = vmatmul.bf16.gmra.mxu0 %v1956
      %v1984 = vpop.f32.mrf.mxu0
      %v1985 = vadd.f32 0.0, %v1984
      %v1986 = vpop.f32.mrf.mxu0
      %v1987 = vadd.f32 0.0, %v1986
      %1988 = vmatmul.bf16.gmra.mxu0 %v1959
      %v1989 = vpop.f32.mrf.mxu0
      %v1990 = vadd.f32 0.0, %v1989
      %v1991 = vpop.f32.mrf.mxu0
      %v1992 = vadd.f32 0.0, %v1991
      %1993 = vdwg.mxu0
      %v1994 = vunpack.c.l.b16 %v1833
      %v1995 = vunpack.c.l.b16 %v1846
      %v1996 = vunpack.c.l.b16 %v1859
      %v1997 = vunpack.c.l.b16 %v1872
      %v1998 = vunpack.c.l.b16 %v1885
      %v1999 = vunpack.c.l.b16 %v1898
      %v2000 = vunpack.c.l.b16 %v1911
      %v2001 = vunpack.c.l.b16 %v1924
      %v2002 = vpack.c.b16 %v1995, %v1994
      %v2003 = vpack.c.b16 %v1997, %v1996
      %v2004 = vpack.c.b16 %v1999, %v1998
      %v2005 = vpack.c.b16 %v2001, %v2000
      %v2007 = vsel %vm1948, %v2002, 0
      %v2010 = vsel %vm1948, %v2003, 0
      %v2013 = vsel %vm1948, %v2004, 0
      %v2016 = vsel %vm1948, %v2005, 0
      %v2019 = vsel %vm1961, %v1925, 0
      %2021 = vmatpush.bf16.msra.mxu0 0
      %2022 = vmatpush.bf16.msra.mxu0 0
      %2023 = vmatpush.bf16.msra.mxu0 0
      %2024 = vmatpush.bf16.msra.mxu0 0
      %2025 = vmatpush.bf16.msra.mxu0 0
      %2026 = vmatpush.bf16.msra.mxu0 0
      %2027 = vmatpush.bf16.msra.mxu0 0
      %2028 = vmatpush.bf16.msra.mxu0 %v2019
      %2029 = vmatmul.bf16.gmra.mxu0 %v2007
      %v2030 = vpop.f32.mrf.mxu0
      %v2031 = vadd.f32 %v1975, %v2030
      %v2032 = vpop.f32.mrf.mxu0
      %v2033 = vadd.f32 %v1977, %v2032
      %2034 = vmatmul.bf16.gmra.mxu0 %v2010
      %v2035 = vpop.f32.mrf.mxu0
      %v2036 = vadd.f32 %v1980, %v2035
      %v2037 = vpop.f32.mrf.mxu0
      %v2038 = vadd.f32 %v1982, %v2037
      %2039 = vmatmul.bf16.gmra.mxu0 %v2013
      %v2040 = vpop.f32.mrf.mxu0
      %v2041 = vadd.f32 %v1985, %v2040
      %v2042 = vpop.f32.mrf.mxu0
      %v2043 = vadd.f32 %v1987, %v2042
      %2044 = vmatmul.bf16.gmra.mxu0 %v2016
      %v2045 = vpop.f32.mrf.mxu0
      %v2046 = vadd.f32 %v1990, %v2045
      %v2047 = vpop.f32.mrf.mxu0
      %v2048 = vadd.f32 %v1992, %v2047
      %2049 = vdwg.mxu0
      %v2050 = vld [vmem:[#allocation3 + $0x4] sm:$0xf]
      %v2051 = vld [vmem:[#allocation3 + $0x8] sm:$0x1]
      %v2052 = vld [vmem:[#allocation3 + $0x10] sm:$0xf]
      %v2053 = vld [vmem:[#allocation3 + $0x14] sm:$0x1]
      %v2054 = vld [vmem:[#allocation3 + $0x1c] sm:$0xf]
      %v2055 = vld [vmem:[#allocation3 + $0x20] sm:$0x1]
      %v2056 = vld [vmem:[#allocation3 + $0x28] sm:$0xf]
      %v2057 = vld [vmem:[#allocation3 + $0x2c] sm:$0x1]
      %v2058 = vld [vmem:[#allocation3 + $0x34] sm:$0xf]
      %v2059 = vld [vmem:[#allocation3 + $0x38] sm:$0x1]
      %v2060 = vld [vmem:[#allocation3 + $0x40] sm:$0xf]
      %v2061 = vld [vmem:[#allocation3 + $0x44] sm:$0x1]
      %v2062 = vld [vmem:[#allocation3 + $0x4c] sm:$0xf]
      %v2063 = vld [vmem:[#allocation3 + $0x50] sm:$0x1]
      %v2064 = vld [vmem:[#allocation3 + $0x58] sm:$0xf]
      %v2065 = vld [vmem:[#allocation3 + $0x5c] sm:$0x1]
      %v2067 = vshrl.u32 %v2050, 16
      %v2069 = vrot.slane %v2067, 4
      %v2070 = vshll.u32 %v2050, 16
      %v2072 = vrot.slane %v2070, 5
      %v2073 = vor.u32 %v2069, %v2072
      %v2074 = vrot.slane %v2073, 4
      %v2076 = vshll.u32 %v2051, 16
      %v2078 = vrot.slane %v2076, 5
      %v2079 = vsel %vm681, %v2074, %v2078
      %v2081 = vshrl.u32 %v2052, 16
      %v2083 = vrot.slane %v2081, 4
      %v2084 = vshll.u32 %v2052, 16
      %v2086 = vrot.slane %v2084, 5
      %v2087 = vor.u32 %v2083, %v2086
      %v2088 = vrot.slane %v2087, 4
      %v2090 = vshll.u32 %v2053, 16
      %v2092 = vrot.slane %v2090, 5
      %v2093 = vsel %vm681, %v2088, %v2092
      %v2095 = vshrl.u32 %v2054, 16
      %v2097 = vrot.slane %v2095, 4
      %v2098 = vshll.u32 %v2054, 16
      %v2100 = vrot.slane %v2098, 5
      %v2101 = vor.u32 %v2097, %v2100
      %v2102 = vrot.slane %v2101, 4
      %v2104 = vshll.u32 %v2055, 16
      %v2106 = vrot.slane %v2104, 5
      %v2107 = vsel %vm681, %v2102, %v2106
      %v2109 = vshrl.u32 %v2056, 16
      %v2111 = vrot.slane %v2109, 4
      %v2112 = vshll.u32 %v2056, 16
      %v2114 = vrot.slane %v2112, 5
      %v2115 = vor.u32 %v2111, %v2114
      %v2116 = vrot.slane %v2115, 4
      %v2118 = vshll.u32 %v2057, 16
      %v2120 = vrot.slane %v2118, 5
      %v2121 = vsel %vm681, %v2116, %v2120
      %v2123 = vshrl.u32 %v2058, 16
      %v2125 = vrot.slane %v2123, 4
      %v2126 = vshll.u32 %v2058, 16
      %v2128 = vrot.slane %v2126, 5
      %v2129 = vor.u32 %v2125, %v2128
      %v2130 = vrot.slane %v2129, 4
      %v2132 = vshll.u32 %v2059, 16
      %v2134 = vrot.slane %v2132, 5
      %v2135 = vsel %vm681, %v2130, %v2134
      %v2137 = vshrl.u32 %v2060, 16
      %v2139 = vrot.slane %v2137, 4
      %v2140 = vshll.u32 %v2060, 16
      %v2142 = vrot.slane %v2140, 5
      %v2143 = vor.u32 %v2139, %v2142
      %v2144 = vrot.slane %v2143, 4
      %v2146 = vshll.u32 %v2061, 16
      %v2148 = vrot.slane %v2146, 5
      %v2149 = vsel %vm681, %v2144, %v2148
      %v2151 = vshrl.u32 %v2062, 16
      %v2153 = vrot.slane %v2151, 4
      %v2154 = vshll.u32 %v2062, 16
      %v2156 = vrot.slane %v2154, 5
      %v2157 = vor.u32 %v2153, %v2156
      %v2158 = vrot.slane %v2157, 4
      %v2160 = vshll.u32 %v2063, 16
      %v2162 = vrot.slane %v2160, 5
      %v2163 = vsel %vm681, %v2158, %v2162
      %v2165 = vshrl.u32 %v2064, 16
      %v2167 = vrot.slane %v2165, 4
      %v2168 = vshll.u32 %v2064, 16
      %v2170 = vrot.slane %v2168, 5
      %v2171 = vor.u32 %v2167, %v2170
      %v2172 = vrot.slane %v2171, 4
      %v2174 = vshll.u32 %v2065, 16
      %v2176 = vrot.slane %v2174, 5
      %v2177 = vsel %vm681, %v2172, %v2176
      %s2178 = scalar_lea.vmem %s3, 8
      %v2179 = vld [vmem:[%s2178] sm:$0xf]
      %v2180 = vunpack.c.l.b16 %v2079
      %v2181 = vunpack.c.l.b16 %v2093
      %v2182 = vunpack.c.l.b16 %v2107
      %v2183 = vunpack.c.l.b16 %v2121
      %v2184 = vunpack.c.l.b16 %v2135
      %v2185 = vunpack.c.l.b16 %v2149
      %v2186 = vunpack.c.l.b16 %v2163
      %v2187 = vunpack.c.l.b16 %v2177
      %v2188 = vpack.c.b16 %v2181, %v2180
      %v2189 = vpack.c.b16 %v2183, %v2182
      %v2190 = vpack.c.b16 %v2185, %v2184
      %v2191 = vpack.c.b16 %v2187, %v2186
      %v2193 = vsel %vm1948, %v2188, 0
      %v2196 = vsel %vm1948, %v2189, 0
      %v2199 = vsel %vm1948, %v2190, 0
      %v2202 = vsel %vm1948, %v2191, 0
      %v2205 = vsel %vm1961, %v2179, 0
      %2207 = vmatpush.bf16.msra.mxu0 0
      %2208 = vmatpush.bf16.msra.mxu0 0
      %2209 = vmatpush.bf16.msra.mxu0 0
      %2210 = vmatpush.bf16.msra.mxu0 0
      %2211 = vmatpush.bf16.msra.mxu0 0
      %2212 = vmatpush.bf16.msra.mxu0 0
      %2213 = vmatpush.bf16.msra.mxu0 0
      %2214 = vmatpush.bf16.msra.mxu0 %v2205
      %2215 = vmatmul.bf16.gmra.mxu0 %v2193
      %v2216 = vpop.f32.mrf.mxu0
      %v2217 = vadd.f32 0.0, %v2216
      %v2218 = vpop.f32.mrf.mxu0
      %v2219 = vadd.f32 0.0, %v2218
      %2220 = vmatmul.bf16.gmra.mxu0 %v2196
      %v2221 = vpop.f32.mrf.mxu0
      %v2222 = vadd.f32 0.0, %v2221
      %v2223 = vpop.f32.mrf.mxu0
      %v2224 = vadd.f32 0.0, %v2223
      %2225 = vmatmul.bf16.gmra.mxu0 %v2199
      %v2226 = vpop.f32.mrf.mxu0
      %v2227 = vadd.f32 0.0, %v2226
      %v2228 = vpop.f32.mrf.mxu0
      %v2229 = vadd.f32 0.0, %v2228
      %2230 = vmatmul.bf16.gmra.mxu0 %v2202
      %v2231 = vpop.f32.mrf.mxu0
      %v2232 = vadd.f32 0.0, %v2231
      %v2233 = vpop.f32.mrf.mxu0
      %v2234 = vadd.f32 0.0, %v2233
      %2235 = vdwg.mxu0
      %v2236 = vadd.f32 %v2031, %v2217
      %v2237 = vadd.f32 %v2033, %v2219
      %v2238 = vadd.f32 %v2036, %v2222
      %v2239 = vadd.f32 %v2038, %v2224
      %v2240 = vadd.f32 %v2041, %v2227
      %v2241 = vadd.f32 %v2043, %v2229
      %v2242 = vadd.f32 %v2046, %v2232
      %v2243 = vadd.f32 %v2048, %v2234
      %v2244 = vld [vmem:[%s259] sm:$0x8]
      %v2245 = vld [vmem:[%s259 + $0x4] sm:$0xf]
      %v2246 = vld [vmem:[%s259 + $0xc] sm:$0x8]
      %v2247 = vld [vmem:[%s259 + $0x10] sm:$0xf]
      %v2248 = vld [vmem:[%s259 + $0x18] sm:$0x8]
      %v2249 = vld [vmem:[%s259 + $0x1c] sm:$0xf]
      %v2250 = vld [vmem:[%s259 + $0x24] sm:$0x8]
      %v2251 = vld [vmem:[%s259 + $0x28] sm:$0xf]
      %v2252 = vld [vmem:[%s259 + $0x30] sm:$0x8]
      %v2253 = vld [vmem:[%s259 + $0x34] sm:$0xf]
      %v2254 = vld [vmem:[%s259 + $0x3c] sm:$0x8]
      %v2255 = vld [vmem:[%s259 + $0x40] sm:$0xf]
      %v2256 = vld [vmem:[%s259 + $0x48] sm:$0x8]
      %v2257 = vld [vmem:[%s259 + $0x4c] sm:$0xf]
      %v2258 = vld [vmem:[%s259 + $0x54] sm:$0x8]
      %v2259 = vld [vmem:[%s259 + $0x58] sm:$0xf]
      %v2261 = vshrl.u32 %v2244, 16
      %v2263 = vrot.slane %v2261, 7
      %v2264 = vrot.slane %v2263, 4
      %v2266 = vshrl.u32 %v2245, 16
      %v2268 = vrot.slane %v2266, 7
      %v2269 = vshll.u32 %v2245, 16
      %v2271 = vor.u32 %v2268, %v2269
      %v2272 = vsel %vm433, %v2264, %v2271
      %v2274 = vshrl.u32 %v2246, 16
      %v2276 = vrot.slane %v2274, 7
      %v2277 = vrot.slane %v2276, 4
      %v2279 = vshrl.u32 %v2247, 16
      %v2281 = vrot.slane %v2279, 7
      %v2282 = vshll.u32 %v2247, 16
      %v2284 = vor.u32 %v2281, %v2282
      %v2285 = vsel %vm433, %v2277, %v2284
      %v2287 = vshrl.u32 %v2248, 16
      %v2289 = vrot.slane %v2287, 7
      %v2290 = vrot.slane %v2289, 4
      %v2292 = vshrl.u32 %v2249, 16
      %v2294 = vrot.slane %v2292, 7
      %v2295 = vshll.u32 %v2249, 16
      %v2297 = vor.u32 %v2294, %v2295
      %v2298 = vsel %vm433, %v2290, %v2297
      %v2300 = vshrl.u32 %v2250, 16
      %v2302 = vrot.slane %v2300, 7
      %v2303 = vrot.slane %v2302, 4
      %v2305 = vshrl.u32 %v2251, 16
      %v2307 = vrot.slane %v2305, 7
      %v2308 = vshll.u32 %v2251, 16
      %v2310 = vor.u32 %v2307, %v2308
      %v2311 = vsel %vm433, %v2303, %v2310
      %v2313 = vshrl.u32 %v2252, 16
      %v2315 = vrot.slane %v2313, 7
      %v2316 = vrot.slane %v2315, 4
      %v2318 = vshrl.u32 %v2253, 16
      %v2320 = vrot.slane %v2318, 7
      %v2321 = vshll.u32 %v2253, 16
      %v2323 = vor.u32 %v2320, %v2321
      %v2324 = vsel %vm433, %v2316, %v2323
      %v2326 = vshrl.u32 %v2254, 16
      %v2328 = vrot.slane %v2326, 7
      %v2329 = vrot.slane %v2328, 4
      %v2331 = vshrl.u32 %v2255, 16
      %v2333 = vrot.slane %v2331, 7
      %v2334 = vshll.u32 %v2255, 16
      %v2336 = vor.u32 %v2333, %v2334
      %v2337 = vsel %vm433, %v2329, %v2336
      %v2339 = vshrl.u32 %v2256, 16
      %v2341 = vrot.slane %v2339, 7
      %v2342 = vrot.slane %v2341, 4
      %v2344 = vshrl.u32 %v2257, 16
      %v2346 = vrot.slane %v2344, 7
      %v2347 = vshll.u32 %v2257, 16
      %v2349 = vor.u32 %v2346, %v2347
      %v2350 = vsel %vm433, %v2342, %v2349
      %v2352 = vshrl.u32 %v2258, 16
      %v2354 = vrot.slane %v2352, 7
      %v2355 = vrot.slane %v2354, 4
      %v2357 = vshrl.u32 %v2259, 16
      %v2359 = vrot.slane %v2357, 7
      %v2360 = vshll.u32 %v2259, 16
      %v2362 = vor.u32 %v2359, %v2360
      %v2363 = vsel %vm433, %v2355, %v2362
      %s2364 = scalar_lea.vmem %s3, 12
      %v2365 = vld [vmem:[%s2364] sm:$0xf]
      %v2366 = vunpack.c.l.b16 %v2272
      %v2367 = vunpack.c.l.b16 %v2285
      %v2368 = vunpack.c.l.b16 %v2298
      %v2369 = vunpack.c.l.b16 %v2311
      %v2370 = vunpack.c.l.b16 %v2324
      %v2371 = vunpack.c.l.b16 %v2337
      %v2372 = vunpack.c.l.b16 %v2350
      %v2373 = vunpack.c.l.b16 %v2363
      %v2374 = vpack.c.b16 %v2367, %v2366
      %v2375 = vpack.c.b16 %v2369, %v2368
      %v2376 = vpack.c.b16 %v2371, %v2370
      %v2377 = vpack.c.b16 %v2373, %v2372
      %v2379 = vsel %vm1948, %v2374, 0
      %v2382 = vsel %vm1948, %v2375, 0
      %v2385 = vsel %vm1948, %v2376, 0
      %v2388 = vsel %vm1948, %v2377, 0
      %v2391 = vsel %vm1961, %v2365, 0
      %2393 = vmatpush.bf16.msra.mxu0 0
      %2394 = vmatpush.bf16.msra.mxu0 0
      %2395 = vmatpush.bf16.msra.mxu0 0
      %2396 = vmatpush.bf16.msra.mxu0 0
      %2397 = vmatpush.bf16.msra.mxu0 0
      %2398 = vmatpush.bf16.msra.mxu0 0
      %2399 = vmatpush.bf16.msra.mxu0 0
      %2400 = vmatpush.bf16.msra.mxu0 %v2391
      %2401 = vmatmul.bf16.gmra.mxu0 %v2379
      %v2402 = vpop.f32.mrf.mxu0
      %v2403 = vadd.f32 0.0, %v2402
      %v2404 = vpop.f32.mrf.mxu0
      %v2405 = vadd.f32 0.0, %v2404
      %2406 = vmatmul.bf16.gmra.mxu0 %v2382
      %v2407 = vpop.f32.mrf.mxu0
      %v2408 = vadd.f32 0.0, %v2407
      %v2409 = vpop.f32.mrf.mxu0
      %v2410 = vadd.f32 0.0, %v2409
      %2411 = vmatmul.bf16.gmra.mxu0 %v2385
      %v2412 = vpop.f32.mrf.mxu0
      %v2413 = vadd.f32 0.0, %v2412
      %v2414 = vpop.f32.mrf.mxu0
      %v2415 = vadd.f32 0.0, %v2414
      %2416 = vmatmul.bf16.gmra.mxu0 %v2388
      %v2417 = vpop.f32.mrf.mxu0
      %v2418 = vadd.f32 0.0, %v2417
      %v2419 = vpop.f32.mrf.mxu0
      %v2420 = vadd.f32 0.0, %v2419
      %2421 = vdwg.mxu0
      %v2422 = vadd.f32 %v2236, %v2403
      %v2423 = vadd.f32 %v2237, %v2405
      %v2424 = vadd.f32 %v2238, %v2408
      %v2425 = vadd.f32 %v2239, %v2410
      %v2426 = vadd.f32 %v2240, %v2413
      %v2427 = vadd.f32 %v2241, %v2415
      %v2428 = vadd.f32 %v2242, %v2418
      %v2429 = vadd.f32 %v2243, %v2420
      %s2430 = scalar_lea.vmem %s3, 16
      %v2431 = vld [vmem:[%s2430] sm:$0xf]
      %v2440 = vunpack.c.l.b16 %v2245
      %v2441 = vunpack.c.l.b16 %v2247
      %v2442 = vunpack.c.l.b16 %v2249
      %v2443 = vunpack.c.l.b16 %v2251
      %v2444 = vunpack.c.l.b16 %v2253
      %v2445 = vunpack.c.l.b16 %v2255
      %v2446 = vunpack.c.l.b16 %v2257
      %v2447 = vunpack.c.l.b16 %v2259
      %v2448 = vpack.c.b16 %v2441, %v2440
      %v2449 = vpack.c.b16 %v2443, %v2442
      %v2450 = vpack.c.b16 %v2445, %v2444
      %v2451 = vpack.c.b16 %v2447, %v2446
      %v2453 = vsel %vm1948, %v2448, 0
      %v2456 = vsel %vm1948, %v2449, 0
      %v2459 = vsel %vm1948, %v2450, 0
      %v2462 = vsel %vm1948, %v2451, 0
      %v2465 = vsel %vm1961, %v2431, 0
      %2467 = vmatpush.bf16.msra.mxu0 0
      %2468 = vmatpush.bf16.msra.mxu0 0
      %2469 = vmatpush.bf16.msra.mxu0 0
      %2470 = vmatpush.bf16.msra.mxu0 0
      %2471 = vmatpush.bf16.msra.mxu0 0
      %2472 = vmatpush.bf16.msra.mxu0 0
      %2473 = vmatpush.bf16.msra.mxu0 0
      %2474 = vmatpush.bf16.msra.mxu0 %v2465
      %2475 = vmatmul.bf16.gmra.mxu0 %v2453
      %v2476 = vpop.f32.mrf.mxu0
      %v2477 = vadd.f32 0.0, %v2476
      %v2478 = vpop.f32.mrf.mxu0
      %v2479 = vadd.f32 0.0, %v2478
      %2480 = vmatmul.bf16.gmra.mxu0 %v2456
      %v2481 = vpop.f32.mrf.mxu0
      %v2482 = vadd.f32 0.0, %v2481
      %v2483 = vpop.f32.mrf.mxu0
      %v2484 = vadd.f32 0.0, %v2483
      %2485 = vmatmul.bf16.gmra.mxu0 %v2459
      %v2486 = vpop.f32.mrf.mxu0
      %v2487 = vadd.f32 0.0, %v2486
      %v2488 = vpop.f32.mrf.mxu0
      %v2489 = vadd.f32 0.0, %v2488
      %2490 = vmatmul.bf16.gmra.mxu0 %v2462
      %v2491 = vpop.f32.mrf.mxu0
      %v2492 = vadd.f32 0.0, %v2491
      %v2493 = vpop.f32.mrf.mxu0
      %v2494 = vadd.f32 0.0, %v2493
      %2495 = vdwg.mxu0
      %v2496 = vadd.f32 %v2422, %v2477
      %v2497 = vadd.f32 %v2423, %v2479
      %v2498 = vadd.f32 %v2424, %v2482
      %v2499 = vadd.f32 %v2425, %v2484
      %v2500 = vadd.f32 %v2426, %v2487
      %v2501 = vadd.f32 %v2427, %v2489
      %v2502 = vadd.f32 %v2428, %v2492
      %v2503 = vadd.f32 %v2429, %v2494
      %v2504 = vld [vmem:[%s259 + $0x4] sm:$0xf]
      %v2505 = vld [vmem:[%s259 + $0x8] sm:$0x1]
      %v2506 = vld [vmem:[%s259 + $0x10] sm:$0xf]
      %v2507 = vld [vmem:[%s259 + $0x14] sm:$0x1]
      %v2508 = vld [vmem:[%s259 + $0x1c] sm:$0xf]
      %v2509 = vld [vmem:[%s259 + $0x20] sm:$0x1]
      %v2510 = vld [vmem:[%s259 + $0x28] sm:$0xf]
      %v2511 = vld [vmem:[%s259 + $0x2c] sm:$0x1]
      %v2512 = vld [vmem:[%s259 + $0x34] sm:$0xf]
      %v2513 = vld [vmem:[%s259 + $0x38] sm:$0x1]
      %v2514 = vld [vmem:[%s259 + $0x40] sm:$0xf]
      %v2515 = vld [vmem:[%s259 + $0x44] sm:$0x1]
      %v2516 = vld [vmem:[%s259 + $0x4c] sm:$0xf]
      %v2517 = vld [vmem:[%s259 + $0x50] sm:$0x1]
      %v2518 = vld [vmem:[%s259 + $0x58] sm:$0xf]
      %v2519 = vld [vmem:[%s259 + $0x5c] sm:$0x1]
      %v2521 = vshrl.u32 %v2504, 16
      %v2523 = vrot.slane %v2521, 4
      %v2524 = vshll.u32 %v2504, 16
      %v2526 = vrot.slane %v2524, 5
      %v2527 = vor.u32 %v2523, %v2526
      %v2528 = vrot.slane %v2527, 4
      %v2530 = vshll.u32 %v2505, 16
      %v2532 = vrot.slane %v2530, 5
      %v2533 = vsel %vm681, %v2528, %v2532
      %v2535 = vshrl.u32 %v2506, 16
      %v2537 = vrot.slane %v2535, 4
      %v2538 = vshll.u32 %v2506, 16
      %v2540 = vrot.slane %v2538, 5
      %v2541 = vor.u32 %v2537, %v2540
      %v2542 = vrot.slane %v2541, 4
      %v2544 = vshll.u32 %v2507, 16
      %v2546 = vrot.slane %v2544, 5
      %v2547 = vsel %vm681, %v2542, %v2546
      %v2549 = vshrl.u32 %v2508, 16
      %v2551 = vrot.slane %v2549, 4
      %v2552 = vshll.u32 %v2508, 16
      %v2554 = vrot.slane %v2552, 5
      %v2555 = vor.u32 %v2551, %v2554
      %v2556 = vrot.slane %v2555, 4
      %v2558 = vshll.u32 %v2509, 16
      %v2560 = vrot.slane %v2558, 5
      %v2561 = vsel %vm681, %v2556, %v2560
      %v2563 = vshrl.u32 %v2510, 16
      %v2565 = vrot.slane %v2563, 4
      %v2566 = vshll.u32 %v2510, 16
      %v2568 = vrot.slane %v2566, 5
      %v2569 = vor.u32 %v2565, %v2568
      %v2570 = vrot.slane %v2569, 4
      %v2572 = vshll.u32 %v2511, 16
      %v2574 = vrot.slane %v2572, 5
      %v2575 = vsel %vm681, %v2570, %v2574
      %v2577 = vshrl.u32 %v2512, 16
      %v2579 = vrot.slane %v2577, 4
      %v2580 = vshll.u32 %v2512, 16
      %v2582 = vrot.slane %v2580, 5
      %v2583 = vor.u32 %v2579, %v2582
      %v2584 = vrot.slane %v2583, 4
      %v2586 = vshll.u32 %v2513, 16
      %v2588 = vrot.slane %v2586, 5
      %v2589 = vsel %vm681, %v2584, %v2588
      %v2591 = vshrl.u32 %v2514, 16
      %v2593 = vrot.slane %v2591, 4
      %v2594 = vshll.u32 %v2514, 16
      %v2596 = vrot.slane %v2594, 5
      %v2597 = vor.u32 %v2593, %v2596
      %v2598 = vrot.slane %v2597, 4
      %v2600 = vshll.u32 %v2515, 16
      %v2602 = vrot.slane %v2600, 5
      %v2603 = vsel %vm681, %v2598, %v2602
      %v2605 = vshrl.u32 %v2516, 16
      %v2607 = vrot.slane %v2605, 4
      %v2608 = vshll.u32 %v2516, 16
      %v2610 = vrot.slane %v2608, 5
      %v2611 = vor.u32 %v2607, %v2610
      %v2612 = vrot.slane %v2611, 4
      %v2614 = vshll.u32 %v2517, 16
      %v2616 = vrot.slane %v2614, 5
      %v2617 = vsel %vm681, %v2612, %v2616
      %v2619 = vshrl.u32 %v2518, 16
      %v2621 = vrot.slane %v2619, 4
      %v2622 = vshll.u32 %v2518, 16
      %v2624 = vrot.slane %v2622, 5
      %v2625 = vor.u32 %v2621, %v2624
      %v2626 = vrot.slane %v2625, 4
      %v2628 = vshll.u32 %v2519, 16
      %v2630 = vrot.slane %v2628, 5
      %v2631 = vsel %vm681, %v2626, %v2630
      %s2632 = scalar_lea.vmem %s3, 20
      %v2633 = vld [vmem:[%s2632] sm:$0xf]
      %v2634 = vunpack.c.l.b16 %v2533
      %v2635 = vunpack.c.l.b16 %v2547
      %v2636 = vunpack.c.l.b16 %v2561
      %v2637 = vunpack.c.l.b16 %v2575
      %v2638 = vunpack.c.l.b16 %v2589
      %v2639 = vunpack.c.l.b16 %v2603
      %v2640 = vunpack.c.l.b16 %v2617
      %v2641 = vunpack.c.l.b16 %v2631
      %v2642 = vpack.c.b16 %v2635, %v2634
      %v2643 = vpack.c.b16 %v2637, %v2636
      %v2644 = vpack.c.b16 %v2639, %v2638
      %v2645 = vpack.c.b16 %v2641, %v2640
      %v2647 = vsel %vm1948, %v2642, 0
      %v2650 = vsel %vm1948, %v2643, 0
      %v2653 = vsel %vm1948, %v2644, 0
      %v2656 = vsel %vm1948, %v2645, 0
      %v2659 = vsel %vm1961, %v2633, 0
      %2661 = vmatpush.bf16.msra.mxu0 0
      %2662 = vmatpush.bf16.msra.mxu0 0
      %2663 = vmatpush.bf16.msra.mxu0 0
      %2664 = vmatpush.bf16.msra.mxu0 0
      %2665 = vmatpush.bf16.msra.mxu0 0
      %2666 = vmatpush.bf16.msra.mxu0 0
      %2667 = vmatpush.bf16.msra.mxu0 0
      %2668 = vmatpush.bf16.msra.mxu0 %v2659
      %2669 = vmatmul.bf16.gmra.mxu0 %v2647
      %v2670 = vpop.f32.mrf.mxu0
      %v2671 = vadd.f32 0.0, %v2670
      %v2672 = vpop.f32.mrf.mxu0
      %v2673 = vadd.f32 0.0, %v2672
      %2674 = vmatmul.bf16.gmra.mxu0 %v2650
      %v2675 = vpop.f32.mrf.mxu0
      %v2676 = vadd.f32 0.0, %v2675
      %v2677 = vpop.f32.mrf.mxu0
      %v2678 = vadd.f32 0.0, %v2677
      %2679 = vmatmul.bf16.gmra.mxu0 %v2653
      %v2680 = vpop.f32.mrf.mxu0
      %v2681 = vadd.f32 0.0, %v2680
      %v2682 = vpop.f32.mrf.mxu0
      %v2683 = vadd.f32 0.0, %v2682
      %2684 = vmatmul.bf16.gmra.mxu0 %v2656
      %v2685 = vpop.f32.mrf.mxu0
      %v2686 = vadd.f32 0.0, %v2685
      %v2687 = vpop.f32.mrf.mxu0
      %v2688 = vadd.f32 0.0, %v2687
      %2689 = vdwg.mxu0
      %v2690 = vadd.f32 %v2496, %v2671
      %v2691 = vadd.f32 %v2497, %v2673
      %v2692 = vadd.f32 %v2498, %v2676
      %v2693 = vadd.f32 %v2499, %v2678
      %v2694 = vadd.f32 %v2500, %v2681
      %v2695 = vadd.f32 %v2501, %v2683
      %v2696 = vadd.f32 %v2502, %v2686
      %v2697 = vadd.f32 %v2503, %v2688
      %s2698 = scalar_lea.vmem [#allocation3], 24
      %v2699 = vld [vmem:[%s2698] sm:$0x8]
      %v2700 = vld [vmem:[%s2698 + $0x4] sm:$0xf]
      %v2701 = vld [vmem:[%s2698 + $0xc] sm:$0x8]
      %v2702 = vld [vmem:[%s2698 + $0x10] sm:$0xf]
      %v2703 = vld [vmem:[%s2698 + $0x18] sm:$0x8]
      %v2704 = vld [vmem:[%s2698 + $0x1c] sm:$0xf]
      %v2705 = vld [vmem:[%s2698 + $0x24] sm:$0x8]
      %v2706 = vld [vmem:[%s2698 + $0x28] sm:$0xf]
      %v2707 = vld [vmem:[%s2698 + $0x30] sm:$0x8]
      %v2708 = vld [vmem:[%s2698 + $0x34] sm:$0xf]
      %v2709 = vld [vmem:[%s2698 + $0x3c] sm:$0x8]
      %v2710 = vld [vmem:[%s2698 + $0x40] sm:$0xf]
      %v2711 = vld [vmem:[%s2698 + $0x48] sm:$0x8]
      %v2712 = vld [vmem:[%s2698 + $0x4c] sm:$0xf]
      %v2713 = vld [vmem:[%s2698 + $0x54] sm:$0x8]
      %v2714 = vld [vmem:[%s2698 + $0x58] sm:$0xf]
      %v2716 = vshrl.u32 %v2699, 16
      %v2718 = vrot.slane %v2716, 7
      %v2719 = vrot.slane %v2718, 4
      %v2721 = vshrl.u32 %v2700, 16
      %v2723 = vrot.slane %v2721, 7
      %v2724 = vshll.u32 %v2700, 16
      %v2726 = vor.u32 %v2723, %v2724
      %v2727 = vsel %vm433, %v2719, %v2726
      %v2729 = vshrl.u32 %v2701, 16
      %v2731 = vrot.slane %v2729, 7
      %v2732 = vrot.slane %v2731, 4
      %v2734 = vshrl.u32 %v2702, 16
      %v2736 = vrot.slane %v2734, 7
      %v2737 = vshll.u32 %v2702, 16
      %v2739 = vor.u32 %v2736, %v2737
      %v2740 = vsel %vm433, %v2732, %v2739
      %v2742 = vshrl.u32 %v2703, 16
      %v2744 = vrot.slane %v2742, 7
      %v2745 = vrot.slane %v2744, 4
      %v2747 = vshrl.u32 %v2704, 16
      %v2749 = vrot.slane %v2747, 7
      %v2750 = vshll.u32 %v2704, 16
      %v2752 = vor.u32 %v2749, %v2750
      %v2753 = vsel %vm433, %v2745, %v2752
      %v2755 = vshrl.u32 %v2705, 16
      %v2757 = vrot.slane %v2755, 7
      %v2758 = vrot.slane %v2757, 4
      %v2760 = vshrl.u32 %v2706, 16
      %v2762 = vrot.slane %v2760, 7
      %v2763 = vshll.u32 %v2706, 16
      %v2765 = vor.u32 %v2762, %v2763
      %v2766 = vsel %vm433, %v2758, %v2765
      %v2768 = vshrl.u32 %v2707, 16
      %v2770 = vrot.slane %v2768, 7
      %v2771 = vrot.slane %v2770, 4
      %v2773 = vshrl.u32 %v2708, 16
      %v2775 = vrot.slane %v2773, 7
      %v2776 = vshll.u32 %v2708, 16
      %v2778 = vor.u32 %v2775, %v2776
      %v2779 = vsel %vm433, %v2771, %v2778
      %v2781 = vshrl.u32 %v2709, 16
      %v2783 = vrot.slane %v2781, 7
      %v2784 = vrot.slane %v2783, 4
      %v2786 = vshrl.u32 %v2710, 16
      %v2788 = vrot.slane %v2786, 7
      %v2789 = vshll.u32 %v2710, 16
      %v2791 = vor.u32 %v2788, %v2789
      %v2792 = vsel %vm433, %v2784, %v2791
      %v2794 = vshrl.u32 %v2711, 16
      %v2796 = vrot.slane %v2794, 7
      %v2797 = vrot.slane %v2796, 4
      %v2799 = vshrl.u32 %v2712, 16
      %v2801 = vrot.slane %v2799, 7
      %v2802 = vshll.u32 %v2712, 16
      %v2804 = vor.u32 %v2801, %v2802
      %v2805 = vsel %vm433, %v2797, %v2804
      %v2807 = vshrl.u32 %v2713, 16
      %v2809 = vrot.slane %v2807, 7
      %v2810 = vrot.slane %v2809, 4
      %v2812 = vshrl.u32 %v2714, 16
      %v2814 = vrot.slane %v2812, 7
      %v2815 = vshll.u32 %v2714, 16
      %v2817 = vor.u32 %v2814, %v2815
      %v2818 = vsel %vm433, %v2810, %v2817
      %s2819 = scalar_lea.vmem %s3, 24
      %v2820 = vld [vmem:[%s2819] sm:$0xf]
      %v2821 = vunpack.c.l.b16 %v2727
      %v2822 = vunpack.c.l.b16 %v2740
      %v2823 = vunpack.c.l.b16 %v2753
      %v2824 = vunpack.c.l.b16 %v2766
      %v2825 = vunpack.c.l.b16 %v2779
      %v2826 = vunpack.c.l.b16 %v2792
      %v2827 = vunpack.c.l.b16 %v2805
      %v2828 = vunpack.c.l.b16 %v2818
      %v2829 = vpack.c.b16 %v2822, %v2821
      %v2830 = vpack.c.b16 %v2824, %v2823
      %v2831 = vpack.c.b16 %v2826, %v2825
      %v2832 = vpack.c.b16 %v2828, %v2827
      %v2834 = vsel %vm1948, %v2829, 0
      %v2837 = vsel %vm1948, %v2830, 0
      %v2840 = vsel %vm1948, %v2831, 0
      %v2843 = vsel %vm1948, %v2832, 0
      %v2846 = vsel %vm1961, %v2820, 0
      %2848 = vmatpush.bf16.msra.mxu0 0
      %2849 = vmatpush.bf16.msra.mxu0 0
      %2850 = vmatpush.bf16.msra.mxu0 0
      %2851 = vmatpush.bf16.msra.mxu0 0
      %2852 = vmatpush.bf16.msra.mxu0 0
      %2853 = vmatpush.bf16.msra.mxu0 0
      %2854 = vmatpush.bf16.msra.mxu0 0
      %2855 = vmatpush.bf16.msra.mxu0 %v2846
      %2856 = vmatmul.bf16.gmra.mxu0 %v2834
      %v2857 = vpop.f32.mrf.mxu0
      %v2858 = vadd.f32 0.0, %v2857
      %v2859 = vpop.f32.mrf.mxu0
      %v2860 = vadd.f32 0.0, %v2859
      %2861 = vmatmul.bf16.gmra.mxu0 %v2837
      %v2862 = vpop.f32.mrf.mxu0
      %v2863 = vadd.f32 0.0, %v2862
      %v2864 = vpop.f32.mrf.mxu0
      %v2865 = vadd.f32 0.0, %v2864
      %2866 = vmatmul.bf16.gmra.mxu0 %v2840
      %v2867 = vpop.f32.mrf.mxu0
      %v2868 = vadd.f32 0.0, %v2867
      %v2869 = vpop.f32.mrf.mxu0
      %v2870 = vadd.f32 0.0, %v2869
      %2871 = vmatmul.bf16.gmra.mxu0 %v2843
      %v2872 = vpop.f32.mrf.mxu0
      %v2873 = vadd.f32 0.0, %v2872
      %v2874 = vpop.f32.mrf.mxu0
      %v2875 = vadd.f32 0.0, %v2874
      %2876 = vdwg.mxu0
      %v2877 = vadd.f32 %v2690, %v2858
      %v2878 = vadd.f32 %v2691, %v2860
      %v2879 = vadd.f32 %v2692, %v2863
      %v2880 = vadd.f32 %v2693, %v2865
      %v2881 = vadd.f32 %v2694, %v2868
      %v2882 = vadd.f32 %v2695, %v2870
      %v2883 = vadd.f32 %v2696, %v2873
      %v2884 = vadd.f32 %v2697, %v2875
      %s2885 = scalar_lea.vmem %s3, 28
      %v2886 = vld [vmem:[%s2885] sm:$0xf]
      %v2895 = vunpack.c.l.b16 %v2700
      %v2896 = vunpack.c.l.b16 %v2702
      %v2897 = vunpack.c.l.b16 %v2704
      %v2898 = vunpack.c.l.b16 %v2706
      %v2899 = vunpack.c.l.b16 %v2708
      %v2900 = vunpack.c.l.b16 %v2710
      %v2901 = vunpack.c.l.b16 %v2712
      %v2902 = vunpack.c.l.b16 %v2714
      %v2903 = vpack.c.b16 %v2896, %v2895
      %v2904 = vpack.c.b16 %v2898, %v2897
      %v2905 = vpack.c.b16 %v2900, %v2899
      %v2906 = vpack.c.b16 %v2902, %v2901
      %v2908 = vsel %vm1948, %v2903, 0
      %v2911 = vsel %vm1948, %v2904, 0
      %v2914 = vsel %vm1948, %v2905, 0
      %v2917 = vsel %vm1948, %v2906, 0
      %v2920 = vsel %vm1961, %v2886, 0
      %2922 = vmatpush.bf16.msra.mxu0 0
      %2923 = vmatpush.bf16.msra.mxu0 0
      %2924 = vmatpush.bf16.msra.mxu0 0
      %2925 = vmatpush.bf16.msra.mxu0 0
      %2926 = vmatpush.bf16.msra.mxu0 0
      %2927 = vmatpush.bf16.msra.mxu0 0
      %2928 = vmatpush.bf16.msra.mxu0 0
      %2929 = vmatpush.bf16.msra.mxu0 %v2920
      %2930 = vmatmul.bf16.gmra.mxu0 %v2908
      %v2931 = vpop.f32.mrf.mxu0
      %v2932 = vadd.f32 0.0, %v2931
      %v2933 = vpop.f32.mrf.mxu0
      %v2934 = vadd.f32 0.0, %v2933
      %2935 = vmatmul.bf16.gmra.mxu0 %v2911
      %v2936 = vpop.f32.mrf.mxu0
      %v2937 = vadd.f32 0.0, %v2936
      %v2938 = vpop.f32.mrf.mxu0
      %v2939 = vadd.f32 0.0, %v2938
      %2940 = vmatmul.bf16.gmra.mxu0 %v2914
      %v2941 = vpop.f32.mrf.mxu0
      %v2942 = vadd.f32 0.0, %v2941
      %v2943 = vpop.f32.mrf.mxu0
      %v2944 = vadd.f32 0.0, %v2943
      %2945 = vmatmul.bf16.gmra.mxu0 %v2917
      %v2946 = vpop.f32.mrf.mxu0
      %v2947 = vadd.f32 0.0, %v2946
      %v2948 = vpop.f32.mrf.mxu0
      %v2949 = vadd.f32 0.0, %v2948
      %2950 = vdwg.mxu0
      %v2951 = vadd.f32 %v2877, %v2932
      %v2952 = vadd.f32 %v2878, %v2934
      %v2953 = vadd.f32 %v2879, %v2937
      %v2954 = vadd.f32 %v2880, %v2939
      %v2955 = vadd.f32 %v2881, %v2942
      %v2956 = vadd.f32 %v2882, %v2944
      %v2957 = vadd.f32 %v2883, %v2947
      %v2958 = vadd.f32 %v2884, %v2949
      %v2959 = vld [vmem:[%s2698 + $0x4] sm:$0xf]
      %v2960 = vld [vmem:[%s2698 + $0x8] sm:$0x1]
      %v2961 = vld [vmem:[%s2698 + $0x10] sm:$0xf]
      %v2962 = vld [vmem:[%s2698 + $0x14] sm:$0x1]
      %v2963 = vld [vmem:[%s2698 + $0x1c] sm:$0xf]
      %v2964 = vld [vmem:[%s2698 + $0x20] sm:$0x1]
      %v2965 = vld [vmem:[%s2698 + $0x28] sm:$0xf]
      %v2966 = vld [vmem:[%s2698 + $0x2c] sm:$0x1]
      %v2967 = vld [vmem:[%s2698 + $0x34] sm:$0xf]
      %v2968 = vld [vmem:[%s2698 + $0x38] sm:$0x1]
      %v2969 = vld [vmem:[%s2698 + $0x40] sm:$0xf]
      %v2970 = vld [vmem:[%s2698 + $0x44] sm:$0x1]
      %v2971 = vld [vmem:[%s2698 + $0x4c] sm:$0xf]
      %v2972 = vld [vmem:[%s2698 + $0x50] sm:$0x1]
      %v2973 = vld [vmem:[%s2698 + $0x58] sm:$0xf]
      %v2974 = vld [vmem:[%s2698 + $0x5c] sm:$0x1]
      %v2976 = vshrl.u32 %v2959, 16
      %v2978 = vrot.slane %v2976, 4
      %v2979 = vshll.u32 %v2959, 16
      %v2981 = vrot.slane %v2979, 5
      %v2982 = vor.u32 %v2978, %v2981
      %v2983 = vrot.slane %v2982, 4
      %v2985 = vshll.u32 %v2960, 16
      %v2987 = vrot.slane %v2985, 5
      %v2988 = vsel %vm681, %v2983, %v2987
      %v2990 = vshrl.u32 %v2961, 16
      %v2992 = vrot.slane %v2990, 4
      %v2993 = vshll.u32 %v2961, 16
      %v2995 = vrot.slane %v2993, 5
      %v2996 = vor.u32 %v2992, %v2995
      %v2997 = vrot.slane %v2996, 4
      %v2999 = vshll.u32 %v2962, 16
      %v3001 = vrot.slane %v2999, 5
      %v3002 = vsel %vm681, %v2997, %v3001
      %v3004 = vshrl.u32 %v2963, 16
      %v3006 = vrot.slane %v3004, 4
      %v3007 = vshll.u32 %v2963, 16
      %v3009 = vrot.slane %v3007, 5
      %v3010 = vor.u32 %v3006, %v3009
      %v3011 = vrot.slane %v3010, 4
      %v3013 = vshll.u32 %v2964, 16
      %v3015 = vrot.slane %v3013, 5
      %v3016 = vsel %vm681, %v3011, %v3015
      %v3018 = vshrl.u32 %v2965, 16
      %v3020 = vrot.slane %v3018, 4
      %v3021 = vshll.u32 %v2965, 16
      %v3023 = vrot.slane %v3021, 5
      %v3024 = vor.u32 %v3020, %v3023
      %v3025 = vrot.slane %v3024, 4
      %v3027 = vshll.u32 %v2966, 16
      %v3029 = vrot.slane %v3027, 5
      %v3030 = vsel %vm681, %v3025, %v3029
      %v3032 = vshrl.u32 %v2967, 16
      %v3034 = vrot.slane %v3032, 4
      %v3035 = vshll.u32 %v2967, 16
      %v3037 = vrot.slane %v3035, 5
      %v3038 = vor.u32 %v3034, %v3037
      %v3039 = vrot.slane %v3038, 4
      %v3041 = vshll.u32 %v2968, 16
      %v3043 = vrot.slane %v3041, 5
      %v3044 = vsel %vm681, %v3039, %v3043
      %v3046 = vshrl.u32 %v2969, 16
      %v3048 = vrot.slane %v3046, 4
      %v3049 = vshll.u32 %v2969, 16
      %v3051 = vrot.slane %v3049, 5
      %v3052 = vor.u32 %v3048, %v3051
      %v3053 = vrot.slane %v3052, 4
      %v3055 = vshll.u32 %v2970, 16
      %v3057 = vrot.slane %v3055, 5
      %v3058 = vsel %vm681, %v3053, %v3057
      %v3060 = vshrl.u32 %v2971, 16
      %v3062 = vrot.slane %v3060, 4
      %v3063 = vshll.u32 %v2971, 16
      %v3065 = vrot.slane %v3063, 5
      %v3066 = vor.u32 %v3062, %v3065
      %v3067 = vrot.slane %v3066, 4
      %v3069 = vshll.u32 %v2972, 16
      %v3071 = vrot.slane %v3069, 5
      %v3072 = vsel %vm681, %v3067, %v3071
      %v3074 = vshrl.u32 %v2973, 16
      %v3076 = vrot.slane %v3074, 4
      %v3077 = vshll.u32 %v2973, 16
      %v3079 = vrot.slane %v3077, 5
      %v3080 = vor.u32 %v3076, %v3079
      %v3081 = vrot.slane %v3080, 4
      %v3083 = vshll.u32 %v2974, 16
      %v3085 = vrot.slane %v3083, 5
      %v3086 = vsel %vm681, %v3081, %v3085
      %s3087 = scalar_lea.vmem %s3, 32
      %v3088 = vld [vmem:[%s3087] sm:$0xf]
      %v3089 = vunpack.c.l.b16 %v2988
      %v3090 = vunpack.c.l.b16 %v3002
      %v3091 = vunpack.c.l.b16 %v3016
      %v3092 = vunpack.c.l.b16 %v3030
      %v3093 = vunpack.c.l.b16 %v3044
      %v3094 = vunpack.c.l.b16 %v3058
      %v3095 = vunpack.c.l.b16 %v3072
      %v3096 = vunpack.c.l.b16 %v3086
      %v3097 = vpack.c.b16 %v3090, %v3089
      %v3098 = vpack.c.b16 %v3092, %v3091
      %v3099 = vpack.c.b16 %v3094, %v3093
      %v3100 = vpack.c.b16 %v3096, %v3095
      %v3102 = vsel %vm1948, %v3097, 0
      %v3105 = vsel %vm1948, %v3098, 0
      %v3108 = vsel %vm1948, %v3099, 0
      %v3111 = vsel %vm1948, %v3100, 0
      %v3114 = vsel %vm1961, %v3088, 0
      %3116 = vmatpush.bf16.msra.mxu0 0
      %3117 = vmatpush.bf16.msra.mxu0 0
      %3118 = vmatpush.bf16.msra.mxu0 0
      %3119 = vmatpush.bf16.msra.mxu0 0
      %3120 = vmatpush.bf16.msra.mxu0 0
      %3121 = vmatpush.bf16.msra.mxu0 0
      %3122 = vmatpush.bf16.msra.mxu0 0
      %3123 = vmatpush.bf16.msra.mxu0 %v3114
      %3124 = vmatmul.bf16.gmra.mxu0 %v3102
      %v3125 = vpop.f32.mrf.mxu0
      %v3126 = vadd.f32 0.0, %v3125
      %v3127 = vpop.f32.mrf.mxu0
      %v3128 = vadd.f32 0.0, %v3127
      %3129 = vmatmul.bf16.gmra.mxu0 %v3105
      %v3130 = vpop.f32.mrf.mxu0
      %v3131 = vadd.f32 0.0, %v3130
      %v3132 = vpop.f32.mrf.mxu0
      %v3133 = vadd.f32 0.0, %v3132
      %3134 = vmatmul.bf16.gmra.mxu0 %v3108
      %v3135 = vpop.f32.mrf.mxu0
      %v3136 = vadd.f32 0.0, %v3135
      %v3137 = vpop.f32.mrf.mxu0
      %v3138 = vadd.f32 0.0, %v3137
      %3139 = vmatmul.bf16.gmra.mxu0 %v3111
      %v3140 = vpop.f32.mrf.mxu0
      %v3141 = vadd.f32 0.0, %v3140
      %v3142 = vpop.f32.mrf.mxu0
      %v3143 = vadd.f32 0.0, %v3142
      %3144 = vdwg.mxu0
      %v3145 = vadd.f32 %v2951, %v3126
      %v3146 = vadd.f32 %v2952, %v3128
      %v3147 = vadd.f32 %v2953, %v3131
      %v3148 = vadd.f32 %v2954, %v3133
      %v3149 = vadd.f32 %v2955, %v3136
      %v3150 = vadd.f32 %v2956, %v3138
      %v3151 = vadd.f32 %v2957, %v3141
      %v3152 = vadd.f32 %v2958, %v3143
      %v3153 = vld [vmem:[%s4] sm:$0x1]
      %v3155 = vperm.slane %v3153, 0
      %v3157 = vadd.f32 %v3145, %v3155
      %v3158 = vadd.f32 %v3146, %v3155
      %v3159 = vadd.f32 %v3147, %v3155
      %v3160 = vadd.f32 %v3148, %v3155
      %v3161 = vadd.f32 %v3149, %v3155
      %v3162 = vadd.f32 %v3150, %v3155
      %v3163 = vadd.f32 %v3151, %v3155
      %v3164 = vadd.f32 %v3152, %v3155
      %v3165 = vmax.f32 %v3157, 0.0
      %v3166 = vmax.f32 %v3158, 0.0
      %v3167 = vmax.f32 %v3159, 0.0
      %v3168 = vmax.f32 %v3160, 0.0
      %v3169 = vmax.f32 %v3161, 0.0
      %v3170 = vmax.f32 %v3162, 0.0
      %v3171 = vmax.f32 %v3163, 0.0
      %v3172 = vmax.f32 %v3164, 0.0
      %v3173 = vpack.c.bf16 %v3165, %v3165
      %v3174 = vpack.c.bf16 %v3166, %v3166
      %v3175 = vpack.c.bf16 %v3167, %v3167
      %v3176 = vpack.c.bf16 %v3168, %v3168
      %v3177 = vpack.c.bf16 %v3169, %v3169
      %v3178 = vpack.c.bf16 %v3170, %v3170
      %v3179 = vpack.c.bf16 %v3171, %v3171
      %v3180 = vpack.c.bf16 %v3172, %v3172
      %3181 = vst.msk [vmem:[%s224] sm:$0xf] %vm251, %v3173
      %3182 = vst.msk [vmem:[%s224 + $0x4] sm:$0xf] %vm251, %v3174
      %3183 = vst.msk [vmem:[%s224 + $0x8] sm:$0xf] %vm251, %v3175
      %3184 = vst.msk [vmem:[%s224 + $0xc] sm:$0xf] %vm251, %v3176
      %3185 = vst.msk [vmem:[%s224 + $0x10] sm:$0xf] %vm251, %v3177
      %3186 = vst.msk [vmem:[%s224 + $0x14] sm:$0xf] %vm251, %v3178
      %3187 = vst.msk [vmem:[%s224 + $0x18] sm:$0xf] %vm251, %v3179
      %3188 = vst.msk [vmem:[%s224 + $0x1c] sm:$0xf] %vm251, %v3180
      %p3189 = scmp.lt.s32.totalorder %s16, 1
      %s3190 = scalar_select %p3189, %s16, 1
      %s3191 = smul.addr %s3190, 8
      %s3192 = smul.addr %s3191, 4
      %s3193 = scalar_lea.vmem %s5, %s3192
      // Predicated region
      $region41: #{down_forward.1} parent=39 // pred_check
        %p3194 = pneg %p144
      $region42: #{down_forward.1} parent=39 // pred_check_branch
        %3196 = sbr.rel (%p3194) target = $region44
      $region43: #{down_forward.1} parent=39 // pred_region
        _
      $region44: #{down_forward.1} parent=39 // pred_fallthru
        _
    $region40: #{down_forward.1} parent=5 // pred_fallthru
      _
    %p3197 = scmp.le.s32.totalorder 2, %s11
    // Predicated region
    $region45: #{down_forward.1} parent=5 // pred_check
      %p3198 = pneg %p3197
    $region46: #{down_forward.1} parent=5 // pred_check_branch
      %3200 = sbr.rel (%p3198) target = $region48
    $region47: #{down_forward.1} parent=5 // pred_region
      %s3201 = ssub.s32 %s11, 2
      // Predicated region
      $region49: #{down_forward.1} parent=47 // pred_check
        %p3202 = pneg %p150
      $region50: #{down_forward.1} parent=47 // pred_check_branch
        %3204 = sbr.rel (%p3202) target = $region52
      $region51: #{down_forward.1} parent=47 // pred_region
        %p3205 = scmp.lt.s32.totalorder %s17, 1
        %s3206 = scalar_select %p3205, %s17, 1
        %s3207 = smul.addr %s3206, 8
        %s3208 = smul.addr %s3207, 4
        %s3209 = scalar_lea.vmem %s5, %s3208
      $region52: #{down_forward.1} parent=47 // pred_fallthru
        _
    $region48: #{down_forward.1} parent=5 // pred_fallthru
      _
  $region6: #{down_forward.1} parent=0 // loop_footer
    %s15 = sadd.s32 1, %s11
  $region7: #{down_forward.1} parent=0 // loop_footer_branch
    %10 = sbr.rel target = $region3
  $region8: #{down_forward.1} parent=0 // loop_exit
    _

</llo_original>
